<compile_context>
chip_gen: v7x
topology: tpu7x:2x2x1
jax: 0.10.0
libtpu: 0.0.40
codegen_flags: <defaults>
</compile_context>

<pallas_src>
import jax
import jax.numpy as jnp
from jax.experimental import pallas as pl
from jax.experimental.pallas import tpu as pltpu


# ---------------------------------------------------------------------------
# BN folding helpers (eval-mode running statistics)
# ---------------------------------------------------------------------------
def _fold_bn(gamma, beta, mean, var, eps=1e-5):
    scale = gamma / jnp.sqrt(var + eps)
    bias = beta - mean * scale
    return scale, bias


def _folded_params(params, compute_dtype):
    """Fold BN scale into the conv weights (then cast to compute dtype)."""
    s1, b1 = _fold_bn(*params["bn1"])
    s2, b2 = _fold_bn(*params["bn2"])
    s3, b3 = _fold_bn(*params["bn3"])
    w1 = (params["w1"] * s1[None, :]).astype(compute_dtype)               # (Cin, P)
    w2 = (params["w2"] * s2[None, None, None, :]).astype(compute_dtype)   # (3,3,P,P)
    w3 = (params["w3"] * s3[None, :]).astype(compute_dtype)               # (P, 4P)
    return (w1, b1.astype(jnp.float32),
            w2, b2.astype(jnp.float32),
            w3, b3.astype(jnp.float32))


# ---------------------------------------------------------------------------
# Fused kernel: Bt images per grid step, all intermediates resident in VMEM.
# ---------------------------------------------------------------------------
def _bottleneck_kernel(x_ref, w1_ref, b1_ref, w2_ref, b2_ref, w3_ref, b3_ref,
                       o_ref, pad_ref, col_ref):
    Bt, H, W, Cin = x_ref.shape
    planes = w1_ref.shape[1]
    Cout = o_ref.shape[-1]
    cdt = w1_ref.dtype                       # bf16 MXU operand dtype
    M = Bt * H * W

    xf = x_ref[...].reshape(M, Cin)          # (M, Cin) bf16

    # ---- conv1 (1x1) + bn1 (scale folded into w1) + relu -------------------
    a1 = jnp.dot(xf, w1_ref[...], preferred_element_type=jnp.float32)
    a1 = jnp.maximum(a1 + b1_ref[...], 0.0)                   # (M, planes) f32

    # ---- zero-padded conv1 activation in VMEM scratch -----------------------
    # Zero only the 1-wide border (interior is fully overwritten each step).
    # Do NOT gate on program_id==0: under megacore sharding the second core's
    # slice never sees program_id 0.
    pad_ref[:, 0:1, :, :] = jnp.zeros((Bt, 1, W + 2, planes), jnp.float32)
    pad_ref[:, H + 1:H + 2, :, :] = jnp.zeros((Bt, 1, W + 2, planes), jnp.float32)
    pad_ref[:, :, 0:1, :] = jnp.zeros((Bt, H + 2, 1, planes), jnp.float32)
    pad_ref[:, :, W + 1:W + 2, :] = jnp.zeros((Bt, H + 2, 1, planes), jnp.float32)
    pad_ref[:, 1:H + 1, 1:W + 1, :] = a1.reshape(Bt, H, W, planes)

    # ---- conv2 (3x3, stride 1, pad 1) as ONE K-stacked MXU matmul ----------
    # Build the (M, 9*planes) bf16 im2col once (tap-major K order matching the
    # wrapper's w2.reshape(9*planes, planes)), then a single matmul with
    # K = 9*planes instead of 9 narrow K=planes matmuls + 9 accumulates.
    for t in range(9):
        dy, dx = divmod(t, 3)
        win = pad_ref[:, dy:dy + H, dx:dx + W, :]              # (Bt,H,W,planes) f32
        col_ref[:, t * planes:(t + 1) * planes] = win.reshape(M, planes).astype(cdt)
    a2 = jnp.dot(col_ref[...], w2_ref[...], preferred_element_type=jnp.float32)
    a2 = jnp.maximum(a2 + b2_ref[...], 0.0).astype(cdt)        # (M, planes) bf16

    # ---- conv3 (1x1) + bn3 + identity residual + relu ----------------------
    a3 = jnp.dot(a2, w3_ref[...], preferred_element_type=jnp.float32)
    a3 = a3 + b3_ref[...] + xf.astype(jnp.float32)
    o_ref[...] = jnp.maximum(a3, 0.0).reshape(Bt, H, W, Cout).astype(o_ref.dtype)


# ---------------------------------------------------------------------------
# Wrappers
# ---------------------------------------------------------------------------
def _pick_images_per_step(N, H, W):
    """Batch several images per grid step when spatial size is small so the
    per-step pipeline overhead amortizes and the matmul M dim grows."""
    target = max(1, -(-512 // (H * W)))      # ceil(512 / (H*W))
    bt = min(N, target)
    while N % bt:
        bt -= 1
    return bt


def bottleneck_forward_nhwc(x_nhwc, params, compute_dtype=jnp.bfloat16,
                            out_dtype=None, images_per_step=None):
    """Fused Bottleneck forward in NHWC (no layout transposes).  Output dtype
    defaults to the compute dtype (bf16) to halve HBM write traffic."""
    stride = params["stride"]
    assert stride == 1, "only the identity-shortcut (stride=1) case is fused"
    out_dtype = compute_dtype if out_dtype is None else out_dtype

    N, H, W, Cin = x_nhwc.shape
    planes = params["w1"].shape[1]
    Cout = params["w3"].shape[1]
    assert Cin == Cout, "identity shortcut requires inplanes == 4 * planes"

    w1, b1, w2, b2, w3, b3 = _folded_params(params, compute_dtype)
    w2 = w2.reshape(9 * planes, planes)      # tap-major K stacking (dy*3 + dx)
    b1 = b1.reshape(1, planes)
    b2 = b2.reshape(1, planes)
    b3 = b3.reshape(1, Cout)
    xc = x_nhwc.astype(compute_dtype)

    bt = images_per_step or _pick_images_per_step(N, H, W)
    assert N % bt == 0, (N, bt)

    isz = jnp.dtype(compute_dtype).itemsize
    osz = jnp.dtype(out_dtype).itemsize
    flops = 2 * N * H * W * (Cin * planes + 9 * planes * planes + planes * Cout)
    bytes_accessed = (xc.size * isz + N * H * W * Cout * osz
                      + (w1.size + w2.size + w3.size) * isz
                      + (b1.size + b2.size + b3.size) * 4)

    out = pl.pallas_call(
        _bottleneck_kernel,
        out_shape=jax.ShapeDtypeStruct((N, H, W, Cout), out_dtype),
        grid_spec=pltpu.PrefetchScalarGridSpec(
            num_scalar_prefetch=0,
            grid=(N // bt,),
            in_specs=[
                pl.BlockSpec((bt, H, W, Cin), lambda n: (n, 0, 0, 0)),
                pl.BlockSpec((Cin, planes), lambda n: (0, 0)),
                pl.BlockSpec((1, planes), lambda n: (0, 0)),
                pl.BlockSpec((9 * planes, planes), lambda n: (0, 0)),
                pl.BlockSpec((1, planes), lambda n: (0, 0)),
                pl.BlockSpec((planes, Cout), lambda n: (0, 0)),
                pl.BlockSpec((1, Cout), lambda n: (0, 0)),
            ],
            out_specs=pl.BlockSpec((bt, H, W, Cout), lambda n: (n, 0, 0, 0)),
            scratch_shapes=[
                pltpu.VMEM((bt, H + 2, W + 2, planes), jnp.float32),   # pad
                pltpu.VMEM((bt * H * W, 9 * planes), compute_dtype),   # im2col
            ]),
        compiler_params=pltpu.CompilerParams(
            dimension_semantics=("parallel",)),
        cost_estimate=pl.CostEstimate(
            flops=flops, transcendentals=0, bytes_accessed=bytes_accessed),
    )(xc, w1, b1, w2, b2, w3, b3)
    return out


def bottleneck_forward(x_nchw, params, compute_dtype=jnp.bfloat16,
                       out_dtype=None, images_per_step=None):
    """Drop-in NCHW wrapper (adds one layout transpose each way — prefer the
    NHWC entry point inside an NHWC network so the conversion is paid once
    per network, not per block)."""
    x = jnp.transpose(x_nchw, (0, 2, 3, 1))
    out = bottleneck_forward_nhwc(x, params, compute_dtype, out_dtype,
                                  images_per_step)
    return jnp.transpose(out, (0, 3, 1, 2))


# ---------------------------------------------------------------------------
# References for correctness checking
# ---------------------------------------------------------------------------
def reference_forward_matched_nhwc(x_nhwc, params, compute_dtype=jnp.bfloat16,
                                   out_dtype=None):
    """lax.conv reference using the SAME folded / bf16-rounded operands and the
    same intermediate rounding points as the kernel (tight comparison)."""
    out_dtype = compute_dtype if out_dtype is None else out_dtype

    def conv(x, w_hwio, pad=0):
        return jax.lax.conv_general_dilated(
            x, w_hwio, window_strides=(1, 1),
            padding=[(pad, pad), (pad, pad)],
            dimension_numbers=("NHWC", "HWIO", "NHWC"),
            preferred_element_type=jnp.float32)

    w1, b1, w2, b2, w3, b3 = _folded_params(params, compute_dtype)
    x = x_nhwc.astype(compute_dtype)
    out = jnp.maximum(conv(x, w1[None, None]) + b1, 0.0).astype(compute_dtype)
    out = jnp.maximum(conv(out, w2, pad=1) + b2, 0.0).astype(compute_dtype)
    out = conv(out, w3[None, None]) + b3 + x.astype(jnp.float32)
    return jnp.maximum(out, 0.0).astype(out_dtype)


def reference_forward_f32(x_nchw, params):
    """Exact eval-mode module semantics in f32 / NCHW (loose sanity check)."""
    def conv(x, w_hwio, stride=1, pad=0):
        return jax.lax.conv_general_dilated(
            x, w_hwio, window_strides=(stride, stride),
            padding=[(pad, pad), (pad, pad)],
            dimension_numbers=("NCHW", "HWIO", "NCHW"))

    def bn(x, gamma, beta, mean, var, eps=1e-5):
        s = gamma / jnp.sqrt(var + eps)
        b = beta - mean * s
        return x * s.reshape(1, -1, 1, 1) + b.reshape(1, -1, 1, 1)

    stride = params["stride"]
    out = jax.nn.relu(bn(conv(x_nchw, params["w1"][None, None]), *params["bn1"]))
    out = jax.nn.relu(bn(conv(out, params["w2"], stride=stride, pad=1),
                         *params["bn2"]))
    out = bn(conv(out, params["w3"][None, None]), *params["bn3"])
    return jax.nn.relu(out + x_nchw)


# ---------------------------------------------------------------------------
if __name__ == "__main__":
    # Bottleneck(inplanes=16, planes=4, stride=1, downsample=None)
    inplanes, planes, stride = 16, 4, 1
    N, H, W = 2, 16, 16

    key = jax.random.PRNGKey(0)
    ks = jax.random.split(key, 8)

    def bn_params(k, c):
        k1, k2, k3, k4 = jax.random.split(k, 4)
        gamma = jax.random.uniform(k1, (c,), jnp.float32, 0.5, 1.5)
        beta = 0.1 * jax.random.normal(k2, (c,), jnp.float32)
        mean = 0.1 * jax.random.normal(k3, (c,), jnp.float32)
        var = jax.random.uniform(k4, (c,), jnp.float32, 0.5, 1.5)
        return (gamma, beta, mean, var)

    params = {
        "stride": stride,
        # channels-last weights: 1x1 -> (Cin, Cout); 3x3 -> (kh, kw, Cin, Cout)
        "w1": 0.1 * jax.random.normal(ks[0], (inplanes, planes), jnp.float32),
        "w2": 0.1 * jax.random.normal(ks[1], (3, 3, planes, planes), jnp.float32),
        "w3": 0.1 * jax.random.normal(ks[2], (planes, planes * 4), jnp.float32),
        "bn1": bn_params(ks[3], planes),
        "bn2": bn_params(ks[4], planes),
        "bn3": bn_params(ks[5], planes * 4),
    }

    x_nchw = jax.random.normal(ks[6], (N, inplanes, H, W), jnp.float32)
    x_nhwc = jnp.transpose(x_nchw, (0, 2, 3, 1))

    # --- Preferred NHWC path (no layout transposes around the kernel) -------
    out_nhwc = jax.block_until_ready(bottleneck_forward_nhwc(x_nhwc, params))
    assert out_nhwc.shape == (N, H, W, planes * 4), out_nhwc.shape

    ref_m = reference_forward_matched_nhwc(x_nhwc, params)
    err_m = float(jnp.max(jnp.abs(out_nhwc.astype(jnp.float32)
                                  - ref_m.astype(jnp.float32))))
    assert err_m <= 2e-2, err_m

    # --- NCHW drop-in wrapper, loose check vs. exact f32 module semantics ---
    out_nchw = jax.block_until_ready(bottleneck_forward(x_nchw, params))
    assert out_nchw.shape == (N, planes * 4, H, W), out_nchw.shape

    ref_f = reference_forward_f32(x_nchw, params)
    err_f = float(jnp.max(jnp.abs(out_nchw.astype(jnp.float32) - ref_f)))
    assert err_f <= 1.5e-1, err_f

    print("KERNEL_OK")
</pallas_src>

<mosaic_0001>
module attributes {stable_mosaic.version = 11 : i64} {
  func.func @_bottleneck_kernel(%arg0: i32, %arg1: memref<2x16x16x16xbf16, #tpu.memory_space<vmem>>, %arg2: memref<16x4xbf16, #tpu.memory_space<vmem>>, %arg3: memref<1x4xf32, #tpu.memory_space<vmem>>, %arg4: memref<36x4xbf16, #tpu.memory_space<vmem>>, %arg5: memref<1x4xf32, #tpu.memory_space<vmem>>, %arg6: memref<4x16xbf16, #tpu.memory_space<vmem>>, %arg7: memref<1x16xf32, #tpu.memory_space<vmem>>, %arg8: memref<2x16x16x16xbf16, #tpu.memory_space<vmem>>, %arg9: memref<2x18x18x4xf32, #tpu.memory_space<vmem>>, %arg10: memref<512x36xbf16, #tpu.memory_space<vmem>>) attributes {dimension_semantics = [#tpu.dimension_semantics<parallel>], iteration_bounds = array<i64: 1>, scalar_prefetch = 0 : i64, scratch_operands = 2 : i64, tpu.core_type = #tpu.core_type<tc>, window_params = [{transform_indices = @transform_0, window_bounds = array<i64: 2, 16, 16, 16>}, {pipeline_mode = #tpu.pipeline_mode<synchronous>, transform_indices = @transform_1, window_bounds = array<i64: 16, 4>}, {pipeline_mode = #tpu.pipeline_mode<synchronous>, transform_indices = @transform_2, window_bounds = array<i64: 1, 4>}, {pipeline_mode = #tpu.pipeline_mode<synchronous>, transform_indices = @transform_3, window_bounds = array<i64: 36, 4>}, {pipeline_mode = #tpu.pipeline_mode<synchronous>, transform_indices = @transform_4, window_bounds = array<i64: 1, 4>}, {pipeline_mode = #tpu.pipeline_mode<synchronous>, transform_indices = @transform_5, window_bounds = array<i64: 4, 16>}, {pipeline_mode = #tpu.pipeline_mode<synchronous>, transform_indices = @transform_6, window_bounds = array<i64: 1, 16>}, {transform_indices = @transform_7, window_bounds = array<i64: 2, 16, 16, 16>}]} {
    %c0 = arith.constant 0 : index
    %c0_0 = arith.constant 0 : index
    %c0_1 = arith.constant 0 : index
    %c0_2 = arith.constant 0 : index
    %0 = vector.load %arg1[%c0, %c0_0, %c0_1, %c0_2] : memref<2x16x16x16xbf16, #tpu.memory_space<vmem>>, vector<2x16x16x16xbf16>
    %1 = vector.shape_cast %0 : vector<2x16x16x16xbf16> to vector<512x16xbf16>
    %c0_3 = arith.constant 0 : index
    %c0_4 = arith.constant 0 : index
    %2 = vector.load %arg2[%c0_3, %c0_4] : memref<16x4xbf16, #tpu.memory_space<vmem>>, vector<16x4xbf16>
    %cst = arith.constant dense<0.000000e+00> : vector<512x4xf32>
    %3 = tpu.matmul %1, %2, %cst {dimension_numbers = #tpu.dot_dimension_numbers<[1], [0], [0], [1], [0, 0, 1, 1], [], []>} : vector<512x16xbf16>, vector<16x4xbf16>, vector<512x4xf32> -> vector<512x4xf32>
    %c0_5 = arith.constant 0 : index
    %c0_6 = arith.constant 0 : index
    %4 = vector.load %arg3[%c0_5, %c0_6] : memref<1x4xf32, #tpu.memory_space<vmem>>, vector<1x4xf32>
    %5 = vector.broadcast %4 : vector<1x4xf32> to vector<512x4xf32>
    %6 = arith.addf %3, %5 : vector<512x4xf32>
    %cst_7 = arith.constant 0.000000e+00 : f32
    %7 = vector.broadcast %cst_7 : f32 to vector<512x4xf32>
    %8 = arith.maximumf %6, %7 : vector<512x4xf32>
    %cst_8 = arith.constant 0.000000e+00 : f32
    %9 = vector.broadcast %cst_8 : f32 to vector<2x1x18x4xf32>
    %c0_9 = arith.constant 0 : index
    %c0_10 = arith.constant 0 : index
    %c0_11 = arith.constant 0 : index
    %c0_12 = arith.constant 0 : index
    %10 = vector.load %arg9[%c0_9, %c0_10, %c0_11, %c0_12] : memref<2x18x18x4xf32, #tpu.memory_space<vmem>>, vector<2x1x18x4xf32>
    tpu.vector_store %arg9[%c0_9, %c0_10, %c0_11, %c0_12], %9 {strides = array<i32>} : memref<2x18x18x4xf32, #tpu.memory_space<vmem>>, vector<2x1x18x4xf32>,
    %cst_13 = arith.constant 0.000000e+00 : f32
    %11 = vector.broadcast %cst_13 : f32 to vector<2x1x18x4xf32>
    %c0_14 = arith.constant 0 : index
    %c17 = arith.constant 17 : index
    %c0_15 = arith.constant 0 : index
    %c0_16 = arith.constant 0 : index
    %12 = vector.load %arg9[%c0_14, %c17, %c0_15, %c0_16] : memref<2x18x18x4xf32, #tpu.memory_space<vmem>>, vector<2x1x18x4xf32>
    tpu.vector_store %arg9[%c0_14, %c17, %c0_15, %c0_16], %11 {strides = array<i32>} : memref<2x18x18x4xf32, #tpu.memory_space<vmem>>, vector<2x1x18x4xf32>,
    %cst_17 = arith.constant 0.000000e+00 : f32
    %13 = vector.broadcast %cst_17 : f32 to vector<2x18x1x4xf32>
    %c0_18 = arith.constant 0 : index
    %c0_19 = arith.constant 0 : index
    %c0_20 = arith.constant 0 : index
    %c0_21 = arith.constant 0 : index
    %14 = vector.load %arg9[%c0_18, %c0_19, %c0_20, %c0_21] : memref<2x18x18x4xf32, #tpu.memory_space<vmem>>, vector<2x18x1x4xf32>
    tpu.vector_store %arg9[%c0_18, %c0_19, %c0_20, %c0_21], %13 {strides = array<i32>} : memref<2x18x18x4xf32, #tpu.memory_space<vmem>>, vector<2x18x1x4xf32>,
    %cst_22 = arith.constant 0.000000e+00 : f32
    %15 = vector.broadcast %cst_22 : f32 to vector<2x18x1x4xf32>
    %c0_23 = arith.constant 0 : index
    %c0_24 = arith.constant 0 : index
    %c17_25 = arith.constant 17 : index
    %c0_26 = arith.constant 0 : index
    %16 = vector.load %arg9[%c0_23, %c0_24, %c17_25, %c0_26] : memref<2x18x18x4xf32, #tpu.memory_space<vmem>>, vector<2x18x1x4xf32>
    tpu.vector_store %arg9[%c0_23, %c0_24, %c17_25, %c0_26], %15 {strides = array<i32>} : memref<2x18x18x4xf32, #tpu.memory_space<vmem>>, vector<2x18x1x4xf32>,
    %17 = vector.shape_cast %8 : vector<512x4xf32> to vector<2x16x16x4xf32>
    %c0_27 = arith.constant 0 : index
    %c1 = arith.constant 1 : index
    %c1_28 = arith.constant 1 : index
    %c0_29 = arith.constant 0 : index
    %18 = vector.load %arg9[%c0_27, %c1, %c1_28, %c0_29] : memref<2x18x18x4xf32, #tpu.memory_space<vmem>>, vector<2x16x16x4xf32>
    tpu.vector_store %arg9[%c0_27, %c1, %c1_28, %c0_29], %17 {strides = array<i32>} : memref<2x18x18x4xf32, #tpu.memory_space<vmem>>, vector<2x16x16x4xf32>,
    %c0_30 = arith.constant 0 : index
    %c0_31 = arith.constant 0 : index
    %c0_32 = arith.constant 0 : index
    %c0_33 = arith.constant 0 : index
    %19 = vector.load %arg9[%c0_30, %c0_31, %c0_32, %c0_33] : memref<2x18x18x4xf32, #tpu.memory_space<vmem>>, vector<2x16x16x4xf32>
    %20 = vector.shape_cast %19 : vector<2x16x16x4xf32> to vector<512x4xf32>
    %21 = arith.truncf %20 : vector<512x4xf32> to vector<512x4xbf16>
    %c0_34 = arith.constant 0 : index
    %c0_35 = arith.constant 0 : index
    %22 = vector.load %arg10[%c0_34, %c0_35] : memref<512x36xbf16, #tpu.memory_space<vmem>>, vector<512x4xbf16>
    tpu.vector_store %arg10[%c0_34, %c0_35], %21 {strides = array<i32>} : memref<512x36xbf16, #tpu.memory_space<vmem>>, vector<512x4xbf16>,
    %c0_36 = arith.constant 0 : index
    %c0_37 = arith.constant 0 : index
    %c1_38 = arith.constant 1 : index
    %c0_39 = arith.constant 0 : index
    %23 = vector.load %arg9[%c0_36, %c0_37, %c1_38, %c0_39] : memref<2x18x18x4xf32, #tpu.memory_space<vmem>>, vector<2x16x16x4xf32>
    %24 = vector.shape_cast %23 : vector<2x16x16x4xf32> to vector<512x4xf32>
    %25 = arith.truncf %24 : vector<512x4xf32> to vector<512x4xbf16>
    %c0_40 = arith.constant 0 : index
    %c4 = arith.constant 4 : index
    %26 = vector.load %arg10[%c0_40, %c4] : memref<512x36xbf16, #tpu.memory_space<vmem>>, vector<512x4xbf16>
    tpu.vector_store %arg10[%c0_40, %c4], %25 {strides = array<i32>} : memref<512x36xbf16, #tpu.memory_space<vmem>>, vector<512x4xbf16>,
    %c0_41 = arith.constant 0 : index
    %c0_42 = arith.constant 0 : index
    %c2 = arith.constant 2 : index
    %c0_43 = arith.constant 0 : index
    %27 = vector.load %arg9[%c0_41, %c0_42, %c2, %c0_43] : memref<2x18x18x4xf32, #tpu.memory_space<vmem>>, vector<2x16x16x4xf32>
    %28 = vector.shape_cast %27 : vector<2x16x16x4xf32> to vector<512x4xf32>
    %29 = arith.truncf %28 : vector<512x4xf32> to vector<512x4xbf16>
    %c0_44 = arith.constant 0 : index
    %c8 = arith.constant 8 : index
    %30 = vector.load %arg10[%c0_44, %c8] : memref<512x36xbf16, #tpu.memory_space<vmem>>, vector<512x4xbf16>
    tpu.vector_store %arg10[%c0_44, %c8], %29 {strides = array<i32>} : memref<512x36xbf16, #tpu.memory_space<vmem>>, vector<512x4xbf16>,
    %c0_45 = arith.constant 0 : index
    %c1_46 = arith.constant 1 : index
    %c0_47 = arith.constant 0 : index
    %c0_48 = arith.constant 0 : index
    %31 = vector.load %arg9[%c0_45, %c1_46, %c0_47, %c0_48] : memref<2x18x18x4xf32, #tpu.memory_space<vmem>>, vector<2x16x16x4xf32>
    %32 = vector.shape_cast %31 : vector<2x16x16x4xf32> to vector<512x4xf32>
    %33 = arith.truncf %32 : vector<512x4xf32> to vector<512x4xbf16>
    %c0_49 = arith.constant 0 : index
    %c12 = arith.constant 12 : index
    %34 = vector.load %arg10[%c0_49, %c12] : memref<512x36xbf16, #tpu.memory_space<vmem>>, vector<512x4xbf16>
    tpu.vector_store %arg10[%c0_49, %c12], %33 {strides = array<i32>} : memref<512x36xbf16, #tpu.memory_space<vmem>>, vector<512x4xbf16>,
    %c0_50 = arith.constant 0 : index
    %c1_51 = arith.constant 1 : index
    %c1_52 = arith.constant 1 : index
    %c0_53 = arith.constant 0 : index
    %35 = vector.load %arg9[%c0_50, %c1_51, %c1_52, %c0_53] : memref<2x18x18x4xf32, #tpu.memory_space<vmem>>, vector<2x16x16x4xf32>
    %36 = vector.shape_cast %35 : vector<2x16x16x4xf32> to vector<512x4xf32>
    %37 = arith.truncf %36 : vector<512x4xf32> to vector<512x4xbf16>
    %c0_54 = arith.constant 0 : index
    %c16 = arith.constant 16 : index
    %38 = vector.load %arg10[%c0_54, %c16] : memref<512x36xbf16, #tpu.memory_space<vmem>>, vector<512x4xbf16>
    tpu.vector_store %arg10[%c0_54, %c16], %37 {strides = array<i32>} : memref<512x36xbf16, #tpu.memory_space<vmem>>, vector<512x4xbf16>,
    %c0_55 = arith.constant 0 : index
    %c1_56 = arith.constant 1 : index
    %c2_57 = arith.constant 2 : index
    %c0_58 = arith.constant 0 : index
    %39 = vector.load %arg9[%c0_55, %c1_56, %c2_57, %c0_58] : memref<2x18x18x4xf32, #tpu.memory_space<vmem>>, vector<2x16x16x4xf32>
    %40 = vector.shape_cast %39 : vector<2x16x16x4xf32> to vector<512x4xf32>
    %41 = arith.truncf %40 : vector<512x4xf32> to vector<512x4xbf16>
    %c0_59 = arith.constant 0 : index
    %c20 = arith.constant 20 : index
    %42 = vector.load %arg10[%c0_59, %c20] : memref<512x36xbf16, #tpu.memory_space<vmem>>, vector<512x4xbf16>
    tpu.vector_store %arg10[%c0_59, %c20], %41 {strides = array<i32>} : memref<512x36xbf16, #tpu.memory_space<vmem>>, vector<512x4xbf16>,
    %c0_60 = arith.constant 0 : index
    %c2_61 = arith.constant 2 : index
    %c0_62 = arith.constant 0 : index
    %c0_63 = arith.constant 0 : index
    %43 = vector.load %arg9[%c0_60, %c2_61, %c0_62, %c0_63] : memref<2x18x18x4xf32, #tpu.memory_space<vmem>>, vector<2x16x16x4xf32>
    %44 = vector.shape_cast %43 : vector<2x16x16x4xf32> to vector<512x4xf32>
    %45 = arith.truncf %44 : vector<512x4xf32> to vector<512x4xbf16>
    %c0_64 = arith.constant 0 : index
    %c24 = arith.constant 24 : index
    %46 = vector.load %arg10[%c0_64, %c24] : memref<512x36xbf16, #tpu.memory_space<vmem>>, vector<512x4xbf16>
    tpu.vector_store %arg10[%c0_64, %c24], %45 {strides = array<i32>} : memref<512x36xbf16, #tpu.memory_space<vmem>>, vector<512x4xbf16>,
    %c0_65 = arith.constant 0 : index
    %c2_66 = arith.constant 2 : index
    %c1_67 = arith.constant 1 : index
    %c0_68 = arith.constant 0 : index
    %47 = vector.load %arg9[%c0_65, %c2_66, %c1_67, %c0_68] : memref<2x18x18x4xf32, #tpu.memory_space<vmem>>, vector<2x16x16x4xf32>
    %48 = vector.shape_cast %47 : vector<2x16x16x4xf32> to vector<512x4xf32>
    %49 = arith.truncf %48 : vector<512x4xf32> to vector<512x4xbf16>
    %c0_69 = arith.constant 0 : index
    %c28 = arith.constant 28 : index
    %50 = vector.load %arg10[%c0_69, %c28] : memref<512x36xbf16, #tpu.memory_space<vmem>>, vector<512x4xbf16>
    tpu.vector_store %arg10[%c0_69, %c28], %49 {strides = array<i32>} : memref<512x36xbf16, #tpu.memory_space<vmem>>, vector<512x4xbf16>,
    %c0_70 = arith.constant 0 : index
    %c2_71 = arith.constant 2 : index
    %c2_72 = arith.constant 2 : index
    %c0_73 = arith.constant 0 : index
    %51 = vector.load %arg9[%c0_70, %c2_71, %c2_72, %c0_73] : memref<2x18x18x4xf32, #tpu.memory_space<vmem>>, vector<2x16x16x4xf32>
    %52 = vector.shape_cast %51 : vector<2x16x16x4xf32> to vector<512x4xf32>
    %53 = arith.truncf %52 : vector<512x4xf32> to vector<512x4xbf16>
    %c0_74 = arith.constant 0 : index
    %c32 = arith.constant 32 : index
    %54 = vector.load %arg10[%c0_74, %c32] : memref<512x36xbf16, #tpu.memory_space<vmem>>, vector<512x4xbf16>
    tpu.vector_store %arg10[%c0_74, %c32], %53 {strides = array<i32>} : memref<512x36xbf16, #tpu.memory_space<vmem>>, vector<512x4xbf16>,
    %c0_75 = arith.constant 0 : index
    %c0_76 = arith.constant 0 : index
    %55 = vector.load %arg10[%c0_75, %c0_76] : memref<512x36xbf16, #tpu.memory_space<vmem>>, vector<512x36xbf16>
    %c0_77 = arith.constant 0 : index
    %c0_78 = arith.constant 0 : index
    %56 = vector.load %arg4[%c0_77, %c0_78] : memref<36x4xbf16, #tpu.memory_space<vmem>>, vector<36x4xbf16>
    %cst_79 = arith.constant dense<0.000000e+00> : vector<512x4xf32>
    %57 = tpu.matmul %55, %56, %cst_79 {dimension_numbers = #tpu.dot_dimension_numbers<[1], [0], [0], [1], [0, 0, 1, 1], [], []>} : vector<512x36xbf16>, vector<36x4xbf16>, vector<512x4xf32> -> vector<512x4xf32>
    %c0_80 = arith.constant 0 : index
    %c0_81 = arith.constant 0 : index
    %58 = vector.load %arg5[%c0_80, %c0_81] : memref<1x4xf32, #tpu.memory_space<vmem>>, vector<1x4xf32>
    %59 = vector.broadcast %58 : vector<1x4xf32> to vector<512x4xf32>
    %60 = arith.addf %57, %59 : vector<512x4xf32>
    %cst_82 = arith.constant 0.000000e+00 : f32
    %61 = vector.broadcast %cst_82 : f32 to vector<512x4xf32>
    %62 = arith.maximumf %60, %61 : vector<512x4xf32>
    %63 = arith.truncf %62 : vector<512x4xf32> to vector<512x4xbf16>
    %c0_83 = arith.constant 0 : index
    %c0_84 = arith.constant 0 : index
    %64 = vector.load %arg6[%c0_83, %c0_84] : memref<4x16xbf16, #tpu.memory_space<vmem>>, vector<4x16xbf16>
    %cst_85 = arith.constant dense<0.000000e+00> : vector<512x16xf32>
    %65 = tpu.matmul %63, %64, %cst_85 {dimension_numbers = #tpu.dot_dimension_numbers<[1], [0], [0], [1], [0, 0, 1, 1], [], []>} : vector<512x4xbf16>, vector<4x16xbf16>, vector<512x16xf32> -> vector<512x16xf32>
    %c0_86 = arith.constant 0 : index
    %c0_87 = arith.constant 0 : index
    %66 = vector.load %arg7[%c0_86, %c0_87] : memref<1x16xf32, #tpu.memory_space<vmem>>, vector<1x16xf32>
    %67 = vector.broadcast %66 : vector<1x16xf32> to vector<512x16xf32>
    %68 = arith.addf %65, %67 : vector<512x16xf32>
    %69 = arith.extf %1 : vector<512x16xbf16> to vector<512x16xf32>
    %70 = arith.addf %68, %69 : vector<512x16xf32>
    %cst_88 = arith.constant 0.000000e+00 : f32
    %71 = vector.broadcast %cst_88 : f32 to vector<512x16xf32>
    %72 = arith.maximumf %70, %71 : vector<512x16xf32>
    %73 = vector.shape_cast %72 : vector<512x16xf32> to vector<2x16x16x16xf32>
    %74 = arith.truncf %73 : vector<2x16x16x16xf32> to vector<2x16x16x16xbf16>
    %c0_89 = arith.constant 0 : index
    %c0_90 = arith.constant 0 : index
    %c0_91 = arith.constant 0 : index
    %c0_92 = arith.constant 0 : index
    %75 = vector.load %arg8[%c0_89, %c0_90, %c0_91, %c0_92] : memref<2x16x16x16xbf16, #tpu.memory_space<vmem>>, vector<2x16x16x16xbf16>
    tpu.vector_store %arg8[%c0_89, %c0_90, %c0_91, %c0_92], %74 {strides = array<i32>} : memref<2x16x16x16xbf16, #tpu.memory_space<vmem>>, vector<2x16x16x16xbf16>,
    return
  }
  func.func @transform_0(%arg0: i32) -> (i32, i32, i32, i32) {
    %c0_i32 = arith.constant 0 : i32
    %c0_i32_0 = arith.constant 0 : i32
    %c0_i32_1 = arith.constant 0 : i32
    %c0_i32_2 = arith.constant 0 : i32
    return %arg0, %c0_i32, %c0_i32_0, %c0_i32_1 : i32, i32, i32, i32
  }
  func.func @transform_1(%arg0: i32) -> (i32, i32) {
    %c0_i32 = arith.constant 0 : i32
    %c0_i32_0 = arith.constant 0 : i32
    %c0_i32_1 = arith.constant 0 : i32
    return %c0_i32, %c0_i32_0 : i32, i32
  }
  func.func @transform_2(%arg0: i32) -> (i32, i32) {
    %c0_i32 = arith.constant 0 : i32
    %c0_i32_0 = arith.constant 0 : i32
    %c0_i32_1 = arith.constant 0 : i32
    return %c0_i32, %c0_i32_0 : i32, i32
  }
  func.func @transform_3(%arg0: i32) -> (i32, i32) {
    %c0_i32 = arith.constant 0 : i32
    %c0_i32_0 = arith.constant 0 : i32
    %c0_i32_1 = arith.constant 0 : i32
    return %c0_i32, %c0_i32_0 : i32, i32
  }
  func.func @transform_4(%arg0: i32) -> (i32, i32) {
    %c0_i32 = arith.constant 0 : i32
    %c0_i32_0 = arith.constant 0 : i32
    %c0_i32_1 = arith.constant 0 : i32
    return %c0_i32, %c0_i32_0 : i32, i32
  }
  func.func @transform_5(%arg0: i32) -> (i32, i32) {
    %c0_i32 = arith.constant 0 : i32
    %c0_i32_0 = arith.constant 0 : i32
    %c0_i32_1 = arith.constant 0 : i32
    return %c0_i32, %c0_i32_0 : i32, i32
  }
  func.func @transform_6(%arg0: i32) -> (i32, i32) {
    %c0_i32 = arith.constant 0 : i32
    %c0_i32_0 = arith.constant 0 : i32
    %c0_i32_1 = arith.constant 0 : i32
    return %c0_i32, %c0_i32_0 : i32, i32
  }
  func.func @transform_7(%arg0: i32) -> (i32, i32, i32, i32) {
    %c0_i32 = arith.constant 0 : i32
    %c0_i32_0 = arith.constant 0 : i32
    %c0_i32_1 = arith.constant 0 : i32
    %c0_i32_2 = arith.constant 0 : i32
    return %arg0, %c0_i32, %c0_i32_0, %c0_i32_1 : i32, i32, i32, i32
  }
}

</mosaic_0001>

<llo_original>
// kernel: tpu_custom_call.1
$region0: #{tpu_custom_call.1}
  #allocation0 [shape = 'u32[]', space=smem, size = 0x4, offset = 0x4, fixed_abs, tag = 'smem constant byte address 0x4 - core index']
  #allocation1 [shape = 'u32[144,128]{1,0:T(1,128)}', space=vmem, size = 0x12000, scoped, tag = 'internal scratch']
  #allocation2 [shape = 'f32[2,18,18,4]{3,2,1,0:T(8,128)}', space=vmem, size = 0x6c000, scoped, tag = 'scratch operand']
  #allocation3 [shape = 'bf16[512,36]{1,0:T(16,128)(2,1)}', space=vmem, size = 0x20000, scoped, tag = 'scratch operand']
  %s0 = inlined_call_operand.hbm [shape: bf16[2,16,16,16], index: 0, kind: input, shape index: {}]
  %s1 = inlined_call_operand.vmem [shape: bf16[16,4], index: 1, kind: input, shape index: {}]
  %s2 = inlined_call_operand.vmem [shape: f32[1,4], index: 2, kind: input, shape index: {}]
  %s3 = inlined_call_operand.vmem [shape: bf16[36,4], index: 3, kind: input, shape index: {}]
  %s4 = inlined_call_operand.vmem [shape: f32[1,4], index: 4, kind: input, shape index: {}]
  %s5 = inlined_call_operand.vmem [shape: bf16[4,16], index: 5, kind: input, shape index: {}]
  %s6 = inlined_call_operand.vmem [shape: f32[1,16], index: 6, kind: input, shape index: {}]
  %s7 = inlined_call_operand.hbm [shape: bf16[2,16,16,16], index: 7, kind: output, shape index: {}]
  %s8 = sld [smem:[#allocation0]]
  $region42: #{tpu_custom_call.1} parent=0
    _
  %s10 = ssub.s32 1, %s8
  %s11 = scalar_select 0, %s10, %s8
  $region1: #{tpu_custom_call.1} parent=0
    #allocation4 [shape = 'u8[131072]{0}', space=vmem, size = 0x20000, scoped, tag = 'input window, operand 0, single buffered']
    #allocation5 [shape = 's32[1]{0}', space=sflag, size = 0x4, scoped, tag = 'scoped memory for tpu_custom_call.1']
    #allocation6 [shape = 's32[1]{0}', space=sflag, size = 0x4, scoped, tag = 'scoped memory for tpu_custom_call.1']
    #allocation7 [shape = 'u8[131072]{0}', space=vmem, size = 0x20000, scoped, tag = 'output window, operand 0, single buffered']
    %12 = vsyncpa [#allocation5], 0
    %13 = vsyncpa [#allocation6], 0
    // Predicated region
    $region2: #{tpu_custom_call.1} parent=1 // pred_check
      _
    $region3: #{tpu_custom_call.1} parent=1 // pred_check_branch
      %15 = sbr.rel (0) target = $region5
    $region4: #{tpu_custom_call.1} parent=1 // pred_region
      %s17 = ssub.s32 4096, 4096
      %18 = vsyncadd [#allocation5], %s17
      %s19 = sshll.u32 [#allocation4], 4
      %s20 = int_to_ptr.vmem [resolvable:$true] %s19
      %25 = dma.hbm_to_vmem [thread:$0]  %s0, 4096, %s20, [#allocation5], 64, 64, 4
    $region5: #{tpu_custom_call.1} parent=1 // pred_fallthru
      _
    // Predicated region
    $region6: #{tpu_custom_call.1} parent=1 // pred_check
      _
    $region7: #{tpu_custom_call.1} parent=1 // pred_check_branch
      %27 = sbr.rel (0) target = $region9
    $region8: #{tpu_custom_call.1} parent=1 // pred_region
      _
    $region9: #{tpu_custom_call.1} parent=1 // pred_fallthru
      _
    // Predicated region
    $region10: #{tpu_custom_call.1} parent=1 // pred_check
      _
    $region11: #{tpu_custom_call.1} parent=1 // pred_check_branch
      %29 = sbr.rel (0) target = $region13
    $region12: #{tpu_custom_call.1} parent=1 // pred_region
      _
    $region13: #{tpu_custom_call.1} parent=1 // pred_fallthru
      _
    // Predicated region
    $region14: #{tpu_custom_call.1} parent=1 // pred_check
      _
    $region15: #{tpu_custom_call.1} parent=1 // pred_check_branch
      %31 = sbr.rel (0) target = $region17
    $region16: #{tpu_custom_call.1} parent=1 // pred_region
      _
    $region17: #{tpu_custom_call.1} parent=1 // pred_fallthru
      _
    // Predicated region
    $region18: #{tpu_custom_call.1} parent=1 // pred_check
      _
    $region19: #{tpu_custom_call.1} parent=1 // pred_check_branch
      %33 = sbr.rel (0) target = $region21
    $region20: #{tpu_custom_call.1} parent=1 // pred_region
      _
    $region21: #{tpu_custom_call.1} parent=1 // pred_fallthru
      _
    // Predicated region
    $region22: #{tpu_custom_call.1} parent=1 // pred_check
      _
    $region23: #{tpu_custom_call.1} parent=1 // pred_check_branch
      %35 = sbr.rel (0) target = $region25
    $region24: #{tpu_custom_call.1} parent=1 // pred_region
      _
    $region25: #{tpu_custom_call.1} parent=1 // pred_fallthru
      _
    // Predicated region
    $region26: #{tpu_custom_call.1} parent=1 // pred_check
      _
    $region27: #{tpu_custom_call.1} parent=1 // pred_check_branch
      %37 = sbr.rel (0) target = $region29
    $region28: #{tpu_custom_call.1} parent=1 // pred_region
      _
    $region29: #{tpu_custom_call.1} parent=1 // pred_fallthru
      _
    // Predicated region
    $region30: #{tpu_custom_call.1} parent=1 // pred_check
      _
    $region31: #{tpu_custom_call.1} parent=1 // pred_check_branch
      %39 = sbr.rel (0) target = $region33
    $region32: #{tpu_custom_call.1} parent=1 // pred_region
      %40 = dma.done [#allocation5], 4096
    $region33: #{tpu_custom_call.1} parent=1 // pred_fallthru
      _
    %v42 = vld [vmem:[#allocation4] sm:$0xf]
    %v43 = vld [vmem:[#allocation4 + $0x4] sm:$0xf]
    %v44 = vld [vmem:[#allocation4 + $0x8] sm:$0xf]
    %v45 = vld [vmem:[#allocation4 + $0xc] sm:$0xf]
    %v46 = vld [vmem:[#allocation4 + $0x10] sm:$0xf]
    %v47 = vld [vmem:[#allocation4 + $0x14] sm:$0xf]
    %v48 = vld [vmem:[#allocation4 + $0x18] sm:$0xf]
    %v49 = vld [vmem:[#allocation4 + $0x1c] sm:$0xf]
    %v50 = vld [vmem:[#allocation4 + $0x20] sm:$0xf]
    %v51 = vld [vmem:[#allocation4 + $0x24] sm:$0xf]
    %v52 = vld [vmem:[#allocation4 + $0x28] sm:$0xf]
    %v53 = vld [vmem:[#allocation4 + $0x2c] sm:$0xf]
    %v54 = vld [vmem:[#allocation4 + $0x30] sm:$0xf]
    %v55 = vld [vmem:[#allocation4 + $0x34] sm:$0xf]
    %v56 = vld [vmem:[#allocation4 + $0x38] sm:$0xf]
    %v57 = vld [vmem:[#allocation4 + $0x3c] sm:$0xf]
    %v58 = vld [vmem:[#allocation4 + $0x40] sm:$0xf]
    %v59 = vld [vmem:[#allocation4 + $0x44] sm:$0xf]
    %v60 = vld [vmem:[#allocation4 + $0x48] sm:$0xf]
    %v61 = vld [vmem:[#allocation4 + $0x4c] sm:$0xf]
    %v62 = vld [vmem:[#allocation4 + $0x50] sm:$0xf]
    %v63 = vld [vmem:[#allocation4 + $0x54] sm:$0xf]
    %v64 = vld [vmem:[#allocation4 + $0x58] sm:$0xf]
    %v65 = vld [vmem:[#allocation4 + $0x5c] sm:$0xf]
    %v66 = vld [vmem:[#allocation4 + $0x60] sm:$0xf]
    %v67 = vld [vmem:[#allocation4 + $0x64] sm:$0xf]
    %v68 = vld [vmem:[#allocation4 + $0x68] sm:$0xf]
    %v69 = vld [vmem:[#allocation4 + $0x6c] sm:$0xf]
    %v70 = vld [vmem:[#allocation4 + $0x70] sm:$0xf]
    %v71 = vld [vmem:[#allocation4 + $0x74] sm:$0xf]
    %v72 = vld [vmem:[#allocation4 + $0x78] sm:$0xf]
    %v73 = vld [vmem:[#allocation4 + $0x7c] sm:$0xf]
    %v74 = vld [vmem:[#allocation4 + $0x80] sm:$0xf]
    %v75 = vld [vmem:[#allocation4 + $0x84] sm:$0xf]
    %v76 = vld [vmem:[#allocation4 + $0x88] sm:$0xf]
    %v77 = vld [vmem:[#allocation4 + $0x8c] sm:$0xf]
    %v78 = vld [vmem:[#allocation4 + $0x90] sm:$0xf]
    %v79 = vld [vmem:[#allocation4 + $0x94] sm:$0xf]
    %v80 = vld [vmem:[#allocation4 + $0x98] sm:$0xf]
    %v81 = vld [vmem:[#allocation4 + $0x9c] sm:$0xf]
    %v82 = vld [vmem:[#allocation4 + $0xa0] sm:$0xf]
    %v83 = vld [vmem:[#allocation4 + $0xa4] sm:$0xf]
    %v84 = vld [vmem:[#allocation4 + $0xa8] sm:$0xf]
    %v85 = vld [vmem:[#allocation4 + $0xac] sm:$0xf]
    %v86 = vld [vmem:[#allocation4 + $0xb0] sm:$0xf]
    %v87 = vld [vmem:[#allocation4 + $0xb4] sm:$0xf]
    %v88 = vld [vmem:[#allocation4 + $0xb8] sm:$0xf]
    %v89 = vld [vmem:[#allocation4 + $0xbc] sm:$0xf]
    %v90 = vld [vmem:[#allocation4 + $0xc0] sm:$0xf]
    %v91 = vld [vmem:[#allocation4 + $0xc4] sm:$0xf]
    %v92 = vld [vmem:[#allocation4 + $0xc8] sm:$0xf]
    %v93 = vld [vmem:[#allocation4 + $0xcc] sm:$0xf]
    %v94 = vld [vmem:[#allocation4 + $0xd0] sm:$0xf]
    %v95 = vld [vmem:[#allocation4 + $0xd4] sm:$0xf]
    %v96 = vld [vmem:[#allocation4 + $0xd8] sm:$0xf]
    %v97 = vld [vmem:[#allocation4 + $0xdc] sm:$0xf]
    %v98 = vld [vmem:[#allocation4 + $0xe0] sm:$0xf]
    %v99 = vld [vmem:[#allocation4 + $0xe4] sm:$0xf]
    %v100 = vld [vmem:[#allocation4 + $0xe8] sm:$0xf]
    %v101 = vld [vmem:[#allocation4 + $0xec] sm:$0xf]
    %v102 = vld [vmem:[#allocation4 + $0xf0] sm:$0xf]
    %v103 = vld [vmem:[#allocation4 + $0xf4] sm:$0xf]
    %v104 = vld [vmem:[#allocation4 + $0xf8] sm:$0xf]
    %v105 = vld [vmem:[#allocation4 + $0xfc] sm:$0xf]
    %v106 = vld [vmem:[%s1] sm:$0xf]
    %v107 = vld [vmem:[%s1 + $0x4] sm:$0xf]
    %v108 = vld [vmem:[%s2] sm:$0x1]
    %v110 = vlaneseq
    %v111 = vshrl.u32 %v110, 7
    %v112 = vsub.s32 0, %v111
    %v113 = vrot.slane %v108, %v112
    %v179 = vunpack.c.l.b16 %v42
    %v180 = vunpack.c.l.b16 %v43
    %v181 = vunpack.c.l.b16 %v44
    %v182 = vunpack.c.l.b16 %v45
    %v183 = vunpack.c.l.b16 %v46
    %v184 = vunpack.c.l.b16 %v47
    %v185 = vunpack.c.l.b16 %v48
    %v186 = vunpack.c.l.b16 %v49
    %v187 = vunpack.c.l.b16 %v50
    %v188 = vunpack.c.l.b16 %v51
    %v189 = vunpack.c.l.b16 %v52
    %v190 = vunpack.c.l.b16 %v53
    %v191 = vunpack.c.l.b16 %v54
    %v192 = vunpack.c.l.b16 %v55
    %v193 = vunpack.c.l.b16 %v56
    %v194 = vunpack.c.l.b16 %v57
    %v195 = vunpack.c.l.b16 %v58
    %v196 = vunpack.c.l.b16 %v59
    %v197 = vunpack.c.l.b16 %v60
    %v198 = vunpack.c.l.b16 %v61
    %v199 = vunpack.c.l.b16 %v62
    %v200 = vunpack.c.l.b16 %v63
    %v201 = vunpack.c.l.b16 %v64
    %v202 = vunpack.c.l.b16 %v65
    %v203 = vunpack.c.l.b16 %v66
    %v204 = vunpack.c.l.b16 %v67
    %v205 = vunpack.c.l.b16 %v68
    %v206 = vunpack.c.l.b16 %v69
    %v207 = vunpack.c.l.b16 %v70
    %v208 = vunpack.c.l.b16 %v71
    %v209 = vunpack.c.l.b16 %v72
    %v210 = vunpack.c.l.b16 %v73
    %v211 = vunpack.c.l.b16 %v74
    %v212 = vunpack.c.l.b16 %v75
    %v213 = vunpack.c.l.b16 %v76
    %v214 = vunpack.c.l.b16 %v77
    %v215 = vunpack.c.l.b16 %v78
    %v216 = vunpack.c.l.b16 %v79
    %v217 = vunpack.c.l.b16 %v80
    %v218 = vunpack.c.l.b16 %v81
    %v219 = vunpack.c.l.b16 %v82
    %v220 = vunpack.c.l.b16 %v83
    %v221 = vunpack.c.l.b16 %v84
    %v222 = vunpack.c.l.b16 %v85
    %v223 = vunpack.c.l.b16 %v86
    %v224 = vunpack.c.l.b16 %v87
    %v225 = vunpack.c.l.b16 %v88
    %v226 = vunpack.c.l.b16 %v89
    %v227 = vunpack.c.l.b16 %v90
    %v228 = vunpack.c.l.b16 %v91
    %v229 = vunpack.c.l.b16 %v92
    %v230 = vunpack.c.l.b16 %v93
    %v231 = vunpack.c.l.b16 %v94
    %v232 = vunpack.c.l.b16 %v95
    %v233 = vunpack.c.l.b16 %v96
    %v234 = vunpack.c.l.b16 %v97
    %v235 = vunpack.c.l.b16 %v98
    %v236 = vunpack.c.l.b16 %v99
    %v237 = vunpack.c.l.b16 %v100
    %v238 = vunpack.c.l.b16 %v101
    %v239 = vunpack.c.l.b16 %v102
    %v240 = vunpack.c.l.b16 %v103
    %v241 = vunpack.c.l.b16 %v104
    %v242 = vunpack.c.l.b16 %v105
    %v243 = vpack.c.b16 %v180, %v179
    %v244 = vpack.c.b16 %v182, %v181
    %v245 = vpack.c.b16 %v184, %v183
    %v246 = vpack.c.b16 %v186, %v185
    %v247 = vpack.c.b16 %v188, %v187
    %v248 = vpack.c.b16 %v190, %v189
    %v249 = vpack.c.b16 %v192, %v191
    %v250 = vpack.c.b16 %v194, %v193
    %v251 = vpack.c.b16 %v196, %v195
    %v252 = vpack.c.b16 %v198, %v197
    %v253 = vpack.c.b16 %v200, %v199
    %v254 = vpack.c.b16 %v202, %v201
    %v255 = vpack.c.b16 %v204, %v203
    %v256 = vpack.c.b16 %v206, %v205
    %v257 = vpack.c.b16 %v208, %v207
    %v258 = vpack.c.b16 %v210, %v209
    %v259 = vpack.c.b16 %v212, %v211
    %v260 = vpack.c.b16 %v214, %v213
    %v261 = vpack.c.b16 %v216, %v215
    %v262 = vpack.c.b16 %v218, %v217
    %v263 = vpack.c.b16 %v220, %v219
    %v264 = vpack.c.b16 %v222, %v221
    %v265 = vpack.c.b16 %v224, %v223
    %v266 = vpack.c.b16 %v226, %v225
    %v267 = vpack.c.b16 %v228, %v227
    %v268 = vpack.c.b16 %v230, %v229
    %v269 = vpack.c.b16 %v232, %v231
    %v270 = vpack.c.b16 %v234, %v233
    %v271 = vpack.c.b16 %v236, %v235
    %v272 = vpack.c.b16 %v238, %v237
    %v273 = vpack.c.b16 %v240, %v239
    %v274 = vpack.c.b16 %v242, %v241
    %v277 = vunpack.c.l.b16 %v106
    %v278 = vunpack.c.l.b16 %v107
    %v279 = vpack.c.b16 %v278, %v277
    %vm281 = vcmask 130048
    %v283 = vsel %vm281, %v243, 0
    %v286 = vsel %vm281, %v244, 0
    %v289 = vsel %vm281, %v245, 0
    %v292 = vsel %vm281, %v246, 0
    %v295 = vsel %vm281, %v247, 0
    %v298 = vsel %vm281, %v248, 0
    %v301 = vsel %vm281, %v249, 0
    %v304 = vsel %vm281, %v250, 0
    %v307 = vsel %vm281, %v251, 0
    %v310 = vsel %vm281, %v252, 0
    %v313 = vsel %vm281, %v253, 0
    %v316 = vsel %vm281, %v254, 0
    %v319 = vsel %vm281, %v255, 0
    %v322 = vsel %vm281, %v256, 0
    %v325 = vsel %vm281, %v257, 0
    %v328 = vsel %vm281, %v258, 0
    %v331 = vsel %vm281, %v259, 0
    %v334 = vsel %vm281, %v260, 0
    %v337 = vsel %vm281, %v261, 0
    %v340 = vsel %vm281, %v262, 0
    %v343 = vsel %vm281, %v263, 0
    %v346 = vsel %vm281, %v264, 0
    %v349 = vsel %vm281, %v265, 0
    %v352 = vsel %vm281, %v266, 0
    %v355 = vsel %vm281, %v267, 0
    %v358 = vsel %vm281, %v268, 0
    %v361 = vsel %vm281, %v269, 0
    %v364 = vsel %vm281, %v270, 0
    %v367 = vsel %vm281, %v271, 0
    %v370 = vsel %vm281, %v272, 0
    %v373 = vsel %vm281, %v273, 0
    %v376 = vsel %vm281, %v274, 0
    %378 = vmatprep.subr.bf16.mxu0 0
    %379 = vmatpush1.bf16.msra.mxu0 %v279
    %380 = vmatprep.subr.bf16.mxu0 0
    %381 = vmatpush1.bf16.msra.mxu0 0
    %382 = vmatprep.subr.bf16.mxu0 0
    %383 = vmatpush1.bf16.msra.mxu0 0
    %384 = vmatprep.subr.bf16.mxu0 0
    %385 = vmatpush1.bf16.msra.mxu0 0
    %386 = vmatprep.subr.bf16.mxu0 0
    %387 = vmatpush1.bf16.msra.mxu0 0
    %388 = vmatprep.subr.bf16.mxu0 0
    %389 = vmatpush1.bf16.msra.mxu0 0
    %390 = vmatprep.subr.bf16.mxu0 0
    %391 = vmatpush1.bf16.msra.mxu0 0
    %392 = vmatprep.subr.bf16.mxu0 0
    %393 = vmatpush1.bf16.msra.mxu0 0
    %394 = vmatprep.subr.bf16.mxu0 0
    %395 = vmatpush1.bf16.msra.mxu0 0
    %396 = vmatprep.subr.bf16.mxu0 0
    %397 = vmatpush1.bf16.msra.mxu0 0
    %398 = vmatprep.subr.bf16.mxu0 0
    %399 = vmatpush1.bf16.msra.mxu0 0
    %400 = vmatprep.subr.bf16.mxu0 0
    %401 = vmatpush1.bf16.msra.mxu0 0
    %402 = vmatprep.subr.bf16.mxu0 0
    %403 = vmatpush1.bf16.msra.mxu0 0
    %404 = vmatprep.subr.bf16.mxu0 0
    %405 = vmatpush1.bf16.msra.mxu0 0
    %406 = vmatprep.subr.bf16.mxu0 0
    %407 = vmatpush1.bf16.msra.mxu0 0
    %408 = vmatprep.subr.bf16.mxu0 0
    %409 = vmatpush1.bf16.msra.mxu0 0
    %410 = vmatprep.mubr.bf16.mxu0 0
    %411 = vmatmul.mubr.bf16.gmra.mrb[0].mxu0 %v283
    %v412 = vpop.f32.mrb[0].mxu0
    %v413 = vadd.f32 %v113, %v412
    %v414 = vpop.f32.mrb[0].mxu0
    %v415 = vpop.f32.mrb[0].mxu0
    %v416 = vadd.f32 %v113, %v415
    %v417 = vpop.f32.mrb[0].mxu0
    %418 = vmatprep.mubr.bf16.mxu0 0
    %419 = vmatmul.mubr.bf16.gmra.mrb[0].mxu0 %v286
    %v420 = vpop.f32.mrb[0].mxu0
    %v421 = vadd.f32 %v113, %v420
    %v422 = vpop.f32.mrb[0].mxu0
    %v423 = vpop.f32.mrb[0].mxu0
    %v424 = vadd.f32 %v113, %v423
    %v425 = vpop.f32.mrb[0].mxu0
    %426 = vmatprep.mubr.bf16.mxu0 0
    %427 = vmatmul.mubr.bf16.gmra.mrb[0].mxu0 %v289
    %v428 = vpop.f32.mrb[0].mxu0
    %v429 = vadd.f32 %v113, %v428
    %v430 = vpop.f32.mrb[0].mxu0
    %v431 = vpop.f32.mrb[0].mxu0
    %v432 = vadd.f32 %v113, %v431
    %v433 = vpop.f32.mrb[0].mxu0
    %434 = vmatprep.mubr.bf16.mxu0 0
    %435 = vmatmul.mubr.bf16.gmra.mrb[0].mxu0 %v292
    %v436 = vpop.f32.mrb[0].mxu0
    %v437 = vadd.f32 %v113, %v436
    %v438 = vpop.f32.mrb[0].mxu0
    %v439 = vpop.f32.mrb[0].mxu0
    %v440 = vadd.f32 %v113, %v439
    %v441 = vpop.f32.mrb[0].mxu0
    %442 = vmatprep.mubr.bf16.mxu0 0
    %443 = vmatmul.mubr.bf16.gmra.mrb[0].mxu0 %v295
    %v444 = vpop.f32.mrb[0].mxu0
    %v445 = vadd.f32 %v113, %v444
    %v446 = vpop.f32.mrb[0].mxu0
    %v447 = vpop.f32.mrb[0].mxu0
    %v448 = vadd.f32 %v113, %v447
    %v449 = vpop.f32.mrb[0].mxu0
    %450 = vmatprep.mubr.bf16.mxu0 0
    %451 = vmatmul.mubr.bf16.gmra.mrb[0].mxu0 %v298
    %v452 = vpop.f32.mrb[0].mxu0
    %v453 = vadd.f32 %v113, %v452
    %v454 = vpop.f32.mrb[0].mxu0
    %v455 = vpop.f32.mrb[0].mxu0
    %v456 = vadd.f32 %v113, %v455
    %v457 = vpop.f32.mrb[0].mxu0
    %458 = vmatprep.mubr.bf16.mxu0 0
    %459 = vmatmul.mubr.bf16.gmra.mrb[0].mxu0 %v301
    %v460 = vpop.f32.mrb[0].mxu0
    %v461 = vadd.f32 %v113, %v460
    %v462 = vpop.f32.mrb[0].mxu0
    %v463 = vpop.f32.mrb[0].mxu0
    %v464 = vadd.f32 %v113, %v463
    %v465 = vpop.f32.mrb[0].mxu0
    %466 = vmatprep.mubr.bf16.mxu0 0
    %467 = vmatmul.mubr.bf16.gmra.mrb[0].mxu0 %v304
    %v468 = vpop.f32.mrb[0].mxu0
    %v469 = vadd.f32 %v113, %v468
    %v470 = vpop.f32.mrb[0].mxu0
    %v471 = vpop.f32.mrb[0].mxu0
    %v472 = vadd.f32 %v113, %v471
    %v473 = vpop.f32.mrb[0].mxu0
    %474 = vmatprep.mubr.bf16.mxu0 0
    %475 = vmatmul.mubr.bf16.gmra.mrb[0].mxu0 %v307
    %v476 = vpop.f32.mrb[0].mxu0
    %v477 = vadd.f32 %v113, %v476
    %v478 = vpop.f32.mrb[0].mxu0
    %v479 = vpop.f32.mrb[0].mxu0
    %v480 = vadd.f32 %v113, %v479
    %v481 = vpop.f32.mrb[0].mxu0
    %482 = vmatprep.mubr.bf16.mxu0 0
    %483 = vmatmul.mubr.bf16.gmra.mrb[0].mxu0 %v310
    %v484 = vpop.f32.mrb[0].mxu0
    %v485 = vadd.f32 %v113, %v484
    %v486 = vpop.f32.mrb[0].mxu0
    %v487 = vpop.f32.mrb[0].mxu0
    %v488 = vadd.f32 %v113, %v487
    %v489 = vpop.f32.mrb[0].mxu0
    %490 = vmatprep.mubr.bf16.mxu0 0
    %491 = vmatmul.mubr.bf16.gmra.mrb[0].mxu0 %v313
    %v492 = vpop.f32.mrb[0].mxu0
    %v493 = vadd.f32 %v113, %v492
    %v494 = vpop.f32.mrb[0].mxu0
    %v495 = vpop.f32.mrb[0].mxu0
    %v496 = vadd.f32 %v113, %v495
    %v497 = vpop.f32.mrb[0].mxu0
    %498 = vmatprep.mubr.bf16.mxu0 0
    %499 = vmatmul.mubr.bf16.gmra.mrb[0].mxu0 %v316
    %v500 = vpop.f32.mrb[0].mxu0
    %v501 = vadd.f32 %v113, %v500
    %v502 = vpop.f32.mrb[0].mxu0
    %v503 = vpop.f32.mrb[0].mxu0
    %v504 = vadd.f32 %v113, %v503
    %v505 = vpop.f32.mrb[0].mxu0
    %506 = vmatprep.mubr.bf16.mxu0 0
    %507 = vmatmul.mubr.bf16.gmra.mrb[0].mxu0 %v319
    %v508 = vpop.f32.mrb[0].mxu0
    %v509 = vadd.f32 %v113, %v508
    %v510 = vpop.f32.mrb[0].mxu0
    %v511 = vpop.f32.mrb[0].mxu0
    %v512 = vadd.f32 %v113, %v511
    %v513 = vpop.f32.mrb[0].mxu0
    %514 = vmatprep.mubr.bf16.mxu0 0
    %515 = vmatmul.mubr.bf16.gmra.mrb[0].mxu0 %v322
    %v516 = vpop.f32.mrb[0].mxu0
    %v517 = vadd.f32 %v113, %v516
    %v518 = vpop.f32.mrb[0].mxu0
    %v519 = vpop.f32.mrb[0].mxu0
    %v520 = vadd.f32 %v113, %v519
    %v521 = vpop.f32.mrb[0].mxu0
    %522 = vmatprep.mubr.bf16.mxu0 0
    %523 = vmatmul.mubr.bf16.gmra.mrb[0].mxu0 %v325
    %v524 = vpop.f32.mrb[0].mxu0
    %v525 = vadd.f32 %v113, %v524
    %v526 = vpop.f32.mrb[0].mxu0
    %v527 = vpop.f32.mrb[0].mxu0
    %v528 = vadd.f32 %v113, %v527
    %v529 = vpop.f32.mrb[0].mxu0
    %530 = vmatprep.mubr.bf16.mxu0 0
    %531 = vmatmul.mubr.bf16.gmra.mrb[0].mxu0 %v328
    %v532 = vpop.f32.mrb[0].mxu0
    %v533 = vadd.f32 %v113, %v532
    %v534 = vpop.f32.mrb[0].mxu0
    %v535 = vpop.f32.mrb[0].mxu0
    %v536 = vadd.f32 %v113, %v535
    %v537 = vpop.f32.mrb[0].mxu0
    %538 = vmatprep.mubr.bf16.mxu0 0
    %539 = vmatmul.mubr.bf16.gmra.mrb[0].mxu0 %v331
    %v540 = vpop.f32.mrb[0].mxu0
    %v541 = vadd.f32 %v113, %v540
    %v542 = vpop.f32.mrb[0].mxu0
    %v543 = vpop.f32.mrb[0].mxu0
    %v544 = vadd.f32 %v113, %v543
    %v545 = vpop.f32.mrb[0].mxu0
    %546 = vmatprep.mubr.bf16.mxu0 0
    %547 = vmatmul.mubr.bf16.gmra.mrb[0].mxu0 %v334
    %v548 = vpop.f32.mrb[0].mxu0
    %v549 = vadd.f32 %v113, %v548
    %v550 = vpop.f32.mrb[0].mxu0
    %v551 = vpop.f32.mrb[0].mxu0
    %v552 = vadd.f32 %v113, %v551
    %v553 = vpop.f32.mrb[0].mxu0
    %554 = vmatprep.mubr.bf16.mxu0 0
    %555 = vmatmul.mubr.bf16.gmra.mrb[0].mxu0 %v337
    %v556 = vpop.f32.mrb[0].mxu0
    %v557 = vadd.f32 %v113, %v556
    %v558 = vpop.f32.mrb[0].mxu0
    %v559 = vpop.f32.mrb[0].mxu0
    %v560 = vadd.f32 %v113, %v559
    %v561 = vpop.f32.mrb[0].mxu0
    %562 = vmatprep.mubr.bf16.mxu0 0
    %563 = vmatmul.mubr.bf16.gmra.mrb[0].mxu0 %v340
    %v564 = vpop.f32.mrb[0].mxu0
    %v565 = vadd.f32 %v113, %v564
    %v566 = vpop.f32.mrb[0].mxu0
    %v567 = vpop.f32.mrb[0].mxu0
    %v568 = vadd.f32 %v113, %v567
    %v569 = vpop.f32.mrb[0].mxu0
    %570 = vmatprep.mubr.bf16.mxu0 0
    %571 = vmatmul.mubr.bf16.gmra.mrb[0].mxu0 %v343
    %v572 = vpop.f32.mrb[0].mxu0
    %v573 = vadd.f32 %v113, %v572
    %v574 = vpop.f32.mrb[0].mxu0
    %v575 = vpop.f32.mrb[0].mxu0
    %v576 = vadd.f32 %v113, %v575
    %v577 = vpop.f32.mrb[0].mxu0
    %578 = vmatprep.mubr.bf16.mxu0 0
    %579 = vmatmul.mubr.bf16.gmra.mrb[0].mxu0 %v346
    %v580 = vpop.f32.mrb[0].mxu0
    %v581 = vadd.f32 %v113, %v580
    %v582 = vpop.f32.mrb[0].mxu0
    %v583 = vpop.f32.mrb[0].mxu0
    %v584 = vadd.f32 %v113, %v583
    %v585 = vpop.f32.mrb[0].mxu0
    %586 = vmatprep.mubr.bf16.mxu0 0
    %587 = vmatmul.mubr.bf16.gmra.mrb[0].mxu0 %v349
    %v588 = vpop.f32.mrb[0].mxu0
    %v589 = vadd.f32 %v113, %v588
    %v590 = vpop.f32.mrb[0].mxu0
    %v591 = vpop.f32.mrb[0].mxu0
    %v592 = vadd.f32 %v113, %v591
    %v593 = vpop.f32.mrb[0].mxu0
    %594 = vmatprep.mubr.bf16.mxu0 0
    %595 = vmatmul.mubr.bf16.gmra.mrb[0].mxu0 %v352
    %v596 = vpop.f32.mrb[0].mxu0
    %v597 = vadd.f32 %v113, %v596
    %v598 = vpop.f32.mrb[0].mxu0
    %v599 = vpop.f32.mrb[0].mxu0
    %v600 = vadd.f32 %v113, %v599
    %v601 = vpop.f32.mrb[0].mxu0
    %602 = vmatprep.mubr.bf16.mxu0 0
    %603 = vmatmul.mubr.bf16.gmra.mrb[0].mxu0 %v355
    %v604 = vpop.f32.mrb[0].mxu0
    %v605 = vadd.f32 %v113, %v604
    %v606 = vpop.f32.mrb[0].mxu0
    %v607 = vpop.f32.mrb[0].mxu0
    %v608 = vadd.f32 %v113, %v607
    %v609 = vpop.f32.mrb[0].mxu0
    %610 = vmatprep.mubr.bf16.mxu0 0
    %611 = vmatmul.mubr.bf16.gmra.mrb[0].mxu0 %v358
    %v612 = vpop.f32.mrb[0].mxu0
    %v613 = vadd.f32 %v113, %v612
    %v614 = vpop.f32.mrb[0].mxu0
    %v615 = vpop.f32.mrb[0].mxu0
    %v616 = vadd.f32 %v113, %v615
    %v617 = vpop.f32.mrb[0].mxu0
    %618 = vmatprep.mubr.bf16.mxu0 0
    %619 = vmatmul.mubr.bf16.gmra.mrb[0].mxu0 %v361
    %v620 = vpop.f32.mrb[0].mxu0
    %v621 = vadd.f32 %v113, %v620
    %v622 = vpop.f32.mrb[0].mxu0
    %v623 = vpop.f32.mrb[0].mxu0
    %v624 = vadd.f32 %v113, %v623
    %v625 = vpop.f32.mrb[0].mxu0
    %626 = vmatprep.mubr.bf16.mxu0 0
    %627 = vmatmul.mubr.bf16.gmra.mrb[0].mxu0 %v364
    %v628 = vpop.f32.mrb[0].mxu0
    %v629 = vadd.f32 %v113, %v628
    %v630 = vpop.f32.mrb[0].mxu0
    %v631 = vpop.f32.mrb[0].mxu0
    %v632 = vadd.f32 %v113, %v631
    %v633 = vpop.f32.mrb[0].mxu0
    %634 = vmatprep.mubr.bf16.mxu0 0
    %635 = vmatmul.mubr.bf16.gmra.mrb[0].mxu0 %v367
    %v636 = vpop.f32.mrb[0].mxu0
    %v637 = vadd.f32 %v113, %v636
    %v638 = vpop.f32.mrb[0].mxu0
    %v639 = vpop.f32.mrb[0].mxu0
    %v640 = vadd.f32 %v113, %v639
    %v641 = vpop.f32.mrb[0].mxu0
    %642 = vmatprep.mubr.bf16.mxu0 0
    %643 = vmatmul.mubr.bf16.gmra.mrb[0].mxu0 %v370
    %v644 = vpop.f32.mrb[0].mxu0
    %v645 = vadd.f32 %v113, %v644
    %v646 = vpop.f32.mrb[0].mxu0
    %v647 = vpop.f32.mrb[0].mxu0
    %v648 = vadd.f32 %v113, %v647
    %v649 = vpop.f32.mrb[0].mxu0
    %650 = vmatprep.mubr.bf16.mxu0 0
    %651 = vmatmul.mubr.bf16.gmra.mrb[0].mxu0 %v373
    %v652 = vpop.f32.mrb[0].mxu0
    %v653 = vadd.f32 %v113, %v652
    %v654 = vpop.f32.mrb[0].mxu0
    %v655 = vpop.f32.mrb[0].mxu0
    %v656 = vadd.f32 %v113, %v655
    %v657 = vpop.f32.mrb[0].mxu0
    %658 = vmatprep.mubr.bf16.mxu0 0
    %659 = vmatmul.mubr.bf16.gmra.mrb[0].mxu0 %v376
    %v660 = vpop.f32.mrb[0].mxu0
    %v661 = vadd.f32 %v113, %v660
    %v662 = vpop.f32.mrb[0].mxu0
    %v663 = vpop.f32.mrb[0].mxu0
    %v664 = vadd.f32 %v113, %v663
    %v665 = vpop.f32.mrb[0].mxu0
    %666 = vdwg.mxu0
    %v667 = vmax.f32 %v413, 0.0
    %v668 = vmax.f32 %v416, 0.0
    %v669 = vmax.f32 %v421, 0.0
    %v670 = vmax.f32 %v424, 0.0
    %v671 = vmax.f32 %v429, 0.0
    %v672 = vmax.f32 %v432, 0.0
    %v673 = vmax.f32 %v437, 0.0
    %v674 = vmax.f32 %v440, 0.0
    %v675 = vmax.f32 %v445, 0.0
    %v676 = vmax.f32 %v448, 0.0
    %v677 = vmax.f32 %v453, 0.0
    %v678 = vmax.f32 %v456, 0.0
    %v679 = vmax.f32 %v461, 0.0
    %v680 = vmax.f32 %v464, 0.0
    %v681 = vmax.f32 %v469, 0.0
    %v682 = vmax.f32 %v472, 0.0
    %v683 = vmax.f32 %v477, 0.0
    %v684 = vmax.f32 %v480, 0.0
    %v685 = vmax.f32 %v485, 0.0
    %v686 = vmax.f32 %v488, 0.0
    %v687 = vmax.f32 %v493, 0.0
    %v688 = vmax.f32 %v496, 0.0
    %v689 = vmax.f32 %v501, 0.0
    %v690 = vmax.f32 %v504, 0.0
    %v691 = vmax.f32 %v509, 0.0
    %v692 = vmax.f32 %v512, 0.0
    %v693 = vmax.f32 %v517, 0.0
    %v694 = vmax.f32 %v520, 0.0
    %v695 = vmax.f32 %v525, 0.0
    %v696 = vmax.f32 %v528, 0.0
    %v697 = vmax.f32 %v533, 0.0
    %v698 = vmax.f32 %v536, 0.0
    %v699 = vmax.f32 %v541, 0.0
    %v700 = vmax.f32 %v544, 0.0
    %v701 = vmax.f32 %v549, 0.0
    %v702 = vmax.f32 %v552, 0.0
    %v703 = vmax.f32 %v557, 0.0
    %v704 = vmax.f32 %v560, 0.0
    %v705 = vmax.f32 %v565, 0.0
    %v706 = vmax.f32 %v568, 0.0
    %v707 = vmax.f32 %v573, 0.0
    %v708 = vmax.f32 %v576, 0.0
    %v709 = vmax.f32 %v581, 0.0
    %v710 = vmax.f32 %v584, 0.0
    %v711 = vmax.f32 %v589, 0.0
    %v712 = vmax.f32 %v592, 0.0
    %v713 = vmax.f32 %v597, 0.0
    %v714 = vmax.f32 %v600, 0.0
    %v715 = vmax.f32 %v605, 0.0
    %v716 = vmax.f32 %v608, 0.0
    %v717 = vmax.f32 %v613, 0.0
    %v718 = vmax.f32 %v616, 0.0
    %v719 = vmax.f32 %v621, 0.0
    %v720 = vmax.f32 %v624, 0.0
    %v721 = vmax.f32 %v629, 0.0
    %v722 = vmax.f32 %v632, 0.0
    %v723 = vmax.f32 %v637, 0.0
    %v724 = vmax.f32 %v640, 0.0
    %v725 = vmax.f32 %v645, 0.0
    %v726 = vmax.f32 %v648, 0.0
    %v727 = vmax.f32 %v653, 0.0
    %v728 = vmax.f32 %v656, 0.0
    %v729 = vmax.f32 %v661, 0.0
    %v730 = vmax.f32 %v664, 0.0
    %vm731 = vcmask 31744
    %732 = vst.msk [vmem:[#allocation2] sm:$0xff] %vm731, 0.0
    %733 = vst.msk [vmem:[#allocation2 + $0x8] sm:$0xff] %vm731, 0.0
    %vm734 = vcmask 25600
    %735 = vst.msk [vmem:[#allocation2 + $0x10] sm:$0x3] %vm734, 0.0
    %736 = vst.msk [vmem:[#allocation2 + $0x1b0] sm:$0xff] %vm731, 0.0
    %737 = vst.msk [vmem:[#allocation2 + $0x1b8] sm:$0xff] %vm731, 0.0
    %738 = vst.msk [vmem:[#allocation2 + $0x1c0] sm:$0x3] %vm734, 0.0
    %s739 = scalar_lea.vmem [#allocation2], 408
    %740 = vst.msk [vmem:[%s739] sm:$0xff] %vm731, 0.0
    %741 = vst.msk [vmem:[%s739 + $0x8] sm:$0xff] %vm731, 0.0
    %742 = vst.msk [vmem:[%s739 + $0x10] sm:$0x3] %vm734, 0.0
    %743 = vst.msk [vmem:[%s739 + $0x1b0] sm:$0xff] %vm731, 0.0
    %744 = vst.msk [vmem:[%s739 + $0x1b8] sm:$0xff] %vm731, 0.0
    %745 = vst.msk [vmem:[%s739 + $0x1c0] sm:$0x3] %vm734, 0.0
    %vm746 = vcmask 24576
    %747 = vst.msk [vmem:[#allocation2] sm:$0x1] %vm746, 0.0
    %748 = vst.msk [vmem:[#allocation2 + $0x18] sm:$0x1] %vm746, 0.0
    %749 = vst.msk [vmem:[#allocation2 + $0x30] sm:$0x1] %vm746, 0.0
    %750 = vst.msk [vmem:[#allocation2 + $0x48] sm:$0x1] %vm746, 0.0
    %751 = vst.msk [vmem:[#allocation2 + $0x60] sm:$0x1] %vm746, 0.0
    %752 = vst.msk [vmem:[#allocation2 + $0x78] sm:$0x1] %vm746, 0.0
    %753 = vst.msk [vmem:[#allocation2 + $0x90] sm:$0x1] %vm746, 0.0
    %754 = vst.msk [vmem:[#allocation2 + $0xa8] sm:$0x1] %vm746, 0.0
    %755 = vst.msk [vmem:[#allocation2 + $0xc0] sm:$0x1] %vm746, 0.0
    %756 = vst.msk [vmem:[#allocation2 + $0xd8] sm:$0x1] %vm746, 0.0
    %757 = vst.msk [vmem:[#allocation2 + $0xf0] sm:$0x1] %vm746, 0.0
    %758 = vst.msk [vmem:[#allocation2 + $0x108] sm:$0x1] %vm746, 0.0
    %759 = vst.msk [vmem:[#allocation2 + $0x120] sm:$0x1] %vm746, 0.0
    %760 = vst.msk [vmem:[#allocation2 + $0x138] sm:$0x1] %vm746, 0.0
    %761 = vst.msk [vmem:[#allocation2 + $0x150] sm:$0x1] %vm746, 0.0
    %762 = vst.msk [vmem:[#allocation2 + $0x168] sm:$0x1] %vm746, 0.0
    %763 = vst.msk [vmem:[#allocation2 + $0x180] sm:$0x1] %vm746, 0.0
    %764 = vst.msk [vmem:[#allocation2 + $0x198] sm:$0x1] %vm746, 0.0
    %765 = vst.msk [vmem:[#allocation2 + $0x1b0] sm:$0x1] %vm746, 0.0
    %766 = vst.msk [vmem:[#allocation2 + $0x1c8] sm:$0x1] %vm746, 0.0
    %767 = vst.msk [vmem:[#allocation2 + $0x1e0] sm:$0x1] %vm746, 0.0
    %768 = vst.msk [vmem:[#allocation2 + $0x1f8] sm:$0x1] %vm746, 0.0
    %769 = vst.msk [vmem:[#allocation2 + $0x210] sm:$0x1] %vm746, 0.0
    %770 = vst.msk [vmem:[#allocation2 + $0x228] sm:$0x1] %vm746, 0.0
    %771 = vst.msk [vmem:[#allocation2 + $0x240] sm:$0x1] %vm746, 0.0
    %772 = vst.msk [vmem:[#allocation2 + $0x258] sm:$0x1] %vm746, 0.0
    %773 = vst.msk [vmem:[#allocation2 + $0x270] sm:$0x1] %vm746, 0.0
    %774 = vst.msk [vmem:[#allocation2 + $0x288] sm:$0x1] %vm746, 0.0
    %775 = vst.msk [vmem:[#allocation2 + $0x2a0] sm:$0x1] %vm746, 0.0
    %776 = vst.msk [vmem:[#allocation2 + $0x2b8] sm:$0x1] %vm746, 0.0
    %777 = vst.msk [vmem:[#allocation2 + $0x2d0] sm:$0x1] %vm746, 0.0
    %778 = vst.msk [vmem:[#allocation2 + $0x2e8] sm:$0x1] %vm746, 0.0
    %779 = vst.msk [vmem:[#allocation2 + $0x300] sm:$0x1] %vm746, 0.0
    %780 = vst.msk [vmem:[#allocation2 + $0x318] sm:$0x1] %vm746, 0.0
    %781 = vst.msk [vmem:[#allocation2 + $0x330] sm:$0x1] %vm746, 0.0
    %782 = vst.msk [vmem:[#allocation2 + $0x348] sm:$0x1] %vm746, 0.0
    %783 = vst.msk [vmem:[#allocation2 + $0x11] sm:$0x1] %vm746, 0.0
    %784 = vst.msk [vmem:[#allocation2 + $0x29] sm:$0x1] %vm746, 0.0
    %785 = vst.msk [vmem:[#allocation2 + $0x41] sm:$0x1] %vm746, 0.0
    %786 = vst.msk [vmem:[#allocation2 + $0x59] sm:$0x1] %vm746, 0.0
    %787 = vst.msk [vmem:[#allocation2 + $0x71] sm:$0x1] %vm746, 0.0
    %788 = vst.msk [vmem:[#allocation2 + $0x89] sm:$0x1] %vm746, 0.0
    %789 = vst.msk [vmem:[#allocation2 + $0xa1] sm:$0x1] %vm746, 0.0
    %790 = vst.msk [vmem:[#allocation2 + $0xb9] sm:$0x1] %vm746, 0.0
    %791 = vst.msk [vmem:[#allocation2 + $0xd1] sm:$0x1] %vm746, 0.0
    %792 = vst.msk [vmem:[#allocation2 + $0xe9] sm:$0x1] %vm746, 0.0
    %793 = vst.msk [vmem:[#allocation2 + $0x101] sm:$0x1] %vm746, 0.0
    %794 = vst.msk [vmem:[#allocation2 + $0x119] sm:$0x1] %vm746, 0.0
    %795 = vst.msk [vmem:[#allocation2 + $0x131] sm:$0x1] %vm746, 0.0
    %796 = vst.msk [vmem:[#allocation2 + $0x149] sm:$0x1] %vm746, 0.0
    %797 = vst.msk [vmem:[#allocation2 + $0x161] sm:$0x1] %vm746, 0.0
    %798 = vst.msk [vmem:[#allocation2 + $0x179] sm:$0x1] %vm746, 0.0
    %799 = vst.msk [vmem:[#allocation2 + $0x191] sm:$0x1] %vm746, 0.0
    %800 = vst.msk [vmem:[#allocation2 + $0x1a9] sm:$0x1] %vm746, 0.0
    %801 = vst.msk [vmem:[#allocation2 + $0x1c1] sm:$0x1] %vm746, 0.0
    %802 = vst.msk [vmem:[#allocation2 + $0x1d9] sm:$0x1] %vm746, 0.0
    %803 = vst.msk [vmem:[#allocation2 + $0x1f1] sm:$0x1] %vm746, 0.0
    %804 = vst.msk [vmem:[#allocation2 + $0x209] sm:$0x1] %vm746, 0.0
    %805 = vst.msk [vmem:[#allocation2 + $0x221] sm:$0x1] %vm746, 0.0
    %806 = vst.msk [vmem:[#allocation2 + $0x239] sm:$0x1] %vm746, 0.0
    %807 = vst.msk [vmem:[#allocation2 + $0x251] sm:$0x1] %vm746, 0.0
    %808 = vst.msk [vmem:[#allocation2 + $0x269] sm:$0x1] %vm746, 0.0
    %809 = vst.msk [vmem:[#allocation2 + $0x281] sm:$0x1] %vm746, 0.0
    %810 = vst.msk [vmem:[#allocation2 + $0x299] sm:$0x1] %vm746, 0.0
    %811 = vst.msk [vmem:[#allocation2 + $0x2b1] sm:$0x1] %vm746, 0.0
    %812 = vst.msk [vmem:[#allocation2 + $0x2c9] sm:$0x1] %vm746, 0.0
    %813 = vst.msk [vmem:[#allocation2 + $0x2e1] sm:$0x1] %vm746, 0.0
    %814 = vst.msk [vmem:[#allocation2 + $0x2f9] sm:$0x1] %vm746, 0.0
    %815 = vst.msk [vmem:[#allocation2 + $0x311] sm:$0x1] %vm746, 0.0
    %816 = vst.msk [vmem:[#allocation2 + $0x329] sm:$0x1] %vm746, 0.0
    %817 = vst.msk [vmem:[#allocation2 + $0x341] sm:$0x1] %vm746, 0.0
    %818 = vst.msk [vmem:[#allocation2 + $0x359] sm:$0x1] %vm746, 0.0
    %s819 = scalar_lea.vmem [#allocation2], 24
    %820 = vst.msk [vmem:[%s819 + $0x1] sm:$0xff] %vm731, %v667
    %821 = vst.msk [vmem:[%s819 + $0x9] sm:$0xff] %vm731, %v668
    %822 = vst.msk [vmem:[%s819 + $0x19] sm:$0xff] %vm731, %v669
    %823 = vst.msk [vmem:[%s819 + $0x21] sm:$0xff] %vm731, %v670
    %824 = vst.msk [vmem:[%s819 + $0x31] sm:$0xff] %vm731, %v671
    %825 = vst.msk [vmem:[%s819 + $0x39] sm:$0xff] %vm731, %v672
    %826 = vst.msk [vmem:[%s819 + $0x49] sm:$0xff] %vm731, %v673
    %827 = vst.msk [vmem:[%s819 + $0x51] sm:$0xff] %vm731, %v674
    %828 = vst.msk [vmem:[%s819 + $0x61] sm:$0xff] %vm731, %v675
    %829 = vst.msk [vmem:[%s819 + $0x69] sm:$0xff] %vm731, %v676
    %830 = vst.msk [vmem:[%s819 + $0x79] sm:$0xff] %vm731, %v677
    %831 = vst.msk [vmem:[%s819 + $0x81] sm:$0xff] %vm731, %v678
    %832 = vst.msk [vmem:[%s819 + $0x91] sm:$0xff] %vm731, %v679
    %833 = vst.msk [vmem:[%s819 + $0x99] sm:$0xff] %vm731, %v680
    %834 = vst.msk [vmem:[%s819 + $0xa9] sm:$0xff] %vm731, %v681
    %835 = vst.msk [vmem:[%s819 + $0xb1] sm:$0xff] %vm731, %v682
    %836 = vst.msk [vmem:[%s819 + $0xc1] sm:$0xff] %vm731, %v683
    %837 = vst.msk [vmem:[%s819 + $0xc9] sm:$0xff] %vm731, %v684
    %838 = vst.msk [vmem:[%s819 + $0xd9] sm:$0xff] %vm731, %v685
    %839 = vst.msk [vmem:[%s819 + $0xe1] sm:$0xff] %vm731, %v686
    %840 = vst.msk [vmem:[%s819 + $0xf1] sm:$0xff] %vm731, %v687
    %841 = vst.msk [vmem:[%s819 + $0xf9] sm:$0xff] %vm731, %v688
    %842 = vst.msk [vmem:[%s819 + $0x109] sm:$0xff] %vm731, %v689
    %843 = vst.msk [vmem:[%s819 + $0x111] sm:$0xff] %vm731, %v690
    %844 = vst.msk [vmem:[%s819 + $0x121] sm:$0xff] %vm731, %v691
    %845 = vst.msk [vmem:[%s819 + $0x129] sm:$0xff] %vm731, %v692
    %846 = vst.msk [vmem:[%s819 + $0x139] sm:$0xff] %vm731, %v693
    %847 = vst.msk [vmem:[%s819 + $0x141] sm:$0xff] %vm731, %v694
    %848 = vst.msk [vmem:[%s819 + $0x151] sm:$0xff] %vm731, %v695
    %849 = vst.msk [vmem:[%s819 + $0x159] sm:$0xff] %vm731, %v696
    %850 = vst.msk [vmem:[%s819 + $0x169] sm:$0xff] %vm731, %v697
    %851 = vst.msk [vmem:[%s819 + $0x171] sm:$0xff] %vm731, %v698
    %852 = vst.msk [vmem:[%s819 + $0x1b1] sm:$0xff] %vm731, %v699
    %853 = vst.msk [vmem:[%s819 + $0x1b9] sm:$0xff] %vm731, %v700
    %854 = vst.msk [vmem:[%s819 + $0x1c9] sm:$0xff] %vm731, %v701
    %855 = vst.msk [vmem:[%s819 + $0x1d1] sm:$0xff] %vm731, %v702
    %856 = vst.msk [vmem:[%s819 + $0x1e1] sm:$0xff] %vm731, %v703
    %857 = vst.msk [vmem:[%s819 + $0x1e9] sm:$0xff] %vm731, %v704
    %858 = vst.msk [vmem:[%s819 + $0x1f9] sm:$0xff] %vm731, %v705
    %859 = vst.msk [vmem:[%s819 + $0x201] sm:$0xff] %vm731, %v706
    %860 = vst.msk [vmem:[%s819 + $0x211] sm:$0xff] %vm731, %v707
    %861 = vst.msk [vmem:[%s819 + $0x219] sm:$0xff] %vm731, %v708
    %862 = vst.msk [vmem:[%s819 + $0x229] sm:$0xff] %vm731, %v709
    %863 = vst.msk [vmem:[%s819 + $0x231] sm:$0xff] %vm731, %v710
    %864 = vst.msk [vmem:[%s819 + $0x241] sm:$0xff] %vm731, %v711
    %865 = vst.msk [vmem:[%s819 + $0x249] sm:$0xff] %vm731, %v712
    %866 = vst.msk [vmem:[%s819 + $0x259] sm:$0xff] %vm731, %v713
    %867 = vst.msk [vmem:[%s819 + $0x261] sm:$0xff] %vm731, %v714
    %868 = vst.msk [vmem:[%s819 + $0x271] sm:$0xff] %vm731, %v715
    %869 = vst.msk [vmem:[%s819 + $0x279] sm:$0xff] %vm731, %v716
    %870 = vst.msk [vmem:[%s819 + $0x289] sm:$0xff] %vm731, %v717
    %871 = vst.msk [vmem:[%s819 + $0x291] sm:$0xff] %vm731, %v718
    %872 = vst.msk [vmem:[%s819 + $0x2a1] sm:$0xff] %vm731, %v719
    %873 = vst.msk [vmem:[%s819 + $0x2a9] sm:$0xff] %vm731, %v720
    %874 = vst.msk [vmem:[%s819 + $0x2b9] sm:$0xff] %vm731, %v721
    %875 = vst.msk [vmem:[%s819 + $0x2c1] sm:$0xff] %vm731, %v722
    %876 = vst.msk [vmem:[%s819 + $0x2d1] sm:$0xff] %vm731, %v723
    %877 = vst.msk [vmem:[%s819 + $0x2d9] sm:$0xff] %vm731, %v724
    %878 = vst.msk [vmem:[%s819 + $0x2e9] sm:$0xff] %vm731, %v725
    %879 = vst.msk [vmem:[%s819 + $0x2f1] sm:$0xff] %vm731, %v726
    %880 = vst.msk [vmem:[%s819 + $0x301] sm:$0xff] %vm731, %v727
    %881 = vst.msk [vmem:[%s819 + $0x309] sm:$0xff] %vm731, %v728
    %882 = vst.msk [vmem:[%s819 + $0x319] sm:$0xff] %vm731, %v729
    %883 = vst.msk [vmem:[%s819 + $0x321] sm:$0xff] %vm731, %v730
    %v884 = vld [vmem:[#allocation2] sm:$0xff]
    %v885 = vld [vmem:[#allocation2 + $0x8] sm:$0xff]
    %v886 = vld [vmem:[#allocation2 + $0x18] sm:$0xff]
    %v887 = vld [vmem:[#allocation2 + $0x20] sm:$0xff]
    %v888 = vld [vmem:[#allocation2 + $0x30] sm:$0xff]
    %v889 = vld [vmem:[#allocation2 + $0x38] sm:$0xff]
    %v890 = vld [vmem:[#allocation2 + $0x48] sm:$0xff]
    %v891 = vld [vmem:[#allocation2 + $0x50] sm:$0xff]
    %v892 = vld [vmem:[#allocation2 + $0x60] sm:$0xff]
    %v893 = vld [vmem:[#allocation2 + $0x68] sm:$0xff]
    %v894 = vld [vmem:[#allocation2 + $0x78] sm:$0xff]
    %v895 = vld [vmem:[#allocation2 + $0x80] sm:$0xff]
    %v896 = vld [vmem:[#allocation2 + $0x90] sm:$0xff]
    %v897 = vld [vmem:[#allocation2 + $0x98] sm:$0xff]
    %v898 = vld [vmem:[#allocation2 + $0xa8] sm:$0xff]
    %v899 = vld [vmem:[#allocation2 + $0xb0] sm:$0xff]
    %v900 = vld [vmem:[#allocation2 + $0xc0] sm:$0xff]
    %v901 = vld [vmem:[#allocation2 + $0xc8] sm:$0xff]
    %v902 = vld [vmem:[#allocation2 + $0xd8] sm:$0xff]
    %v903 = vld [vmem:[#allocation2 + $0xe0] sm:$0xff]
    %v904 = vld [vmem:[#allocation2 + $0xf0] sm:$0xff]
    %v905 = vld [vmem:[#allocation2 + $0xf8] sm:$0xff]
    %v906 = vld [vmem:[#allocation2 + $0x108] sm:$0xff]
    %v907 = vld [vmem:[#allocation2 + $0x110] sm:$0xff]
    %v908 = vld [vmem:[#allocation2 + $0x120] sm:$0xff]
    %v909 = vld [vmem:[#allocation2 + $0x128] sm:$0xff]
    %v910 = vld [vmem:[#allocation2 + $0x138] sm:$0xff]
    %v911 = vld [vmem:[#allocation2 + $0x140] sm:$0xff]
    %v912 = vld [vmem:[#allocation2 + $0x150] sm:$0xff]
    %v913 = vld [vmem:[#allocation2 + $0x158] sm:$0xff]
    %v914 = vld [vmem:[#allocation2 + $0x168] sm:$0xff]
    %v915 = vld [vmem:[#allocation2 + $0x170] sm:$0xff]
    %v916 = vld [vmem:[#allocation2 + $0x1b0] sm:$0xff]
    %v917 = vld [vmem:[#allocation2 + $0x1b8] sm:$0xff]
    %v918 = vld [vmem:[#allocation2 + $0x1c8] sm:$0xff]
    %v919 = vld [vmem:[#allocation2 + $0x1d0] sm:$0xff]
    %v920 = vld [vmem:[#allocation2 + $0x1e0] sm:$0xff]
    %v921 = vld [vmem:[#allocation2 + $0x1e8] sm:$0xff]
    %v922 = vld [vmem:[#allocation2 + $0x1f8] sm:$0xff]
    %v923 = vld [vmem:[#allocation2 + $0x200] sm:$0xff]
    %v924 = vld [vmem:[#allocation2 + $0x210] sm:$0xff]
    %v925 = vld [vmem:[#allocation2 + $0x218] sm:$0xff]
    %v926 = vld [vmem:[#allocation2 + $0x228] sm:$0xff]
    %v927 = vld [vmem:[#allocation2 + $0x230] sm:$0xff]
    %v928 = vld [vmem:[#allocation2 + $0x240] sm:$0xff]
    %v929 = vld [vmem:[#allocation2 + $0x248] sm:$0xff]
    %v930 = vld [vmem:[#allocation2 + $0x258] sm:$0xff]
    %v931 = vld [vmem:[#allocation2 + $0x260] sm:$0xff]
    %v932 = vld [vmem:[#allocation2 + $0x270] sm:$0xff]
    %v933 = vld [vmem:[#allocation2 + $0x278] sm:$0xff]
    %v934 = vld [vmem:[#allocation2 + $0x288] sm:$0xff]
    %v935 = vld [vmem:[#allocation2 + $0x290] sm:$0xff]
    %v936 = vld [vmem:[#allocation2 + $0x2a0] sm:$0xff]
    %v937 = vld [vmem:[#allocation2 + $0x2a8] sm:$0xff]
    %v938 = vld [vmem:[#allocation2 + $0x2b8] sm:$0xff]
    %v939 = vld [vmem:[#allocation2 + $0x2c0] sm:$0xff]
    %v940 = vld [vmem:[#allocation2 + $0x2d0] sm:$0xff]
    %v941 = vld [vmem:[#allocation2 + $0x2d8] sm:$0xff]
    %v942 = vld [vmem:[#allocation2 + $0x2e8] sm:$0xff]
    %v943 = vld [vmem:[#allocation2 + $0x2f0] sm:$0xff]
    %v944 = vld [vmem:[#allocation2 + $0x300] sm:$0xff]
    %v945 = vld [vmem:[#allocation2 + $0x308] sm:$0xff]
    %v946 = vld [vmem:[#allocation2 + $0x318] sm:$0xff]
    %v947 = vld [vmem:[#allocation2 + $0x320] sm:$0xff]
    %v948 = vpack.c.bf16 %v885, %v884
    %v949 = vpack.c.bf16 %v887, %v886
    %v950 = vpack.c.bf16 %v889, %v888
    %v951 = vpack.c.bf16 %v891, %v890
    %v952 = vpack.c.bf16 %v893, %v892
    %v953 = vpack.c.bf16 %v895, %v894
    %v954 = vpack.c.bf16 %v897, %v896
    %v955 = vpack.c.bf16 %v899, %v898
    %v956 = vpack.c.bf16 %v901, %v900
    %v957 = vpack.c.bf16 %v903, %v902
    %v958 = vpack.c.bf16 %v905, %v904
    %v959 = vpack.c.bf16 %v907, %v906
    %v960 = vpack.c.bf16 %v909, %v908
    %v961 = vpack.c.bf16 %v911, %v910
    %v962 = vpack.c.bf16 %v913, %v912
    %v963 = vpack.c.bf16 %v915, %v914
    %v964 = vpack.c.bf16 %v917, %v916
    %v965 = vpack.c.bf16 %v919, %v918
    %v966 = vpack.c.bf16 %v921, %v920
    %v967 = vpack.c.bf16 %v923, %v922
    %v968 = vpack.c.bf16 %v925, %v924
    %v969 = vpack.c.bf16 %v927, %v926
    %v970 = vpack.c.bf16 %v929, %v928
    %v971 = vpack.c.bf16 %v931, %v930
    %v972 = vpack.c.bf16 %v933, %v932
    %v973 = vpack.c.bf16 %v935, %v934
    %v974 = vpack.c.bf16 %v937, %v936
    %v975 = vpack.c.bf16 %v939, %v938
    %v976 = vpack.c.bf16 %v941, %v940
    %v977 = vpack.c.bf16 %v943, %v942
    %v978 = vpack.c.bf16 %v945, %v944
    %v979 = vpack.c.bf16 %v947, %v946
    %980 = vst.msk [vmem:[#allocation3] sm:$0xff] %vm731, %v948
    %981 = vst.msk [vmem:[#allocation3 + $0x8] sm:$0xff] %vm731, %v949
    %982 = vst.msk [vmem:[#allocation3 + $0x10] sm:$0xff] %vm731, %v950
    %983 = vst.msk [vmem:[#allocation3 + $0x18] sm:$0xff] %vm731, %v951
    %984 = vst.msk [vmem:[#allocation3 + $0x20] sm:$0xff] %vm731, %v952
    %985 = vst.msk [vmem:[#allocation3 + $0x28] sm:$0xff] %vm731, %v953
    %986 = vst.msk [vmem:[#allocation3 + $0x30] sm:$0xff] %vm731, %v954
    %987 = vst.msk [vmem:[#allocation3 + $0x38] sm:$0xff] %vm731, %v955
    %988 = vst.msk [vmem:[#allocation3 + $0x40] sm:$0xff] %vm731, %v956
    %989 = vst.msk [vmem:[#allocation3 + $0x48] sm:$0xff] %vm731, %v957
    %990 = vst.msk [vmem:[#allocation3 + $0x50] sm:$0xff] %vm731, %v958
    %991 = vst.msk [vmem:[#allocation3 + $0x58] sm:$0xff] %vm731, %v959
    %992 = vst.msk [vmem:[#allocation3 + $0x60] sm:$0xff] %vm731, %v960
    %993 = vst.msk [vmem:[#allocation3 + $0x68] sm:$0xff] %vm731, %v961
    %994 = vst.msk [vmem:[#allocation3 + $0x70] sm:$0xff] %vm731, %v962
    %995 = vst.msk [vmem:[#allocation3 + $0x78] sm:$0xff] %vm731, %v963
    %996 = vst.msk [vmem:[#allocation3 + $0x80] sm:$0xff] %vm731, %v964
    %997 = vst.msk [vmem:[#allocation3 + $0x88] sm:$0xff] %vm731, %v965
    %998 = vst.msk [vmem:[#allocation3 + $0x90] sm:$0xff] %vm731, %v966
    %999 = vst.msk [vmem:[#allocation3 + $0x98] sm:$0xff] %vm731, %v967
    %1000 = vst.msk [vmem:[#allocation3 + $0xa0] sm:$0xff] %vm731, %v968
    %1001 = vst.msk [vmem:[#allocation3 + $0xa8] sm:$0xff] %vm731, %v969
    %1002 = vst.msk [vmem:[#allocation3 + $0xb0] sm:$0xff] %vm731, %v970
    %1003 = vst.msk [vmem:[#allocation3 + $0xb8] sm:$0xff] %vm731, %v971
    %1004 = vst.msk [vmem:[#allocation3 + $0xc0] sm:$0xff] %vm731, %v972
    %1005 = vst.msk [vmem:[#allocation3 + $0xc8] sm:$0xff] %vm731, %v973
    %1006 = vst.msk [vmem:[#allocation3 + $0xd0] sm:$0xff] %vm731, %v974
    %1007 = vst.msk [vmem:[#allocation3 + $0xd8] sm:$0xff] %vm731, %v975
    %1008 = vst.msk [vmem:[#allocation3 + $0xe0] sm:$0xff] %vm731, %v976
    %1009 = vst.msk [vmem:[#allocation3 + $0xe8] sm:$0xff] %vm731, %v977
    %1010 = vst.msk [vmem:[#allocation3 + $0xf0] sm:$0xff] %vm731, %v978
    %1011 = vst.msk [vmem:[#allocation3 + $0xf8] sm:$0xff] %vm731, %v979
    %v1012 = vld [vmem:[#allocation2 + $0x1] sm:$0xff]
    %v1013 = vld [vmem:[#allocation2 + $0x9] sm:$0xff]
    %v1014 = vld [vmem:[#allocation2 + $0x19] sm:$0xff]
    %v1015 = vld [vmem:[#allocation2 + $0x21] sm:$0xff]
    %v1016 = vld [vmem:[#allocation2 + $0x31] sm:$0xff]
    %v1017 = vld [vmem:[#allocation2 + $0x39] sm:$0xff]
    %v1018 = vld [vmem:[#allocation2 + $0x49] sm:$0xff]
    %v1019 = vld [vmem:[#allocation2 + $0x51] sm:$0xff]
    %v1020 = vld [vmem:[#allocation2 + $0x61] sm:$0xff]
    %v1021 = vld [vmem:[#allocation2 + $0x69] sm:$0xff]
    %v1022 = vld [vmem:[#allocation2 + $0x79] sm:$0xff]
    %v1023 = vld [vmem:[#allocation2 + $0x81] sm:$0xff]
    %v1024 = vld [vmem:[#allocation2 + $0x91] sm:$0xff]
    %v1025 = vld [vmem:[#allocation2 + $0x99] sm:$0xff]
    %v1026 = vld [vmem:[#allocation2 + $0xa9] sm:$0xff]
    %v1027 = vld [vmem:[#allocation2 + $0xb1] sm:$0xff]
    %v1028 = vld [vmem:[#allocation2 + $0xc1] sm:$0xff]
    %v1029 = vld [vmem:[#allocation2 + $0xc9] sm:$0xff]
    %v1030 = vld [vmem:[#allocation2 + $0xd9] sm:$0xff]
    %v1031 = vld [vmem:[#allocation2 + $0xe1] sm:$0xff]
    %v1032 = vld [vmem:[#allocation2 + $0xf1] sm:$0xff]
    %v1033 = vld [vmem:[#allocation2 + $0xf9] sm:$0xff]
    %v1034 = vld [vmem:[#allocation2 + $0x109] sm:$0xff]
    %v1035 = vld [vmem:[#allocation2 + $0x111] sm:$0xff]
    %v1036 = vld [vmem:[#allocation2 + $0x121] sm:$0xff]
    %v1037 = vld [vmem:[#allocation2 + $0x129] sm:$0xff]
    %v1038 = vld [vmem:[#allocation2 + $0x139] sm:$0xff]
    %v1039 = vld [vmem:[#allocation2 + $0x141] sm:$0xff]
    %v1040 = vld [vmem:[#allocation2 + $0x151] sm:$0xff]
    %v1041 = vld [vmem:[#allocation2 + $0x159] sm:$0xff]
    %v1042 = vld [vmem:[#allocation2 + $0x169] sm:$0xff]
    %v1043 = vld [vmem:[#allocation2 + $0x171] sm:$0xff]
    %v1044 = vld [vmem:[#allocation2 + $0x1b1] sm:$0xff]
    %v1045 = vld [vmem:[#allocation2 + $0x1b9] sm:$0xff]
    %v1046 = vld [vmem:[#allocation2 + $0x1c9] sm:$0xff]
    %v1047 = vld [vmem:[#allocation2 + $0x1d1] sm:$0xff]
    %v1048 = vld [vmem:[#allocation2 + $0x1e1] sm:$0xff]
    %v1049 = vld [vmem:[#allocation2 + $0x1e9] sm:$0xff]
    %v1050 = vld [vmem:[#allocation2 + $0x1f9] sm:$0xff]
    %v1051 = vld [vmem:[#allocation2 + $0x201] sm:$0xff]
    %v1052 = vld [vmem:[#allocation2 + $0x211] sm:$0xff]
    %v1053 = vld [vmem:[#allocation2 + $0x219] sm:$0xff]
    %v1054 = vld [vmem:[#allocation2 + $0x229] sm:$0xff]
    %v1055 = vld [vmem:[#allocation2 + $0x231] sm:$0xff]
    %v1056 = vld [vmem:[#allocation2 + $0x241] sm:$0xff]
    %v1057 = vld [vmem:[#allocation2 + $0x249] sm:$0xff]
    %v1058 = vld [vmem:[#allocation2 + $0x259] sm:$0xff]
    %v1059 = vld [vmem:[#allocation2 + $0x261] sm:$0xff]
    %v1060 = vld [vmem:[#allocation2 + $0x271] sm:$0xff]
    %v1061 = vld [vmem:[#allocation2 + $0x279] sm:$0xff]
    %v1062 = vld [vmem:[#allocation2 + $0x289] sm:$0xff]
    %v1063 = vld [vmem:[#allocation2 + $0x291] sm:$0xff]
    %v1064 = vld [vmem:[#allocation2 + $0x2a1] sm:$0xff]
    %v1065 = vld [vmem:[#allocation2 + $0x2a9] sm:$0xff]
    %v1066 = vld [vmem:[#allocation2 + $0x2b9] sm:$0xff]
    %v1067 = vld [vmem:[#allocation2 + $0x2c1] sm:$0xff]
    %v1068 = vld [vmem:[#allocation2 + $0x2d1] sm:$0xff]
    %v1069 = vld [vmem:[#allocation2 + $0x2d9] sm:$0xff]
    %v1070 = vld [vmem:[#allocation2 + $0x2e9] sm:$0xff]
    %v1071 = vld [vmem:[#allocation2 + $0x2f1] sm:$0xff]
    %v1072 = vld [vmem:[#allocation2 + $0x301] sm:$0xff]
    %v1073 = vld [vmem:[#allocation2 + $0x309] sm:$0xff]
    %v1074 = vld [vmem:[#allocation2 + $0x319] sm:$0xff]
    %v1075 = vld [vmem:[#allocation2 + $0x321] sm:$0xff]
    %v1076 = vpack.c.bf16 %v1013, %v1012
    %v1077 = vpack.c.bf16 %v1015, %v1014
    %v1078 = vpack.c.bf16 %v1017, %v1016
    %v1079 = vpack.c.bf16 %v1019, %v1018
    %v1080 = vpack.c.bf16 %v1021, %v1020
    %v1081 = vpack.c.bf16 %v1023, %v1022
    %v1082 = vpack.c.bf16 %v1025, %v1024
    %v1083 = vpack.c.bf16 %v1027, %v1026
    %v1084 = vpack.c.bf16 %v1029, %v1028
    %v1085 = vpack.c.bf16 %v1031, %v1030
    %v1086 = vpack.c.bf16 %v1033, %v1032
    %v1087 = vpack.c.bf16 %v1035, %v1034
    %v1088 = vpack.c.bf16 %v1037, %v1036
    %v1089 = vpack.c.bf16 %v1039, %v1038
    %v1090 = vpack.c.bf16 %v1041, %v1040
    %v1091 = vpack.c.bf16 %v1043, %v1042
    %v1092 = vpack.c.bf16 %v1045, %v1044
    %v1093 = vpack.c.bf16 %v1047, %v1046
    %v1094 = vpack.c.bf16 %v1049, %v1048
    %v1095 = vpack.c.bf16 %v1051, %v1050
    %v1096 = vpack.c.bf16 %v1053, %v1052
    %v1097 = vpack.c.bf16 %v1055, %v1054
    %v1098 = vpack.c.bf16 %v1057, %v1056
    %v1099 = vpack.c.bf16 %v1059, %v1058
    %v1100 = vpack.c.bf16 %v1061, %v1060
    %v1101 = vpack.c.bf16 %v1063, %v1062
    %v1102 = vpack.c.bf16 %v1065, %v1064
    %v1103 = vpack.c.bf16 %v1067, %v1066
    %v1104 = vpack.c.bf16 %v1069, %v1068
    %v1105 = vpack.c.bf16 %v1071, %v1070
    %v1106 = vpack.c.bf16 %v1073, %v1072
    %v1107 = vpack.c.bf16 %v1075, %v1074
    %1140 = vrot.lane.b32.xlu0 %v1076, 4
    %v1141 = vpop.permute.xlu0 %1140
    %1142 = vrot.lane.b32.xlu0 %v1077, 4
    %v1143 = vpop.permute.xlu0 %1142
    %1144 = vrot.lane.b32.xlu0 %v1078, 4
    %v1145 = vpop.permute.xlu0 %1144
    %1146 = vrot.lane.b32.xlu0 %v1079, 4
    %v1147 = vpop.permute.xlu0 %1146
    %1148 = vrot.lane.b32.xlu0 %v1080, 4
    %v1149 = vpop.permute.xlu0 %1148
    %1150 = vrot.lane.b32.xlu0 %v1081, 4
    %v1151 = vpop.permute.xlu0 %1150
    %1152 = vrot.lane.b32.xlu0 %v1082, 4
    %v1153 = vpop.permute.xlu0 %1152
    %1154 = vrot.lane.b32.xlu0 %v1083, 4
    %v1155 = vpop.permute.xlu0 %1154
    %1156 = vrot.lane.b32.xlu0 %v1084, 4
    %v1157 = vpop.permute.xlu0 %1156
    %1158 = vrot.lane.b32.xlu0 %v1085, 4
    %v1159 = vpop.permute.xlu0 %1158
    %1160 = vrot.lane.b32.xlu0 %v1086, 4
    %v1161 = vpop.permute.xlu0 %1160
    %1162 = vrot.lane.b32.xlu0 %v1087, 4
    %v1163 = vpop.permute.xlu0 %1162
    %1164 = vrot.lane.b32.xlu0 %v1088, 4
    %v1165 = vpop.permute.xlu0 %1164
    %1166 = vrot.lane.b32.xlu0 %v1089, 4
    %v1167 = vpop.permute.xlu0 %1166
    %1168 = vrot.lane.b32.xlu0 %v1090, 4
    %v1169 = vpop.permute.xlu0 %1168
    %1170 = vrot.lane.b32.xlu0 %v1091, 4
    %v1171 = vpop.permute.xlu0 %1170
    %1172 = vrot.lane.b32.xlu0 %v1092, 4
    %v1173 = vpop.permute.xlu0 %1172
    %1174 = vrot.lane.b32.xlu0 %v1093, 4
    %v1175 = vpop.permute.xlu0 %1174
    %1176 = vrot.lane.b32.xlu0 %v1094, 4
    %v1177 = vpop.permute.xlu0 %1176
    %1178 = vrot.lane.b32.xlu0 %v1095, 4
    %v1179 = vpop.permute.xlu0 %1178
    %1180 = vrot.lane.b32.xlu0 %v1096, 4
    %v1181 = vpop.permute.xlu0 %1180
    %1182 = vrot.lane.b32.xlu0 %v1097, 4
    %v1183 = vpop.permute.xlu0 %1182
    %1184 = vrot.lane.b32.xlu0 %v1098, 4
    %v1185 = vpop.permute.xlu0 %1184
    %1186 = vrot.lane.b32.xlu0 %v1099, 4
    %v1187 = vpop.permute.xlu0 %1186
    %1188 = vrot.lane.b32.xlu0 %v1100, 4
    %v1189 = vpop.permute.xlu0 %1188
    %1190 = vrot.lane.b32.xlu0 %v1101, 4
    %v1191 = vpop.permute.xlu0 %1190
    %1192 = vrot.lane.b32.xlu0 %v1102, 4
    %v1193 = vpop.permute.xlu0 %1192
    %1194 = vrot.lane.b32.xlu0 %v1103, 4
    %v1195 = vpop.permute.xlu0 %1194
    %1196 = vrot.lane.b32.xlu0 %v1104, 4
    %v1197 = vpop.permute.xlu0 %1196
    %1198 = vrot.lane.b32.xlu0 %v1105, 4
    %v1199 = vpop.permute.xlu0 %1198
    %1200 = vrot.lane.b32.xlu0 %v1106, 4
    %v1201 = vpop.permute.xlu0 %1200
    %1202 = vrot.lane.b32.xlu0 %v1107, 4
    %v1203 = vpop.permute.xlu0 %1202
    %vm1236 = vcmask 64544
    %1237 = vst.msk [vmem:[#allocation3] sm:$0xff] %vm1236, %v1141
    %1238 = vst.msk [vmem:[#allocation3 + $0x8] sm:$0xff] %vm1236, %v1143
    %1239 = vst.msk [vmem:[#allocation3 + $0x10] sm:$0xff] %vm1236, %v1145
    %1240 = vst.msk [vmem:[#allocation3 + $0x18] sm:$0xff] %vm1236, %v1147
    %1241 = vst.msk [vmem:[#allocation3 + $0x20] sm:$0xff] %vm1236, %v1149
    %1242 = vst.msk [vmem:[#allocation3 + $0x28] sm:$0xff] %vm1236, %v1151
    %1243 = vst.msk [vmem:[#allocation3 + $0x30] sm:$0xff] %vm1236, %v1153
    %1244 = vst.msk [vmem:[#allocation3 + $0x38] sm:$0xff] %vm1236, %v1155
    %1245 = vst.msk [vmem:[#allocation3 + $0x40] sm:$0xff] %vm1236, %v1157
    %1246 = vst.msk [vmem:[#allocation3 + $0x48] sm:$0xff] %vm1236, %v1159
    %1247 = vst.msk [vmem:[#allocation3 + $0x50] sm:$0xff] %vm1236, %v1161
    %1248 = vst.msk [vmem:[#allocation3 + $0x58] sm:$0xff] %vm1236, %v1163
    %1249 = vst.msk [vmem:[#allocation3 + $0x60] sm:$0xff] %vm1236, %v1165
    %1250 = vst.msk [vmem:[#allocation3 + $0x68] sm:$0xff] %vm1236, %v1167
    %1251 = vst.msk [vmem:[#allocation3 + $0x70] sm:$0xff] %vm1236, %v1169
    %1252 = vst.msk [vmem:[#allocation3 + $0x78] sm:$0xff] %vm1236, %v1171
    %1253 = vst.msk [vmem:[#allocation3 + $0x80] sm:$0xff] %vm1236, %v1173
    %1254 = vst.msk [vmem:[#allocation3 + $0x88] sm:$0xff] %vm1236, %v1175
    %1255 = vst.msk [vmem:[#allocation3 + $0x90] sm:$0xff] %vm1236, %v1177
    %1256 = vst.msk [vmem:[#allocation3 + $0x98] sm:$0xff] %vm1236, %v1179
    %1257 = vst.msk [vmem:[#allocation3 + $0xa0] sm:$0xff] %vm1236, %v1181
    %1258 = vst.msk [vmem:[#allocation3 + $0xa8] sm:$0xff] %vm1236, %v1183
    %1259 = vst.msk [vmem:[#allocation3 + $0xb0] sm:$0xff] %vm1236, %v1185
    %1260 = vst.msk [vmem:[#allocation3 + $0xb8] sm:$0xff] %vm1236, %v1187
    %1261 = vst.msk [vmem:[#allocation3 + $0xc0] sm:$0xff] %vm1236, %v1189
    %1262 = vst.msk [vmem:[#allocation3 + $0xc8] sm:$0xff] %vm1236, %v1191
    %1263 = vst.msk [vmem:[#allocation3 + $0xd0] sm:$0xff] %vm1236, %v1193
    %1264 = vst.msk [vmem:[#allocation3 + $0xd8] sm:$0xff] %vm1236, %v1195
    %1265 = vst.msk [vmem:[#allocation3 + $0xe0] sm:$0xff] %vm1236, %v1197
    %1266 = vst.msk [vmem:[#allocation3 + $0xe8] sm:$0xff] %vm1236, %v1199
    %1267 = vst.msk [vmem:[#allocation3 + $0xf0] sm:$0xff] %vm1236, %v1201
    %1268 = vst.msk [vmem:[#allocation3 + $0xf8] sm:$0xff] %vm1236, %v1203
    %v1269 = vld [vmem:[#allocation2 + $0x2] sm:$0xff]
    %v1270 = vld [vmem:[#allocation2 + $0xa] sm:$0xff]
    %v1271 = vld [vmem:[#allocation2 + $0x1a] sm:$0xff]
    %v1272 = vld [vmem:[#allocation2 + $0x22] sm:$0xff]
    %v1273 = vld [vmem:[#allocation2 + $0x32] sm:$0xff]
    %v1274 = vld [vmem:[#allocation2 + $0x3a] sm:$0xff]
    %v1275 = vld [vmem:[#allocation2 + $0x4a] sm:$0xff]
    %v1276 = vld [vmem:[#allocation2 + $0x52] sm:$0xff]
    %v1277 = vld [vmem:[#allocation2 + $0x62] sm:$0xff]
    %v1278 = vld [vmem:[#allocation2 + $0x6a] sm:$0xff]
    %v1279 = vld [vmem:[#allocation2 + $0x7a] sm:$0xff]
    %v1280 = vld [vmem:[#allocation2 + $0x82] sm:$0xff]
    %v1281 = vld [vmem:[#allocation2 + $0x92] sm:$0xff]
    %v1282 = vld [vmem:[#allocation2 + $0x9a] sm:$0xff]
    %v1283 = vld [vmem:[#allocation2 + $0xaa] sm:$0xff]
    %v1284 = vld [vmem:[#allocation2 + $0xb2] sm:$0xff]
    %v1285 = vld [vmem:[#allocation2 + $0xc2] sm:$0xff]
    %v1286 = vld [vmem:[#allocation2 + $0xca] sm:$0xff]
    %v1287 = vld [vmem:[#allocation2 + $0xda] sm:$0xff]
    %v1288 = vld [vmem:[#allocation2 + $0xe2] sm:$0xff]
    %v1289 = vld [vmem:[#allocation2 + $0xf2] sm:$0xff]
    %v1290 = vld [vmem:[#allocation2 + $0xfa] sm:$0xff]
    %v1291 = vld [vmem:[#allocation2 + $0x10a] sm:$0xff]
    %v1292 = vld [vmem:[#allocation2 + $0x112] sm:$0xff]
    %v1293 = vld [vmem:[#allocation2 + $0x122] sm:$0xff]
    %v1294 = vld [vmem:[#allocation2 + $0x12a] sm:$0xff]
    %v1295 = vld [vmem:[#allocation2 + $0x13a] sm:$0xff]
    %v1296 = vld [vmem:[#allocation2 + $0x142] sm:$0xff]
    %v1297 = vld [vmem:[#allocation2 + $0x152] sm:$0xff]
    %v1298 = vld [vmem:[#allocation2 + $0x15a] sm:$0xff]
    %v1299 = vld [vmem:[#allocation2 + $0x16a] sm:$0xff]
    %v1300 = vld [vmem:[#allocation2 + $0x172] sm:$0xff]
    %v1301 = vld [vmem:[#allocation2 + $0x1b2] sm:$0xff]
    %v1302 = vld [vmem:[#allocation2 + $0x1ba] sm:$0xff]
    %v1303 = vld [vmem:[#allocation2 + $0x1ca] sm:$0xff]
    %v1304 = vld [vmem:[#allocation2 + $0x1d2] sm:$0xff]
    %v1305 = vld [vmem:[#allocation2 + $0x1e2] sm:$0xff]
    %v1306 = vld [vmem:[#allocation2 + $0x1ea] sm:$0xff]
    %v1307 = vld [vmem:[#allocation2 + $0x1fa] sm:$0xff]
    %v1308 = vld [vmem:[#allocation2 + $0x202] sm:$0xff]
    %v1309 = vld [vmem:[#allocation2 + $0x212] sm:$0xff]
    %v1310 = vld [vmem:[#allocation2 + $0x21a] sm:$0xff]
    %v1311 = vld [vmem:[#allocation2 + $0x22a] sm:$0xff]
    %v1312 = vld [vmem:[#allocation2 + $0x232] sm:$0xff]
    %v1313 = vld [vmem:[#allocation2 + $0x242] sm:$0xff]
    %v1314 = vld [vmem:[#allocation2 + $0x24a] sm:$0xff]
    %v1315 = vld [vmem:[#allocation2 + $0x25a] sm:$0xff]
    %v1316 = vld [vmem:[#allocation2 + $0x262] sm:$0xff]
    %v1317 = vld [vmem:[#allocation2 + $0x272] sm:$0xff]
    %v1318 = vld [vmem:[#allocation2 + $0x27a] sm:$0xff]
    %v1319 = vld [vmem:[#allocation2 + $0x28a] sm:$0xff]
    %v1320 = vld [vmem:[#allocation2 + $0x292] sm:$0xff]
    %v1321 = vld [vmem:[#allocation2 + $0x2a2] sm:$0xff]
    %v1322 = vld [vmem:[#allocation2 + $0x2aa] sm:$0xff]
    %v1323 = vld [vmem:[#allocation2 + $0x2ba] sm:$0xff]
    %v1324 = vld [vmem:[#allocation2 + $0x2c2] sm:$0xff]
    %v1325 = vld [vmem:[#allocation2 + $0x2d2] sm:$0xff]
    %v1326 = vld [vmem:[#allocation2 + $0x2da] sm:$0xff]
    %v1327 = vld [vmem:[#allocation2 + $0x2ea] sm:$0xff]
    %v1328 = vld [vmem:[#allocation2 + $0x2f2] sm:$0xff]
    %v1329 = vld [vmem:[#allocation2 + $0x302] sm:$0xff]
    %v1330 = vld [vmem:[#allocation2 + $0x30a] sm:$0xff]
    %v1331 = vld [vmem:[#allocation2 + $0x31a] sm:$0xff]
    %v1332 = vld [vmem:[#allocation2 + $0x322] sm:$0xff]
    %v1333 = vpack.c.bf16 %v1270, %v1269
    %v1334 = vpack.c.bf16 %v1272, %v1271
    %v1335 = vpack.c.bf16 %v1274, %v1273
    %v1336 = vpack.c.bf16 %v1276, %v1275
    %v1337 = vpack.c.bf16 %v1278, %v1277
    %v1338 = vpack.c.bf16 %v1280, %v1279
    %v1339 = vpack.c.bf16 %v1282, %v1281
    %v1340 = vpack.c.bf16 %v1284, %v1283
    %v1341 = vpack.c.bf16 %v1286, %v1285
    %v1342 = vpack.c.bf16 %v1288, %v1287
    %v1343 = vpack.c.bf16 %v1290, %v1289
    %v1344 = vpack.c.bf16 %v1292, %v1291
    %v1345 = vpack.c.bf16 %v1294, %v1293
    %v1346 = vpack.c.bf16 %v1296, %v1295
    %v1347 = vpack.c.bf16 %v1298, %v1297
    %v1348 = vpack.c.bf16 %v1300, %v1299
    %v1349 = vpack.c.bf16 %v1302, %v1301
    %v1350 = vpack.c.bf16 %v1304, %v1303
    %v1351 = vpack.c.bf16 %v1306, %v1305
    %v1352 = vpack.c.bf16 %v1308, %v1307
    %v1353 = vpack.c.bf16 %v1310, %v1309
    %v1354 = vpack.c.bf16 %v1312, %v1311
    %v1355 = vpack.c.bf16 %v1314, %v1313
    %v1356 = vpack.c.bf16 %v1316, %v1315
    %v1357 = vpack.c.bf16 %v1318, %v1317
    %v1358 = vpack.c.bf16 %v1320, %v1319
    %v1359 = vpack.c.bf16 %v1322, %v1321
    %v1360 = vpack.c.bf16 %v1324, %v1323
    %v1361 = vpack.c.bf16 %v1326, %v1325
    %v1362 = vpack.c.bf16 %v1328, %v1327
    %v1363 = vpack.c.bf16 %v1330, %v1329
    %v1364 = vpack.c.bf16 %v1332, %v1331
    %1397 = vrot.lane.b32.xlu0 %v1333, 8
    %v1398 = vpop.permute.xlu0 %1397
    %1399 = vrot.lane.b32.xlu0 %v1334, 8
    %v1400 = vpop.permute.xlu0 %1399
    %1401 = vrot.lane.b32.xlu0 %v1335, 8
    %v1402 = vpop.permute.xlu0 %1401
    %1403 = vrot.lane.b32.xlu0 %v1336, 8
    %v1404 = vpop.permute.xlu0 %1403
    %1405 = vrot.lane.b32.xlu0 %v1337, 8
    %v1406 = vpop.permute.xlu0 %1405
    %1407 = vrot.lane.b32.xlu0 %v1338, 8
    %v1408 = vpop.permute.xlu0 %1407
    %1409 = vrot.lane.b32.xlu0 %v1339, 8
    %v1410 = vpop.permute.xlu0 %1409
    %1411 = vrot.lane.b32.xlu0 %v1340, 8
    %v1412 = vpop.permute.xlu0 %1411
    %1413 = vrot.lane.b32.xlu0 %v1341, 8
    %v1414 = vpop.permute.xlu0 %1413
    %1415 = vrot.lane.b32.xlu0 %v1342, 8
    %v1416 = vpop.permute.xlu0 %1415
    %1417 = vrot.lane.b32.xlu0 %v1343, 8
    %v1418 = vpop.permute.xlu0 %1417
    %1419 = vrot.lane.b32.xlu0 %v1344, 8
    %v1420 = vpop.permute.xlu0 %1419
    %1421 = vrot.lane.b32.xlu0 %v1345, 8
    %v1422 = vpop.permute.xlu0 %1421
    %1423 = vrot.lane.b32.xlu0 %v1346, 8
    %v1424 = vpop.permute.xlu0 %1423
    %1425 = vrot.lane.b32.xlu0 %v1347, 8
    %v1426 = vpop.permute.xlu0 %1425
    %1427 = vrot.lane.b32.xlu0 %v1348, 8
    %v1428 = vpop.permute.xlu0 %1427
    %1429 = vrot.lane.b32.xlu0 %v1349, 8
    %v1430 = vpop.permute.xlu0 %1429
    %1431 = vrot.lane.b32.xlu0 %v1350, 8
    %v1432 = vpop.permute.xlu0 %1431
    %1433 = vrot.lane.b32.xlu0 %v1351, 8
    %v1434 = vpop.permute.xlu0 %1433
    %1435 = vrot.lane.b32.xlu0 %v1352, 8
    %v1436 = vpop.permute.xlu0 %1435
    %1437 = vrot.lane.b32.xlu0 %v1353, 8
    %v1438 = vpop.permute.xlu0 %1437
    %1439 = vrot.lane.b32.xlu0 %v1354, 8
    %v1440 = vpop.permute.xlu0 %1439
    %1441 = vrot.lane.b32.xlu0 %v1355, 8
    %v1442 = vpop.permute.xlu0 %1441
    %1443 = vrot.lane.b32.xlu0 %v1356, 8
    %v1444 = vpop.permute.xlu0 %1443
    %1445 = vrot.lane.b32.xlu0 %v1357, 8
    %v1446 = vpop.permute.xlu0 %1445
    %1447 = vrot.lane.b32.xlu0 %v1358, 8
    %v1448 = vpop.permute.xlu0 %1447
    %1449 = vrot.lane.b32.xlu0 %v1359, 8
    %v1450 = vpop.permute.xlu0 %1449
    %1451 = vrot.lane.b32.xlu0 %v1360, 8
    %v1452 = vpop.permute.xlu0 %1451
    %1453 = vrot.lane.b32.xlu0 %v1361, 8
    %v1454 = vpop.permute.xlu0 %1453
    %1455 = vrot.lane.b32.xlu0 %v1362, 8
    %v1456 = vpop.permute.xlu0 %1455
    %1457 = vrot.lane.b32.xlu0 %v1363, 8
    %v1458 = vpop.permute.xlu0 %1457
    %1459 = vrot.lane.b32.xlu0 %v1364, 8
    %v1460 = vpop.permute.xlu0 %1459
    %vm1493 = vcmask 97344
    %1494 = vst.msk [vmem:[#allocation3] sm:$0xff] %vm1493, %v1398
    %1495 = vst.msk [vmem:[#allocation3 + $0x8] sm:$0xff] %vm1493, %v1400
    %1496 = vst.msk [vmem:[#allocation3 + $0x10] sm:$0xff] %vm1493, %v1402
    %1497 = vst.msk [vmem:[#allocation3 + $0x18] sm:$0xff] %vm1493, %v1404
    %1498 = vst.msk [vmem:[#allocation3 + $0x20] sm:$0xff] %vm1493, %v1406
    %1499 = vst.msk [vmem:[#allocation3 + $0x28] sm:$0xff] %vm1493, %v1408
    %1500 = vst.msk [vmem:[#allocation3 + $0x30] sm:$0xff] %vm1493, %v1410
    %1501 = vst.msk [vmem:[#allocation3 + $0x38] sm:$0xff] %vm1493, %v1412
    %1502 = vst.msk [vmem:[#allocation3 + $0x40] sm:$0xff] %vm1493, %v1414
    %1503 = vst.msk [vmem:[#allocation3 + $0x48] sm:$0xff] %vm1493, %v1416
    %1504 = vst.msk [vmem:[#allocation3 + $0x50] sm:$0xff] %vm1493, %v1418
    %1505 = vst.msk [vmem:[#allocation3 + $0x58] sm:$0xff] %vm1493, %v1420
    %1506 = vst.msk [vmem:[#allocation3 + $0x60] sm:$0xff] %vm1493, %v1422
    %1507 = vst.msk [vmem:[#allocation3 + $0x68] sm:$0xff] %vm1493, %v1424
    %1508 = vst.msk [vmem:[#allocation3 + $0x70] sm:$0xff] %vm1493, %v1426
    %1509 = vst.msk [vmem:[#allocation3 + $0x78] sm:$0xff] %vm1493, %v1428
    %1510 = vst.msk [vmem:[#allocation3 + $0x80] sm:$0xff] %vm1493, %v1430
    %1511 = vst.msk [vmem:[#allocation3 + $0x88] sm:$0xff] %vm1493, %v1432
    %1512 = vst.msk [vmem:[#allocation3 + $0x90] sm:$0xff] %vm1493, %v1434
    %1513 = vst.msk [vmem:[#allocation3 + $0x98] sm:$0xff] %vm1493, %v1436
    %1514 = vst.msk [vmem:[#allocation3 + $0xa0] sm:$0xff] %vm1493, %v1438
    %1515 = vst.msk [vmem:[#allocation3 + $0xa8] sm:$0xff] %vm1493, %v1440
    %1516 = vst.msk [vmem:[#allocation3 + $0xb0] sm:$0xff] %vm1493, %v1442
    %1517 = vst.msk [vmem:[#allocation3 + $0xb8] sm:$0xff] %vm1493, %v1444
    %1518 = vst.msk [vmem:[#allocation3 + $0xc0] sm:$0xff] %vm1493, %v1446
    %1519 = vst.msk [vmem:[#allocation3 + $0xc8] sm:$0xff] %vm1493, %v1448
    %1520 = vst.msk [vmem:[#allocation3 + $0xd0] sm:$0xff] %vm1493, %v1450
    %1521 = vst.msk [vmem:[#allocation3 + $0xd8] sm:$0xff] %vm1493, %v1452
    %1522 = vst.msk [vmem:[#allocation3 + $0xe0] sm:$0xff] %vm1493, %v1454
    %1523 = vst.msk [vmem:[#allocation3 + $0xe8] sm:$0xff] %vm1493, %v1456
    %1524 = vst.msk [vmem:[#allocation3 + $0xf0] sm:$0xff] %vm1493, %v1458
    %1525 = vst.msk [vmem:[#allocation3 + $0xf8] sm:$0xff] %vm1493, %v1460
    %v1526 = vld [vmem:[%s819] sm:$0xff]
    %v1527 = vld [vmem:[%s819 + $0x8] sm:$0xff]
    %v1528 = vld [vmem:[%s819 + $0x18] sm:$0xff]
    %v1529 = vld [vmem:[%s819 + $0x20] sm:$0xff]
    %v1530 = vld [vmem:[%s819 + $0x30] sm:$0xff]
    %v1531 = vld [vmem:[%s819 + $0x38] sm:$0xff]
    %v1532 = vld [vmem:[%s819 + $0x48] sm:$0xff]
    %v1533 = vld [vmem:[%s819 + $0x50] sm:$0xff]
    %v1534 = vld [vmem:[%s819 + $0x60] sm:$0xff]
    %v1535 = vld [vmem:[%s819 + $0x68] sm:$0xff]
    %v1536 = vld [vmem:[%s819 + $0x78] sm:$0xff]
    %v1537 = vld [vmem:[%s819 + $0x80] sm:$0xff]
    %v1538 = vld [vmem:[%s819 + $0x90] sm:$0xff]
    %v1539 = vld [vmem:[%s819 + $0x98] sm:$0xff]
    %v1540 = vld [vmem:[%s819 + $0xa8] sm:$0xff]
    %v1541 = vld [vmem:[%s819 + $0xb0] sm:$0xff]
    %v1542 = vld [vmem:[%s819 + $0xc0] sm:$0xff]
    %v1543 = vld [vmem:[%s819 + $0xc8] sm:$0xff]
    %v1544 = vld [vmem:[%s819 + $0xd8] sm:$0xff]
    %v1545 = vld [vmem:[%s819 + $0xe0] sm:$0xff]
    %v1546 = vld [vmem:[%s819 + $0xf0] sm:$0xff]
    %v1547 = vld [vmem:[%s819 + $0xf8] sm:$0xff]
    %v1548 = vld [vmem:[%s819 + $0x108] sm:$0xff]
    %v1549 = vld [vmem:[%s819 + $0x110] sm:$0xff]
    %v1550 = vld [vmem:[%s819 + $0x120] sm:$0xff]
    %v1551 = vld [vmem:[%s819 + $0x128] sm:$0xff]
    %v1552 = vld [vmem:[%s819 + $0x138] sm:$0xff]
    %v1553 = vld [vmem:[%s819 + $0x140] sm:$0xff]
    %v1554 = vld [vmem:[%s819 + $0x150] sm:$0xff]
    %v1555 = vld [vmem:[%s819 + $0x158] sm:$0xff]
    %v1556 = vld [vmem:[%s819 + $0x168] sm:$0xff]
    %v1557 = vld [vmem:[%s819 + $0x170] sm:$0xff]
    %v1558 = vld [vmem:[%s819 + $0x1b0] sm:$0xff]
    %v1559 = vld [vmem:[%s819 + $0x1b8] sm:$0xff]
    %v1560 = vld [vmem:[%s819 + $0x1c8] sm:$0xff]
    %v1561 = vld [vmem:[%s819 + $0x1d0] sm:$0xff]
    %v1562 = vld [vmem:[%s819 + $0x1e0] sm:$0xff]
    %v1563 = vld [vmem:[%s819 + $0x1e8] sm:$0xff]
    %v1564 = vld [vmem:[%s819 + $0x1f8] sm:$0xff]
    %v1565 = vld [vmem:[%s819 + $0x200] sm:$0xff]
    %v1566 = vld [vmem:[%s819 + $0x210] sm:$0xff]
    %v1567 = vld [vmem:[%s819 + $0x218] sm:$0xff]
    %v1568 = vld [vmem:[%s819 + $0x228] sm:$0xff]
    %v1569 = vld [vmem:[%s819 + $0x230] sm:$0xff]
    %v1570 = vld [vmem:[%s819 + $0x240] sm:$0xff]
    %v1571 = vld [vmem:[%s819 + $0x248] sm:$0xff]
    %v1572 = vld [vmem:[%s819 + $0x258] sm:$0xff]
    %v1573 = vld [vmem:[%s819 + $0x260] sm:$0xff]
    %v1574 = vld [vmem:[%s819 + $0x270] sm:$0xff]
    %v1575 = vld [vmem:[%s819 + $0x278] sm:$0xff]
    %v1576 = vld [vmem:[%s819 + $0x288] sm:$0xff]
    %v1577 = vld [vmem:[%s819 + $0x290] sm:$0xff]
    %v1578 = vld [vmem:[%s819 + $0x2a0] sm:$0xff]
    %v1579 = vld [vmem:[%s819 + $0x2a8] sm:$0xff]
    %v1580 = vld [vmem:[%s819 + $0x2b8] sm:$0xff]
    %v1581 = vld [vmem:[%s819 + $0x2c0] sm:$0xff]
    %v1582 = vld [vmem:[%s819 + $0x2d0] sm:$0xff]
    %v1583 = vld [vmem:[%s819 + $0x2d8] sm:$0xff]
    %v1584 = vld [vmem:[%s819 + $0x2e8] sm:$0xff]
    %v1585 = vld [vmem:[%s819 + $0x2f0] sm:$0xff]
    %v1586 = vld [vmem:[%s819 + $0x300] sm:$0xff]
    %v1587 = vld [vmem:[%s819 + $0x308] sm:$0xff]
    %v1588 = vld [vmem:[%s819 + $0x318] sm:$0xff]
    %v1589 = vld [vmem:[%s819 + $0x320] sm:$0xff]
    %v1590 = vpack.c.bf16 %v1527, %v1526
    %v1591 = vpack.c.bf16 %v1529, %v1528
    %v1592 = vpack.c.bf16 %v1531, %v1530
    %v1593 = vpack.c.bf16 %v1533, %v1532
    %v1594 = vpack.c.bf16 %v1535, %v1534
    %v1595 = vpack.c.bf16 %v1537, %v1536
    %v1596 = vpack.c.bf16 %v1539, %v1538
    %v1597 = vpack.c.bf16 %v1541, %v1540
    %v1598 = vpack.c.bf16 %v1543, %v1542
    %v1599 = vpack.c.bf16 %v1545, %v1544
    %v1600 = vpack.c.bf16 %v1547, %v1546
    %v1601 = vpack.c.bf16 %v1549, %v1548
    %v1602 = vpack.c.bf16 %v1551, %v1550
    %v1603 = vpack.c.bf16 %v1553, %v1552
    %v1604 = vpack.c.bf16 %v1555, %v1554
    %v1605 = vpack.c.bf16 %v1557, %v1556
    %v1606 = vpack.c.bf16 %v1559, %v1558
    %v1607 = vpack.c.bf16 %v1561, %v1560
    %v1608 = vpack.c.bf16 %v1563, %v1562
    %v1609 = vpack.c.bf16 %v1565, %v1564
    %v1610 = vpack.c.bf16 %v1567, %v1566
    %v1611 = vpack.c.bf16 %v1569, %v1568
    %v1612 = vpack.c.bf16 %v1571, %v1570
    %v1613 = vpack.c.bf16 %v1573, %v1572
    %v1614 = vpack.c.bf16 %v1575, %v1574
    %v1615 = vpack.c.bf16 %v1577, %v1576
    %v1616 = vpack.c.bf16 %v1579, %v1578
    %v1617 = vpack.c.bf16 %v1581, %v1580
    %v1618 = vpack.c.bf16 %v1583, %v1582
    %v1619 = vpack.c.bf16 %v1585, %v1584
    %v1620 = vpack.c.bf16 %v1587, %v1586
    %v1621 = vpack.c.bf16 %v1589, %v1588
    %1654 = vrot.lane.b32.xlu0 %v1590, 12
    %v1655 = vpop.permute.xlu0 %1654
    %1656 = vrot.lane.b32.xlu0 %v1591, 12
    %v1657 = vpop.permute.xlu0 %1656
    %1658 = vrot.lane.b32.xlu0 %v1592, 12
    %v1659 = vpop.permute.xlu0 %1658
    %1660 = vrot.lane.b32.xlu0 %v1593, 12
    %v1661 = vpop.permute.xlu0 %1660
    %1662 = vrot.lane.b32.xlu0 %v1594, 12
    %v1663 = vpop.permute.xlu0 %1662
    %1664 = vrot.lane.b32.xlu0 %v1595, 12
    %v1665 = vpop.permute.xlu0 %1664
    %1666 = vrot.lane.b32.xlu0 %v1596, 12
    %v1667 = vpop.permute.xlu0 %1666
    %1668 = vrot.lane.b32.xlu0 %v1597, 12
    %v1669 = vpop.permute.xlu0 %1668
    %1670 = vrot.lane.b32.xlu0 %v1598, 12
    %v1671 = vpop.permute.xlu0 %1670
    %1672 = vrot.lane.b32.xlu0 %v1599, 12
    %v1673 = vpop.permute.xlu0 %1672
    %1674 = vrot.lane.b32.xlu0 %v1600, 12
    %v1675 = vpop.permute.xlu0 %1674
    %1676 = vrot.lane.b32.xlu0 %v1601, 12
    %v1677 = vpop.permute.xlu0 %1676
    %1678 = vrot.lane.b32.xlu0 %v1602, 12
    %v1679 = vpop.permute.xlu0 %1678
    %1680 = vrot.lane.b32.xlu0 %v1603, 12
    %v1681 = vpop.permute.xlu0 %1680
    %1682 = vrot.lane.b32.xlu0 %v1604, 12
    %v1683 = vpop.permute.xlu0 %1682
    %1684 = vrot.lane.b32.xlu0 %v1605, 12
    %v1685 = vpop.permute.xlu0 %1684
    %1686 = vrot.lane.b32.xlu0 %v1606, 12
    %v1687 = vpop.permute.xlu0 %1686
    %1688 = vrot.lane.b32.xlu0 %v1607, 12
    %v1689 = vpop.permute.xlu0 %1688
    %1690 = vrot.lane.b32.xlu0 %v1608, 12
    %v1691 = vpop.permute.xlu0 %1690
    %1692 = vrot.lane.b32.xlu0 %v1609, 12
    %v1693 = vpop.permute.xlu0 %1692
    %1694 = vrot.lane.b32.xlu0 %v1610, 12
    %v1695 = vpop.permute.xlu0 %1694
    %1696 = vrot.lane.b32.xlu0 %v1611, 12
    %v1697 = vpop.permute.xlu0 %1696
    %1698 = vrot.lane.b32.xlu0 %v1612, 12
    %v1699 = vpop.permute.xlu0 %1698
    %1700 = vrot.lane.b32.xlu0 %v1613, 12
    %v1701 = vpop.permute.xlu0 %1700
    %1702 = vrot.lane.b32.xlu0 %v1614, 12
    %v1703 = vpop.permute.xlu0 %1702
    %1704 = vrot.lane.b32.xlu0 %v1615, 12
    %v1705 = vpop.permute.xlu0 %1704
    %1706 = vrot.lane.b32.xlu0 %v1616, 12
    %v1707 = vpop.permute.xlu0 %1706
    %1708 = vrot.lane.b32.xlu0 %v1617, 12
    %v1709 = vpop.permute.xlu0 %1708
    %1710 = vrot.lane.b32.xlu0 %v1618, 12
    %v1711 = vpop.permute.xlu0 %1710
    %1712 = vrot.lane.b32.xlu0 %v1619, 12
    %v1713 = vpop.permute.xlu0 %1712
    %1714 = vrot.lane.b32.xlu0 %v1620, 12
    %v1715 = vpop.permute.xlu0 %1714
    %1716 = vrot.lane.b32.xlu0 %v1621, 12
    %v1717 = vpop.permute.xlu0 %1716
    %vm1750 = vcmask 130144
    %1751 = vst.msk [vmem:[#allocation3] sm:$0xff] %vm1750, %v1655
    %1752 = vst.msk [vmem:[#allocation3 + $0x8] sm:$0xff] %vm1750, %v1657
    %1753 = vst.msk [vmem:[#allocation3 + $0x10] sm:$0xff] %vm1750, %v1659
    %1754 = vst.msk [vmem:[#allocation3 + $0x18] sm:$0xff] %vm1750, %v1661
    %1755 = vst.msk [vmem:[#allocation3 + $0x20] sm:$0xff] %vm1750, %v1663
    %1756 = vst.msk [vmem:[#allocation3 + $0x28] sm:$0xff] %vm1750, %v1665
    %1757 = vst.msk [vmem:[#allocation3 + $0x30] sm:$0xff] %vm1750, %v1667
    %1758 = vst.msk [vmem:[#allocation3 + $0x38] sm:$0xff] %vm1750, %v1669
    %1759 = vst.msk [vmem:[#allocation3 + $0x40] sm:$0xff] %vm1750, %v1671
    %1760 = vst.msk [vmem:[#allocation3 + $0x48] sm:$0xff] %vm1750, %v1673
    %1761 = vst.msk [vmem:[#allocation3 + $0x50] sm:$0xff] %vm1750, %v1675
    %1762 = vst.msk [vmem:[#allocation3 + $0x58] sm:$0xff] %vm1750, %v1677
    %1763 = vst.msk [vmem:[#allocation3 + $0x60] sm:$0xff] %vm1750, %v1679
    %1764 = vst.msk [vmem:[#allocation3 + $0x68] sm:$0xff] %vm1750, %v1681
    %1765 = vst.msk [vmem:[#allocation3 + $0x70] sm:$0xff] %vm1750, %v1683
    %1766 = vst.msk [vmem:[#allocation3 + $0x78] sm:$0xff] %vm1750, %v1685
    %1767 = vst.msk [vmem:[#allocation3 + $0x80] sm:$0xff] %vm1750, %v1687
    %1768 = vst.msk [vmem:[#allocation3 + $0x88] sm:$0xff] %vm1750, %v1689
    %1769 = vst.msk [vmem:[#allocation3 + $0x90] sm:$0xff] %vm1750, %v1691
    %1770 = vst.msk [vmem:[#allocation3 + $0x98] sm:$0xff] %vm1750, %v1693
    %1771 = vst.msk [vmem:[#allocation3 + $0xa0] sm:$0xff] %vm1750, %v1695
    %1772 = vst.msk [vmem:[#allocation3 + $0xa8] sm:$0xff] %vm1750, %v1697
    %1773 = vst.msk [vmem:[#allocation3 + $0xb0] sm:$0xff] %vm1750, %v1699
    %1774 = vst.msk [vmem:[#allocation3 + $0xb8] sm:$0xff] %vm1750, %v1701
    %1775 = vst.msk [vmem:[#allocation3 + $0xc0] sm:$0xff] %vm1750, %v1703
    %1776 = vst.msk [vmem:[#allocation3 + $0xc8] sm:$0xff] %vm1750, %v1705
    %1777 = vst.msk [vmem:[#allocation3 + $0xd0] sm:$0xff] %vm1750, %v1707
    %1778 = vst.msk [vmem:[#allocation3 + $0xd8] sm:$0xff] %vm1750, %v1709
    %1779 = vst.msk [vmem:[#allocation3 + $0xe0] sm:$0xff] %vm1750, %v1711
    %1780 = vst.msk [vmem:[#allocation3 + $0xe8] sm:$0xff] %vm1750, %v1713
    %1781 = vst.msk [vmem:[#allocation3 + $0xf0] sm:$0xff] %vm1750, %v1715
    %1782 = vst.msk [vmem:[#allocation3 + $0xf8] sm:$0xff] %vm1750, %v1717
    %v1783 = vld [vmem:[%s819 + $0x1] sm:$0xff]
    %v1784 = vld [vmem:[%s819 + $0x9] sm:$0xff]
    %v1785 = vld [vmem:[%s819 + $0x19] sm:$0xff]
    %v1786 = vld [vmem:[%s819 + $0x21] sm:$0xff]
    %v1787 = vld [vmem:[%s819 + $0x31] sm:$0xff]
    %v1788 = vld [vmem:[%s819 + $0x39] sm:$0xff]
    %v1789 = vld [vmem:[%s819 + $0x49] sm:$0xff]
    %v1790 = vld [vmem:[%s819 + $0x51] sm:$0xff]
    %v1791 = vld [vmem:[%s819 + $0x61] sm:$0xff]
    %v1792 = vld [vmem:[%s819 + $0x69] sm:$0xff]
    %v1793 = vld [vmem:[%s819 + $0x79] sm:$0xff]
    %v1794 = vld [vmem:[%s819 + $0x81] sm:$0xff]
    %v1795 = vld [vmem:[%s819 + $0x91] sm:$0xff]
    %v1796 = vld [vmem:[%s819 + $0x99] sm:$0xff]
    %v1797 = vld [vmem:[%s819 + $0xa9] sm:$0xff]
    %v1798 = vld [vmem:[%s819 + $0xb1] sm:$0xff]
    %v1799 = vld [vmem:[%s819 + $0xc1] sm:$0xff]
    %v1800 = vld [vmem:[%s819 + $0xc9] sm:$0xff]
    %v1801 = vld [vmem:[%s819 + $0xd9] sm:$0xff]
    %v1802 = vld [vmem:[%s819 + $0xe1] sm:$0xff]
    %v1803 = vld [vmem:[%s819 + $0xf1] sm:$0xff]
    %v1804 = vld [vmem:[%s819 + $0xf9] sm:$0xff]
    %v1805 = vld [vmem:[%s819 + $0x109] sm:$0xff]
    %v1806 = vld [vmem:[%s819 + $0x111] sm:$0xff]
    %v1807 = vld [vmem:[%s819 + $0x121] sm:$0xff]
    %v1808 = vld [vmem:[%s819 + $0x129] sm:$0xff]
    %v1809 = vld [vmem:[%s819 + $0x139] sm:$0xff]
    %v1810 = vld [vmem:[%s819 + $0x141] sm:$0xff]
    %v1811 = vld [vmem:[%s819 + $0x151] sm:$0xff]
    %v1812 = vld [vmem:[%s819 + $0x159] sm:$0xff]
    %v1813 = vld [vmem:[%s819 + $0x169] sm:$0xff]
    %v1814 = vld [vmem:[%s819 + $0x171] sm:$0xff]
    %v1815 = vld [vmem:[%s819 + $0x1b1] sm:$0xff]
    %v1816 = vld [vmem:[%s819 + $0x1b9] sm:$0xff]
    %v1817 = vld [vmem:[%s819 + $0x1c9] sm:$0xff]
    %v1818 = vld [vmem:[%s819 + $0x1d1] sm:$0xff]
    %v1819 = vld [vmem:[%s819 + $0x1e1] sm:$0xff]
    %v1820 = vld [vmem:[%s819 + $0x1e9] sm:$0xff]
    %v1821 = vld [vmem:[%s819 + $0x1f9] sm:$0xff]
    %v1822 = vld [vmem:[%s819 + $0x201] sm:$0xff]
    %v1823 = vld [vmem:[%s819 + $0x211] sm:$0xff]
    %v1824 = vld [vmem:[%s819 + $0x219] sm:$0xff]
    %v1825 = vld [vmem:[%s819 + $0x229] sm:$0xff]
    %v1826 = vld [vmem:[%s819 + $0x231] sm:$0xff]
    %v1827 = vld [vmem:[%s819 + $0x241] sm:$0xff]
    %v1828 = vld [vmem:[%s819 + $0x249] sm:$0xff]
    %v1829 = vld [vmem:[%s819 + $0x259] sm:$0xff]
    %v1830 = vld [vmem:[%s819 + $0x261] sm:$0xff]
    %v1831 = vld [vmem:[%s819 + $0x271] sm:$0xff]
    %v1832 = vld [vmem:[%s819 + $0x279] sm:$0xff]
    %v1833 = vld [vmem:[%s819 + $0x289] sm:$0xff]
    %v1834 = vld [vmem:[%s819 + $0x291] sm:$0xff]
    %v1835 = vld [vmem:[%s819 + $0x2a1] sm:$0xff]
    %v1836 = vld [vmem:[%s819 + $0x2a9] sm:$0xff]
    %v1837 = vld [vmem:[%s819 + $0x2b9] sm:$0xff]
    %v1838 = vld [vmem:[%s819 + $0x2c1] sm:$0xff]
    %v1839 = vld [vmem:[%s819 + $0x2d1] sm:$0xff]
    %v1840 = vld [vmem:[%s819 + $0x2d9] sm:$0xff]
    %v1841 = vld [vmem:[%s819 + $0x2e9] sm:$0xff]
    %v1842 = vld [vmem:[%s819 + $0x2f1] sm:$0xff]
    %v1843 = vld [vmem:[%s819 + $0x301] sm:$0xff]
    %v1844 = vld [vmem:[%s819 + $0x309] sm:$0xff]
    %v1845 = vld [vmem:[%s819 + $0x319] sm:$0xff]
    %v1846 = vld [vmem:[%s819 + $0x321] sm:$0xff]
    %v1847 = vpack.c.bf16 %v1784, %v1783
    %v1848 = vpack.c.bf16 %v1786, %v1785
    %v1849 = vpack.c.bf16 %v1788, %v1787
    %v1850 = vpack.c.bf16 %v1790, %v1789
    %v1851 = vpack.c.bf16 %v1792, %v1791
    %v1852 = vpack.c.bf16 %v1794, %v1793
    %v1853 = vpack.c.bf16 %v1796, %v1795
    %v1854 = vpack.c.bf16 %v1798, %v1797
    %v1855 = vpack.c.bf16 %v1800, %v1799
    %v1856 = vpack.c.bf16 %v1802, %v1801
    %v1857 = vpack.c.bf16 %v1804, %v1803
    %v1858 = vpack.c.bf16 %v1806, %v1805
    %v1859 = vpack.c.bf16 %v1808, %v1807
    %v1860 = vpack.c.bf16 %v1810, %v1809
    %v1861 = vpack.c.bf16 %v1812, %v1811
    %v1862 = vpack.c.bf16 %v1814, %v1813
    %v1863 = vpack.c.bf16 %v1816, %v1815
    %v1864 = vpack.c.bf16 %v1818, %v1817
    %v1865 = vpack.c.bf16 %v1820, %v1819
    %v1866 = vpack.c.bf16 %v1822, %v1821
    %v1867 = vpack.c.bf16 %v1824, %v1823
    %v1868 = vpack.c.bf16 %v1826, %v1825
    %v1869 = vpack.c.bf16 %v1828, %v1827
    %v1870 = vpack.c.bf16 %v1830, %v1829
    %v1871 = vpack.c.bf16 %v1832, %v1831
    %v1872 = vpack.c.bf16 %v1834, %v1833
    %v1873 = vpack.c.bf16 %v1836, %v1835
    %v1874 = vpack.c.bf16 %v1838, %v1837
    %v1875 = vpack.c.bf16 %v1840, %v1839
    %v1876 = vpack.c.bf16 %v1842, %v1841
    %v1877 = vpack.c.bf16 %v1844, %v1843
    %v1878 = vpack.c.bf16 %v1846, %v1845
    %1911 = vrot.lane.b32.xlu0 %v1847, 16
    %v1912 = vpop.permute.xlu0 %1911
    %1913 = vrot.lane.b32.xlu0 %v1848, 16
    %v1914 = vpop.permute.xlu0 %1913
    %1915 = vrot.lane.b32.xlu0 %v1849, 16
    %v1916 = vpop.permute.xlu0 %1915
    %1917 = vrot.lane.b32.xlu0 %v1850, 16
    %v1918 = vpop.permute.xlu0 %1917
    %1919 = vrot.lane.b32.xlu0 %v1851, 16
    %v1920 = vpop.permute.xlu0 %1919
    %1921 = vrot.lane.b32.xlu0 %v1852, 16
    %v1922 = vpop.permute.xlu0 %1921
    %1923 = vrot.lane.b32.xlu0 %v1853, 16
    %v1924 = vpop.permute.xlu0 %1923
    %1925 = vrot.lane.b32.xlu0 %v1854, 16
    %v1926 = vpop.permute.xlu0 %1925
    %1927 = vrot.lane.b32.xlu0 %v1855, 16
    %v1928 = vpop.permute.xlu0 %1927
    %1929 = vrot.lane.b32.xlu0 %v1856, 16
    %v1930 = vpop.permute.xlu0 %1929
    %1931 = vrot.lane.b32.xlu0 %v1857, 16
    %v1932 = vpop.permute.xlu0 %1931
    %1933 = vrot.lane.b32.xlu0 %v1858, 16
    %v1934 = vpop.permute.xlu0 %1933
    %1935 = vrot.lane.b32.xlu0 %v1859, 16
    %v1936 = vpop.permute.xlu0 %1935
    %1937 = vrot.lane.b32.xlu0 %v1860, 16
    %v1938 = vpop.permute.xlu0 %1937
    %1939 = vrot.lane.b32.xlu0 %v1861, 16
    %v1940 = vpop.permute.xlu0 %1939
    %1941 = vrot.lane.b32.xlu0 %v1862, 16
    %v1942 = vpop.permute.xlu0 %1941
    %1943 = vrot.lane.b32.xlu0 %v1863, 16
    %v1944 = vpop.permute.xlu0 %1943
    %1945 = vrot.lane.b32.xlu0 %v1864, 16
    %v1946 = vpop.permute.xlu0 %1945
    %1947 = vrot.lane.b32.xlu0 %v1865, 16
    %v1948 = vpop.permute.xlu0 %1947
    %1949 = vrot.lane.b32.xlu0 %v1866, 16
    %v1950 = vpop.permute.xlu0 %1949
    %1951 = vrot.lane.b32.xlu0 %v1867, 16
    %v1952 = vpop.permute.xlu0 %1951
    %1953 = vrot.lane.b32.xlu0 %v1868, 16
    %v1954 = vpop.permute.xlu0 %1953
    %1955 = vrot.lane.b32.xlu0 %v1869, 16
    %v1956 = vpop.permute.xlu0 %1955
    %1957 = vrot.lane.b32.xlu0 %v1870, 16
    %v1958 = vpop.permute.xlu0 %1957
    %1959 = vrot.lane.b32.xlu0 %v1871, 16
    %v1960 = vpop.permute.xlu0 %1959
    %1961 = vrot.lane.b32.xlu0 %v1872, 16
    %v1962 = vpop.permute.xlu0 %1961
    %1963 = vrot.lane.b32.xlu0 %v1873, 16
    %v1964 = vpop.permute.xlu0 %1963
    %1965 = vrot.lane.b32.xlu0 %v1874, 16
    %v1966 = vpop.permute.xlu0 %1965
    %1967 = vrot.lane.b32.xlu0 %v1875, 16
    %v1968 = vpop.permute.xlu0 %1967
    %1969 = vrot.lane.b32.xlu0 %v1876, 16
    %v1970 = vpop.permute.xlu0 %1969
    %1971 = vrot.lane.b32.xlu0 %v1877, 16
    %v1972 = vpop.permute.xlu0 %1971
    %1973 = vrot.lane.b32.xlu0 %v1878, 16
    %v1974 = vpop.permute.xlu0 %1973
    %vm2007 = vcmask 162944
    %2008 = vst.msk [vmem:[#allocation3] sm:$0xff] %vm2007, %v1912
    %2009 = vst.msk [vmem:[#allocation3 + $0x8] sm:$0xff] %vm2007, %v1914
    %2010 = vst.msk [vmem:[#allocation3 + $0x10] sm:$0xff] %vm2007, %v1916
    %2011 = vst.msk [vmem:[#allocation3 + $0x18] sm:$0xff] %vm2007, %v1918
    %2012 = vst.msk [vmem:[#allocation3 + $0x20] sm:$0xff] %vm2007, %v1920
    %2013 = vst.msk [vmem:[#allocation3 + $0x28] sm:$0xff] %vm2007, %v1922
    %2014 = vst.msk [vmem:[#allocation3 + $0x30] sm:$0xff] %vm2007, %v1924
    %2015 = vst.msk [vmem:[#allocation3 + $0x38] sm:$0xff] %vm2007, %v1926
    %2016 = vst.msk [vmem:[#allocation3 + $0x40] sm:$0xff] %vm2007, %v1928
    %2017 = vst.msk [vmem:[#allocation3 + $0x48] sm:$0xff] %vm2007, %v1930
    %2018 = vst.msk [vmem:[#allocation3 + $0x50] sm:$0xff] %vm2007, %v1932
    %2019 = vst.msk [vmem:[#allocation3 + $0x58] sm:$0xff] %vm2007, %v1934
    %2020 = vst.msk [vmem:[#allocation3 + $0x60] sm:$0xff] %vm2007, %v1936
    %2021 = vst.msk [vmem:[#allocation3 + $0x68] sm:$0xff] %vm2007, %v1938
    %2022 = vst.msk [vmem:[#allocation3 + $0x70] sm:$0xff] %vm2007, %v1940
    %2023 = vst.msk [vmem:[#allocation3 + $0x78] sm:$0xff] %vm2007, %v1942
    %2024 = vst.msk [vmem:[#allocation3 + $0x80] sm:$0xff] %vm2007, %v1944
    %2025 = vst.msk [vmem:[#allocation3 + $0x88] sm:$0xff] %vm2007, %v1946
    %2026 = vst.msk [vmem:[#allocation3 + $0x90] sm:$0xff] %vm2007, %v1948
    %2027 = vst.msk [vmem:[#allocation3 + $0x98] sm:$0xff] %vm2007, %v1950
    %2028 = vst.msk [vmem:[#allocation3 + $0xa0] sm:$0xff] %vm2007, %v1952
    %2029 = vst.msk [vmem:[#allocation3 + $0xa8] sm:$0xff] %vm2007, %v1954
    %2030 = vst.msk [vmem:[#allocation3 + $0xb0] sm:$0xff] %vm2007, %v1956
    %2031 = vst.msk [vmem:[#allocation3 + $0xb8] sm:$0xff] %vm2007, %v1958
    %2032 = vst.msk [vmem:[#allocation3 + $0xc0] sm:$0xff] %vm2007, %v1960
    %2033 = vst.msk [vmem:[#allocation3 + $0xc8] sm:$0xff] %vm2007, %v1962
    %2034 = vst.msk [vmem:[#allocation3 + $0xd0] sm:$0xff] %vm2007, %v1964
    %2035 = vst.msk [vmem:[#allocation3 + $0xd8] sm:$0xff] %vm2007, %v1966
    %2036 = vst.msk [vmem:[#allocation3 + $0xe0] sm:$0xff] %vm2007, %v1968
    %2037 = vst.msk [vmem:[#allocation3 + $0xe8] sm:$0xff] %vm2007, %v1970
    %2038 = vst.msk [vmem:[#allocation3 + $0xf0] sm:$0xff] %vm2007, %v1972
    %2039 = vst.msk [vmem:[#allocation3 + $0xf8] sm:$0xff] %vm2007, %v1974
    %v2040 = vld [vmem:[%s819 + $0x2] sm:$0xff]
    %v2041 = vld [vmem:[%s819 + $0xa] sm:$0xff]
    %v2042 = vld [vmem:[%s819 + $0x1a] sm:$0xff]
    %v2043 = vld [vmem:[%s819 + $0x22] sm:$0xff]
    %v2044 = vld [vmem:[%s819 + $0x32] sm:$0xff]
    %v2045 = vld [vmem:[%s819 + $0x3a] sm:$0xff]
    %v2046 = vld [vmem:[%s819 + $0x4a] sm:$0xff]
    %v2047 = vld [vmem:[%s819 + $0x52] sm:$0xff]
    %v2048 = vld [vmem:[%s819 + $0x62] sm:$0xff]
    %v2049 = vld [vmem:[%s819 + $0x6a] sm:$0xff]
    %v2050 = vld [vmem:[%s819 + $0x7a] sm:$0xff]
    %v2051 = vld [vmem:[%s819 + $0x82] sm:$0xff]
    %v2052 = vld [vmem:[%s819 + $0x92] sm:$0xff]
    %v2053 = vld [vmem:[%s819 + $0x9a] sm:$0xff]
    %v2054 = vld [vmem:[%s819 + $0xaa] sm:$0xff]
    %v2055 = vld [vmem:[%s819 + $0xb2] sm:$0xff]
    %v2056 = vld [vmem:[%s819 + $0xc2] sm:$0xff]
    %v2057 = vld [vmem:[%s819 + $0xca] sm:$0xff]
    %v2058 = vld [vmem:[%s819 + $0xda] sm:$0xff]
    %v2059 = vld [vmem:[%s819 + $0xe2] sm:$0xff]
    %v2060 = vld [vmem:[%s819 + $0xf2] sm:$0xff]
    %v2061 = vld [vmem:[%s819 + $0xfa] sm:$0xff]
    %v2062 = vld [vmem:[%s819 + $0x10a] sm:$0xff]
    %v2063 = vld [vmem:[%s819 + $0x112] sm:$0xff]
    %v2064 = vld [vmem:[%s819 + $0x122] sm:$0xff]
    %v2065 = vld [vmem:[%s819 + $0x12a] sm:$0xff]
    %v2066 = vld [vmem:[%s819 + $0x13a] sm:$0xff]
    %v2067 = vld [vmem:[%s819 + $0x142] sm:$0xff]
    %v2068 = vld [vmem:[%s819 + $0x152] sm:$0xff]
    %v2069 = vld [vmem:[%s819 + $0x15a] sm:$0xff]
    %v2070 = vld [vmem:[%s819 + $0x16a] sm:$0xff]
    %v2071 = vld [vmem:[%s819 + $0x172] sm:$0xff]
    %v2072 = vld [vmem:[%s819 + $0x1b2] sm:$0xff]
    %v2073 = vld [vmem:[%s819 + $0x1ba] sm:$0xff]
    %v2074 = vld [vmem:[%s819 + $0x1ca] sm:$0xff]
    %v2075 = vld [vmem:[%s819 + $0x1d2] sm:$0xff]
    %v2076 = vld [vmem:[%s819 + $0x1e2] sm:$0xff]
    %v2077 = vld [vmem:[%s819 + $0x1ea] sm:$0xff]
    %v2078 = vld [vmem:[%s819 + $0x1fa] sm:$0xff]
    %v2079 = vld [vmem:[%s819 + $0x202] sm:$0xff]
    %v2080 = vld [vmem:[%s819 + $0x212] sm:$0xff]
    %v2081 = vld [vmem:[%s819 + $0x21a] sm:$0xff]
    %v2082 = vld [vmem:[%s819 + $0x22a] sm:$0xff]
    %v2083 = vld [vmem:[%s819 + $0x232] sm:$0xff]
    %v2084 = vld [vmem:[%s819 + $0x242] sm:$0xff]
    %v2085 = vld [vmem:[%s819 + $0x24a] sm:$0xff]
    %v2086 = vld [vmem:[%s819 + $0x25a] sm:$0xff]
    %v2087 = vld [vmem:[%s819 + $0x262] sm:$0xff]
    %v2088 = vld [vmem:[%s819 + $0x272] sm:$0xff]
    %v2089 = vld [vmem:[%s819 + $0x27a] sm:$0xff]
    %v2090 = vld [vmem:[%s819 + $0x28a] sm:$0xff]
    %v2091 = vld [vmem:[%s819 + $0x292] sm:$0xff]
    %v2092 = vld [vmem:[%s819 + $0x2a2] sm:$0xff]
    %v2093 = vld [vmem:[%s819 + $0x2aa] sm:$0xff]
    %v2094 = vld [vmem:[%s819 + $0x2ba] sm:$0xff]
    %v2095 = vld [vmem:[%s819 + $0x2c2] sm:$0xff]
    %v2096 = vld [vmem:[%s819 + $0x2d2] sm:$0xff]
    %v2097 = vld [vmem:[%s819 + $0x2da] sm:$0xff]
    %v2098 = vld [vmem:[%s819 + $0x2ea] sm:$0xff]
    %v2099 = vld [vmem:[%s819 + $0x2f2] sm:$0xff]
    %v2100 = vld [vmem:[%s819 + $0x302] sm:$0xff]
    %v2101 = vld [vmem:[%s819 + $0x30a] sm:$0xff]
    %v2102 = vld [vmem:[%s819 + $0x31a] sm:$0xff]
    %v2103 = vld [vmem:[%s819 + $0x322] sm:$0xff]
    %v2104 = vpack.c.bf16 %v2041, %v2040
    %v2105 = vpack.c.bf16 %v2043, %v2042
    %v2106 = vpack.c.bf16 %v2045, %v2044
    %v2107 = vpack.c.bf16 %v2047, %v2046
    %v2108 = vpack.c.bf16 %v2049, %v2048
    %v2109 = vpack.c.bf16 %v2051, %v2050
    %v2110 = vpack.c.bf16 %v2053, %v2052
    %v2111 = vpack.c.bf16 %v2055, %v2054
    %v2112 = vpack.c.bf16 %v2057, %v2056
    %v2113 = vpack.c.bf16 %v2059, %v2058
    %v2114 = vpack.c.bf16 %v2061, %v2060
    %v2115 = vpack.c.bf16 %v2063, %v2062
    %v2116 = vpack.c.bf16 %v2065, %v2064
    %v2117 = vpack.c.bf16 %v2067, %v2066
    %v2118 = vpack.c.bf16 %v2069, %v2068
    %v2119 = vpack.c.bf16 %v2071, %v2070
    %v2120 = vpack.c.bf16 %v2073, %v2072
    %v2121 = vpack.c.bf16 %v2075, %v2074
    %v2122 = vpack.c.bf16 %v2077, %v2076
    %v2123 = vpack.c.bf16 %v2079, %v2078
    %v2124 = vpack.c.bf16 %v2081, %v2080
    %v2125 = vpack.c.bf16 %v2083, %v2082
    %v2126 = vpack.c.bf16 %v2085, %v2084
    %v2127 = vpack.c.bf16 %v2087, %v2086
    %v2128 = vpack.c.bf16 %v2089, %v2088
    %v2129 = vpack.c.bf16 %v2091, %v2090
    %v2130 = vpack.c.bf16 %v2093, %v2092
    %v2131 = vpack.c.bf16 %v2095, %v2094
    %v2132 = vpack.c.bf16 %v2097, %v2096
    %v2133 = vpack.c.bf16 %v2099, %v2098
    %v2134 = vpack.c.bf16 %v2101, %v2100
    %v2135 = vpack.c.bf16 %v2103, %v2102
    %2168 = vrot.lane.b32.xlu0 %v2104, 20
    %v2169 = vpop.permute.xlu0 %2168
    %2170 = vrot.lane.b32.xlu0 %v2105, 20
    %v2171 = vpop.permute.xlu0 %2170
    %2172 = vrot.lane.b32.xlu0 %v2106, 20
    %v2173 = vpop.permute.xlu0 %2172
    %2174 = vrot.lane.b32.xlu0 %v2107, 20
    %v2175 = vpop.permute.xlu0 %2174
    %2176 = vrot.lane.b32.xlu0 %v2108, 20
    %v2177 = vpop.permute.xlu0 %2176
    %2178 = vrot.lane.b32.xlu0 %v2109, 20
    %v2179 = vpop.permute.xlu0 %2178
    %2180 = vrot.lane.b32.xlu0 %v2110, 20
    %v2181 = vpop.permute.xlu0 %2180
    %2182 = vrot.lane.b32.xlu0 %v2111, 20
    %v2183 = vpop.permute.xlu0 %2182
    %2184 = vrot.lane.b32.xlu0 %v2112, 20
    %v2185 = vpop.permute.xlu0 %2184
    %2186 = vrot.lane.b32.xlu0 %v2113, 20
    %v2187 = vpop.permute.xlu0 %2186
    %2188 = vrot.lane.b32.xlu0 %v2114, 20
    %v2189 = vpop.permute.xlu0 %2188
    %2190 = vrot.lane.b32.xlu0 %v2115, 20
    %v2191 = vpop.permute.xlu0 %2190
    %2192 = vrot.lane.b32.xlu0 %v2116, 20
    %v2193 = vpop.permute.xlu0 %2192
    %2194 = vrot.lane.b32.xlu0 %v2117, 20
    %v2195 = vpop.permute.xlu0 %2194
    %2196 = vrot.lane.b32.xlu0 %v2118, 20
    %v2197 = vpop.permute.xlu0 %2196
    %2198 = vrot.lane.b32.xlu0 %v2119, 20
    %v2199 = vpop.permute.xlu0 %2198
    %2200 = vrot.lane.b32.xlu0 %v2120, 20
    %v2201 = vpop.permute.xlu0 %2200
    %2202 = vrot.lane.b32.xlu0 %v2121, 20
    %v2203 = vpop.permute.xlu0 %2202
    %2204 = vrot.lane.b32.xlu0 %v2122, 20
    %v2205 = vpop.permute.xlu0 %2204
    %2206 = vrot.lane.b32.xlu0 %v2123, 20
    %v2207 = vpop.permute.xlu0 %2206
    %2208 = vrot.lane.b32.xlu0 %v2124, 20
    %v2209 = vpop.permute.xlu0 %2208
    %2210 = vrot.lane.b32.xlu0 %v2125, 20
    %v2211 = vpop.permute.xlu0 %2210
    %2212 = vrot.lane.b32.xlu0 %v2126, 20
    %v2213 = vpop.permute.xlu0 %2212
    %2214 = vrot.lane.b32.xlu0 %v2127, 20
    %v2215 = vpop.permute.xlu0 %2214
    %2216 = vrot.lane.b32.xlu0 %v2128, 20
    %v2217 = vpop.permute.xlu0 %2216
    %2218 = vrot.lane.b32.xlu0 %v2129, 20
    %v2219 = vpop.permute.xlu0 %2218
    %2220 = vrot.lane.b32.xlu0 %v2130, 20
    %v2221 = vpop.permute.xlu0 %2220
    %2222 = vrot.lane.b32.xlu0 %v2131, 20
    %v2223 = vpop.permute.xlu0 %2222
    %2224 = vrot.lane.b32.xlu0 %v2132, 20
    %v2225 = vpop.permute.xlu0 %2224
    %2226 = vrot.lane.b32.xlu0 %v2133, 20
    %v2227 = vpop.permute.xlu0 %2226
    %2228 = vrot.lane.b32.xlu0 %v2134, 20
    %v2229 = vpop.permute.xlu0 %2228
    %2230 = vrot.lane.b32.xlu0 %v2135, 20
    %v2231 = vpop.permute.xlu0 %2230
    %vm2264 = vcmask 195744
    %2265 = vst.msk [vmem:[#allocation3] sm:$0xff] %vm2264, %v2169
    %2266 = vst.msk [vmem:[#allocation3 + $0x8] sm:$0xff] %vm2264, %v2171
    %2267 = vst.msk [vmem:[#allocation3 + $0x10] sm:$0xff] %vm2264, %v2173
    %2268 = vst.msk [vmem:[#allocation3 + $0x18] sm:$0xff] %vm2264, %v2175
    %2269 = vst.msk [vmem:[#allocation3 + $0x20] sm:$0xff] %vm2264, %v2177
    %2270 = vst.msk [vmem:[#allocation3 + $0x28] sm:$0xff] %vm2264, %v2179
    %2271 = vst.msk [vmem:[#allocation3 + $0x30] sm:$0xff] %vm2264, %v2181
    %2272 = vst.msk [vmem:[#allocation3 + $0x38] sm:$0xff] %vm2264, %v2183
    %2273 = vst.msk [vmem:[#allocation3 + $0x40] sm:$0xff] %vm2264, %v2185
    %2274 = vst.msk [vmem:[#allocation3 + $0x48] sm:$0xff] %vm2264, %v2187
    %2275 = vst.msk [vmem:[#allocation3 + $0x50] sm:$0xff] %vm2264, %v2189
    %2276 = vst.msk [vmem:[#allocation3 + $0x58] sm:$0xff] %vm2264, %v2191
    %2277 = vst.msk [vmem:[#allocation3 + $0x60] sm:$0xff] %vm2264, %v2193
    %2278 = vst.msk [vmem:[#allocation3 + $0x68] sm:$0xff] %vm2264, %v2195
    %2279 = vst.msk [vmem:[#allocation3 + $0x70] sm:$0xff] %vm2264, %v2197
    %2280 = vst.msk [vmem:[#allocation3 + $0x78] sm:$0xff] %vm2264, %v2199
    %2281 = vst.msk [vmem:[#allocation3 + $0x80] sm:$0xff] %vm2264, %v2201
    %2282 = vst.msk [vmem:[#allocation3 + $0x88] sm:$0xff] %vm2264, %v2203
    %2283 = vst.msk [vmem:[#allocation3 + $0x90] sm:$0xff] %vm2264, %v2205
    %2284 = vst.msk [vmem:[#allocation3 + $0x98] sm:$0xff] %vm2264, %v2207
    %2285 = vst.msk [vmem:[#allocation3 + $0xa0] sm:$0xff] %vm2264, %v2209
    %2286 = vst.msk [vmem:[#allocation3 + $0xa8] sm:$0xff] %vm2264, %v2211
    %2287 = vst.msk [vmem:[#allocation3 + $0xb0] sm:$0xff] %vm2264, %v2213
    %2288 = vst.msk [vmem:[#allocation3 + $0xb8] sm:$0xff] %vm2264, %v2215
    %2289 = vst.msk [vmem:[#allocation3 + $0xc0] sm:$0xff] %vm2264, %v2217
    %2290 = vst.msk [vmem:[#allocation3 + $0xc8] sm:$0xff] %vm2264, %v2219
    %2291 = vst.msk [vmem:[#allocation3 + $0xd0] sm:$0xff] %vm2264, %v2221
    %2292 = vst.msk [vmem:[#allocation3 + $0xd8] sm:$0xff] %vm2264, %v2223
    %2293 = vst.msk [vmem:[#allocation3 + $0xe0] sm:$0xff] %vm2264, %v2225
    %2294 = vst.msk [vmem:[#allocation3 + $0xe8] sm:$0xff] %vm2264, %v2227
    %2295 = vst.msk [vmem:[#allocation3 + $0xf0] sm:$0xff] %vm2264, %v2229
    %2296 = vst.msk [vmem:[#allocation3 + $0xf8] sm:$0xff] %vm2264, %v2231
    %s2297 = scalar_lea.vmem [#allocation2], 48
    %v2298 = vld [vmem:[%s2297] sm:$0xff]
    %v2299 = vld [vmem:[%s2297 + $0x8] sm:$0xff]
    %v2300 = vld [vmem:[%s2297 + $0x18] sm:$0xff]
    %v2301 = vld [vmem:[%s2297 + $0x20] sm:$0xff]
    %v2302 = vld [vmem:[%s2297 + $0x30] sm:$0xff]
    %v2303 = vld [vmem:[%s2297 + $0x38] sm:$0xff]
    %v2304 = vld [vmem:[%s2297 + $0x48] sm:$0xff]
    %v2305 = vld [vmem:[%s2297 + $0x50] sm:$0xff]
    %v2306 = vld [vmem:[%s2297 + $0x60] sm:$0xff]
    %v2307 = vld [vmem:[%s2297 + $0x68] sm:$0xff]
    %v2308 = vld [vmem:[%s2297 + $0x78] sm:$0xff]
    %v2309 = vld [vmem:[%s2297 + $0x80] sm:$0xff]
    %v2310 = vld [vmem:[%s2297 + $0x90] sm:$0xff]
    %v2311 = vld [vmem:[%s2297 + $0x98] sm:$0xff]
    %v2312 = vld [vmem:[%s2297 + $0xa8] sm:$0xff]
    %v2313 = vld [vmem:[%s2297 + $0xb0] sm:$0xff]
    %v2314 = vld [vmem:[%s2297 + $0xc0] sm:$0xff]
    %v2315 = vld [vmem:[%s2297 + $0xc8] sm:$0xff]
    %v2316 = vld [vmem:[%s2297 + $0xd8] sm:$0xff]
    %v2317 = vld [vmem:[%s2297 + $0xe0] sm:$0xff]
    %v2318 = vld [vmem:[%s2297 + $0xf0] sm:$0xff]
    %v2319 = vld [vmem:[%s2297 + $0xf8] sm:$0xff]
    %v2320 = vld [vmem:[%s2297 + $0x108] sm:$0xff]
    %v2321 = vld [vmem:[%s2297 + $0x110] sm:$0xff]
    %v2322 = vld [vmem:[%s2297 + $0x120] sm:$0xff]
    %v2323 = vld [vmem:[%s2297 + $0x128] sm:$0xff]
    %v2324 = vld [vmem:[%s2297 + $0x138] sm:$0xff]
    %v2325 = vld [vmem:[%s2297 + $0x140] sm:$0xff]
    %v2326 = vld [vmem:[%s2297 + $0x150] sm:$0xff]
    %v2327 = vld [vmem:[%s2297 + $0x158] sm:$0xff]
    %v2328 = vld [vmem:[%s2297 + $0x168] sm:$0xff]
    %v2329 = vld [vmem:[%s2297 + $0x170] sm:$0xff]
    %v2330 = vld [vmem:[%s2297 + $0x1b0] sm:$0xff]
    %v2331 = vld [vmem:[%s2297 + $0x1b8] sm:$0xff]
    %v2332 = vld [vmem:[%s2297 + $0x1c8] sm:$0xff]
    %v2333 = vld [vmem:[%s2297 + $0x1d0] sm:$0xff]
    %v2334 = vld [vmem:[%s2297 + $0x1e0] sm:$0xff]
    %v2335 = vld [vmem:[%s2297 + $0x1e8] sm:$0xff]
    %v2336 = vld [vmem:[%s2297 + $0x1f8] sm:$0xff]
    %v2337 = vld [vmem:[%s2297 + $0x200] sm:$0xff]
    %v2338 = vld [vmem:[%s2297 + $0x210] sm:$0xff]
    %v2339 = vld [vmem:[%s2297 + $0x218] sm:$0xff]
    %v2340 = vld [vmem:[%s2297 + $0x228] sm:$0xff]
    %v2341 = vld [vmem:[%s2297 + $0x230] sm:$0xff]
    %v2342 = vld [vmem:[%s2297 + $0x240] sm:$0xff]
    %v2343 = vld [vmem:[%s2297 + $0x248] sm:$0xff]
    %v2344 = vld [vmem:[%s2297 + $0x258] sm:$0xff]
    %v2345 = vld [vmem:[%s2297 + $0x260] sm:$0xff]
    %v2346 = vld [vmem:[%s2297 + $0x270] sm:$0xff]
    %v2347 = vld [vmem:[%s2297 + $0x278] sm:$0xff]
    %v2348 = vld [vmem:[%s2297 + $0x288] sm:$0xff]
    %v2349 = vld [vmem:[%s2297 + $0x290] sm:$0xff]
    %v2350 = vld [vmem:[%s2297 + $0x2a0] sm:$0xff]
    %v2351 = vld [vmem:[%s2297 + $0x2a8] sm:$0xff]
    %v2352 = vld [vmem:[%s2297 + $0x2b8] sm:$0xff]
    %v2353 = vld [vmem:[%s2297 + $0x2c0] sm:$0xff]
    %v2354 = vld [vmem:[%s2297 + $0x2d0] sm:$0xff]
    %v2355 = vld [vmem:[%s2297 + $0x2d8] sm:$0xff]
    %v2356 = vld [vmem:[%s2297 + $0x2e8] sm:$0xff]
    %v2357 = vld [vmem:[%s2297 + $0x2f0] sm:$0xff]
    %v2358 = vld [vmem:[%s2297 + $0x300] sm:$0xff]
    %v2359 = vld [vmem:[%s2297 + $0x308] sm:$0xff]
    %v2360 = vld [vmem:[%s2297 + $0x318] sm:$0xff]
    %v2361 = vld [vmem:[%s2297 + $0x320] sm:$0xff]
    %v2362 = vpack.c.bf16 %v2299, %v2298
    %v2363 = vpack.c.bf16 %v2301, %v2300
    %v2364 = vpack.c.bf16 %v2303, %v2302
    %v2365 = vpack.c.bf16 %v2305, %v2304
    %v2366 = vpack.c.bf16 %v2307, %v2306
    %v2367 = vpack.c.bf16 %v2309, %v2308
    %v2368 = vpack.c.bf16 %v2311, %v2310
    %v2369 = vpack.c.bf16 %v2313, %v2312
    %v2370 = vpack.c.bf16 %v2315, %v2314
    %v2371 = vpack.c.bf16 %v2317, %v2316
    %v2372 = vpack.c.bf16 %v2319, %v2318
    %v2373 = vpack.c.bf16 %v2321, %v2320
    %v2374 = vpack.c.bf16 %v2323, %v2322
    %v2375 = vpack.c.bf16 %v2325, %v2324
    %v2376 = vpack.c.bf16 %v2327, %v2326
    %v2377 = vpack.c.bf16 %v2329, %v2328
    %v2378 = vpack.c.bf16 %v2331, %v2330
    %v2379 = vpack.c.bf16 %v2333, %v2332
    %v2380 = vpack.c.bf16 %v2335, %v2334
    %v2381 = vpack.c.bf16 %v2337, %v2336
    %v2382 = vpack.c.bf16 %v2339, %v2338
    %v2383 = vpack.c.bf16 %v2341, %v2340
    %v2384 = vpack.c.bf16 %v2343, %v2342
    %v2385 = vpack.c.bf16 %v2345, %v2344
    %v2386 = vpack.c.bf16 %v2347, %v2346
    %v2387 = vpack.c.bf16 %v2349, %v2348
    %v2388 = vpack.c.bf16 %v2351, %v2350
    %v2389 = vpack.c.bf16 %v2353, %v2352
    %v2390 = vpack.c.bf16 %v2355, %v2354
    %v2391 = vpack.c.bf16 %v2357, %v2356
    %v2392 = vpack.c.bf16 %v2359, %v2358
    %v2393 = vpack.c.bf16 %v2361, %v2360
    %2426 = vrot.lane.b32.xlu0 %v2362, 24
    %v2427 = vpop.permute.xlu0 %2426
    %2428 = vrot.lane.b32.xlu0 %v2363, 24
    %v2429 = vpop.permute.xlu0 %2428
    %2430 = vrot.lane.b32.xlu0 %v2364, 24
    %v2431 = vpop.permute.xlu0 %2430
    %2432 = vrot.lane.b32.xlu0 %v2365, 24
    %v2433 = vpop.permute.xlu0 %2432
    %2434 = vrot.lane.b32.xlu0 %v2366, 24
    %v2435 = vpop.permute.xlu0 %2434
    %2436 = vrot.lane.b32.xlu0 %v2367, 24
    %v2437 = vpop.permute.xlu0 %2436
    %2438 = vrot.lane.b32.xlu0 %v2368, 24
    %v2439 = vpop.permute.xlu0 %2438
    %2440 = vrot.lane.b32.xlu0 %v2369, 24
    %v2441 = vpop.permute.xlu0 %2440
    %2442 = vrot.lane.b32.xlu0 %v2370, 24
    %v2443 = vpop.permute.xlu0 %2442
    %2444 = vrot.lane.b32.xlu0 %v2371, 24
    %v2445 = vpop.permute.xlu0 %2444
    %2446 = vrot.lane.b32.xlu0 %v2372, 24
    %v2447 = vpop.permute.xlu0 %2446
    %2448 = vrot.lane.b32.xlu0 %v2373, 24
    %v2449 = vpop.permute.xlu0 %2448
    %2450 = vrot.lane.b32.xlu0 %v2374, 24
    %v2451 = vpop.permute.xlu0 %2450
    %2452 = vrot.lane.b32.xlu0 %v2375, 24
    %v2453 = vpop.permute.xlu0 %2452
    %2454 = vrot.lane.b32.xlu0 %v2376, 24
    %v2455 = vpop.permute.xlu0 %2454
    %2456 = vrot.lane.b32.xlu0 %v2377, 24
    %v2457 = vpop.permute.xlu0 %2456
    %2458 = vrot.lane.b32.xlu0 %v2378, 24
    %v2459 = vpop.permute.xlu0 %2458
    %2460 = vrot.lane.b32.xlu0 %v2379, 24
    %v2461 = vpop.permute.xlu0 %2460
    %2462 = vrot.lane.b32.xlu0 %v2380, 24
    %v2463 = vpop.permute.xlu0 %2462
    %2464 = vrot.lane.b32.xlu0 %v2381, 24
    %v2465 = vpop.permute.xlu0 %2464
    %2466 = vrot.lane.b32.xlu0 %v2382, 24
    %v2467 = vpop.permute.xlu0 %2466
    %2468 = vrot.lane.b32.xlu0 %v2383, 24
    %v2469 = vpop.permute.xlu0 %2468
    %2470 = vrot.lane.b32.xlu0 %v2384, 24
    %v2471 = vpop.permute.xlu0 %2470
    %2472 = vrot.lane.b32.xlu0 %v2385, 24
    %v2473 = vpop.permute.xlu0 %2472
    %2474 = vrot.lane.b32.xlu0 %v2386, 24
    %v2475 = vpop.permute.xlu0 %2474
    %2476 = vrot.lane.b32.xlu0 %v2387, 24
    %v2477 = vpop.permute.xlu0 %2476
    %2478 = vrot.lane.b32.xlu0 %v2388, 24
    %v2479 = vpop.permute.xlu0 %2478
    %2480 = vrot.lane.b32.xlu0 %v2389, 24
    %v2481 = vpop.permute.xlu0 %2480
    %2482 = vrot.lane.b32.xlu0 %v2390, 24
    %v2483 = vpop.permute.xlu0 %2482
    %2484 = vrot.lane.b32.xlu0 %v2391, 24
    %v2485 = vpop.permute.xlu0 %2484
    %2486 = vrot.lane.b32.xlu0 %v2392, 24
    %v2487 = vpop.permute.xlu0 %2486
    %2488 = vrot.lane.b32.xlu0 %v2393, 24
    %v2489 = vpop.permute.xlu0 %2488
    %vm2522 = vcmask 228544
    %2523 = vst.msk [vmem:[#allocation3] sm:$0xff] %vm2522, %v2427
    %2524 = vst.msk [vmem:[#allocation3 + $0x8] sm:$0xff] %vm2522, %v2429
    %2525 = vst.msk [vmem:[#allocation3 + $0x10] sm:$0xff] %vm2522, %v2431
    %2526 = vst.msk [vmem:[#allocation3 + $0x18] sm:$0xff] %vm2522, %v2433
    %2527 = vst.msk [vmem:[#allocation3 + $0x20] sm:$0xff] %vm2522, %v2435
    %2528 = vst.msk [vmem:[#allocation3 + $0x28] sm:$0xff] %vm2522, %v2437
    %2529 = vst.msk [vmem:[#allocation3 + $0x30] sm:$0xff] %vm2522, %v2439
    %2530 = vst.msk [vmem:[#allocation3 + $0x38] sm:$0xff] %vm2522, %v2441
    %2531 = vst.msk [vmem:[#allocation3 + $0x40] sm:$0xff] %vm2522, %v2443
    %2532 = vst.msk [vmem:[#allocation3 + $0x48] sm:$0xff] %vm2522, %v2445
    %2533 = vst.msk [vmem:[#allocation3 + $0x50] sm:$0xff] %vm2522, %v2447
    %2534 = vst.msk [vmem:[#allocation3 + $0x58] sm:$0xff] %vm2522, %v2449
    %2535 = vst.msk [vmem:[#allocation3 + $0x60] sm:$0xff] %vm2522, %v2451
    %2536 = vst.msk [vmem:[#allocation3 + $0x68] sm:$0xff] %vm2522, %v2453
    %2537 = vst.msk [vmem:[#allocation3 + $0x70] sm:$0xff] %vm2522, %v2455
    %2538 = vst.msk [vmem:[#allocation3 + $0x78] sm:$0xff] %vm2522, %v2457
    %2539 = vst.msk [vmem:[#allocation3 + $0x80] sm:$0xff] %vm2522, %v2459
    %2540 = vst.msk [vmem:[#allocation3 + $0x88] sm:$0xff] %vm2522, %v2461
    %2541 = vst.msk [vmem:[#allocation3 + $0x90] sm:$0xff] %vm2522, %v2463
    %2542 = vst.msk [vmem:[#allocation3 + $0x98] sm:$0xff] %vm2522, %v2465
    %2543 = vst.msk [vmem:[#allocation3 + $0xa0] sm:$0xff] %vm2522, %v2467
    %2544 = vst.msk [vmem:[#allocation3 + $0xa8] sm:$0xff] %vm2522, %v2469
    %2545 = vst.msk [vmem:[#allocation3 + $0xb0] sm:$0xff] %vm2522, %v2471
    %2546 = vst.msk [vmem:[#allocation3 + $0xb8] sm:$0xff] %vm2522, %v2473
    %2547 = vst.msk [vmem:[#allocation3 + $0xc0] sm:$0xff] %vm2522, %v2475
    %2548 = vst.msk [vmem:[#allocation3 + $0xc8] sm:$0xff] %vm2522, %v2477
    %2549 = vst.msk [vmem:[#allocation3 + $0xd0] sm:$0xff] %vm2522, %v2479
    %2550 = vst.msk [vmem:[#allocation3 + $0xd8] sm:$0xff] %vm2522, %v2481
    %2551 = vst.msk [vmem:[#allocation3 + $0xe0] sm:$0xff] %vm2522, %v2483
    %2552 = vst.msk [vmem:[#allocation3 + $0xe8] sm:$0xff] %vm2522, %v2485
    %2553 = vst.msk [vmem:[#allocation3 + $0xf0] sm:$0xff] %vm2522, %v2487
    %2554 = vst.msk [vmem:[#allocation3 + $0xf8] sm:$0xff] %vm2522, %v2489
    %v2555 = vld [vmem:[%s2297 + $0x1] sm:$0xff]
    %v2556 = vld [vmem:[%s2297 + $0x9] sm:$0xff]
    %v2557 = vld [vmem:[%s2297 + $0x19] sm:$0xff]
    %v2558 = vld [vmem:[%s2297 + $0x21] sm:$0xff]
    %v2559 = vld [vmem:[%s2297 + $0x31] sm:$0xff]
    %v2560 = vld [vmem:[%s2297 + $0x39] sm:$0xff]
    %v2561 = vld [vmem:[%s2297 + $0x49] sm:$0xff]
    %v2562 = vld [vmem:[%s2297 + $0x51] sm:$0xff]
    %v2563 = vld [vmem:[%s2297 + $0x61] sm:$0xff]
    %v2564 = vld [vmem:[%s2297 + $0x69] sm:$0xff]
    %v2565 = vld [vmem:[%s2297 + $0x79] sm:$0xff]
    %v2566 = vld [vmem:[%s2297 + $0x81] sm:$0xff]
    %v2567 = vld [vmem:[%s2297 + $0x91] sm:$0xff]
    %v2568 = vld [vmem:[%s2297 + $0x99] sm:$0xff]
    %v2569 = vld [vmem:[%s2297 + $0xa9] sm:$0xff]
    %v2570 = vld [vmem:[%s2297 + $0xb1] sm:$0xff]
    %v2571 = vld [vmem:[%s2297 + $0xc1] sm:$0xff]
    %v2572 = vld [vmem:[%s2297 + $0xc9] sm:$0xff]
    %v2573 = vld [vmem:[%s2297 + $0xd9] sm:$0xff]
    %v2574 = vld [vmem:[%s2297 + $0xe1] sm:$0xff]
    %v2575 = vld [vmem:[%s2297 + $0xf1] sm:$0xff]
    %v2576 = vld [vmem:[%s2297 + $0xf9] sm:$0xff]
    %v2577 = vld [vmem:[%s2297 + $0x109] sm:$0xff]
    %v2578 = vld [vmem:[%s2297 + $0x111] sm:$0xff]
    %v2579 = vld [vmem:[%s2297 + $0x121] sm:$0xff]
    %v2580 = vld [vmem:[%s2297 + $0x129] sm:$0xff]
    %v2581 = vld [vmem:[%s2297 + $0x139] sm:$0xff]
    %v2582 = vld [vmem:[%s2297 + $0x141] sm:$0xff]
    %v2583 = vld [vmem:[%s2297 + $0x151] sm:$0xff]
    %v2584 = vld [vmem:[%s2297 + $0x159] sm:$0xff]
    %v2585 = vld [vmem:[%s2297 + $0x169] sm:$0xff]
    %v2586 = vld [vmem:[%s2297 + $0x171] sm:$0xff]
    %v2587 = vld [vmem:[%s2297 + $0x1b1] sm:$0xff]
    %v2588 = vld [vmem:[%s2297 + $0x1b9] sm:$0xff]
    %v2589 = vld [vmem:[%s2297 + $0x1c9] sm:$0xff]
    %v2590 = vld [vmem:[%s2297 + $0x1d1] sm:$0xff]
    %v2591 = vld [vmem:[%s2297 + $0x1e1] sm:$0xff]
    %v2592 = vld [vmem:[%s2297 + $0x1e9] sm:$0xff]
    %v2593 = vld [vmem:[%s2297 + $0x1f9] sm:$0xff]
    %v2594 = vld [vmem:[%s2297 + $0x201] sm:$0xff]
    %v2595 = vld [vmem:[%s2297 + $0x211] sm:$0xff]
    %v2596 = vld [vmem:[%s2297 + $0x219] sm:$0xff]
    %v2597 = vld [vmem:[%s2297 + $0x229] sm:$0xff]
    %v2598 = vld [vmem:[%s2297 + $0x231] sm:$0xff]
    %v2599 = vld [vmem:[%s2297 + $0x241] sm:$0xff]
    %v2600 = vld [vmem:[%s2297 + $0x249] sm:$0xff]
    %v2601 = vld [vmem:[%s2297 + $0x259] sm:$0xff]
    %v2602 = vld [vmem:[%s2297 + $0x261] sm:$0xff]
    %v2603 = vld [vmem:[%s2297 + $0x271] sm:$0xff]
    %v2604 = vld [vmem:[%s2297 + $0x279] sm:$0xff]
    %v2605 = vld [vmem:[%s2297 + $0x289] sm:$0xff]
    %v2606 = vld [vmem:[%s2297 + $0x291] sm:$0xff]
    %v2607 = vld [vmem:[%s2297 + $0x2a1] sm:$0xff]
    %v2608 = vld [vmem:[%s2297 + $0x2a9] sm:$0xff]
    %v2609 = vld [vmem:[%s2297 + $0x2b9] sm:$0xff]
    %v2610 = vld [vmem:[%s2297 + $0x2c1] sm:$0xff]
    %v2611 = vld [vmem:[%s2297 + $0x2d1] sm:$0xff]
    %v2612 = vld [vmem:[%s2297 + $0x2d9] sm:$0xff]
    %v2613 = vld [vmem:[%s2297 + $0x2e9] sm:$0xff]
    %v2614 = vld [vmem:[%s2297 + $0x2f1] sm:$0xff]
    %v2615 = vld [vmem:[%s2297 + $0x301] sm:$0xff]
    %v2616 = vld [vmem:[%s2297 + $0x309] sm:$0xff]
    %v2617 = vld [vmem:[%s2297 + $0x319] sm:$0xff]
    %v2618 = vld [vmem:[%s2297 + $0x321] sm:$0xff]
    %v2619 = vpack.c.bf16 %v2556, %v2555
    %v2620 = vpack.c.bf16 %v2558, %v2557
    %v2621 = vpack.c.bf16 %v2560, %v2559
    %v2622 = vpack.c.bf16 %v2562, %v2561
    %v2623 = vpack.c.bf16 %v2564, %v2563
    %v2624 = vpack.c.bf16 %v2566, %v2565
    %v2625 = vpack.c.bf16 %v2568, %v2567
    %v2626 = vpack.c.bf16 %v2570, %v2569
    %v2627 = vpack.c.bf16 %v2572, %v2571
    %v2628 = vpack.c.bf16 %v2574, %v2573
    %v2629 = vpack.c.bf16 %v2576, %v2575
    %v2630 = vpack.c.bf16 %v2578, %v2577
    %v2631 = vpack.c.bf16 %v2580, %v2579
    %v2632 = vpack.c.bf16 %v2582, %v2581
    %v2633 = vpack.c.bf16 %v2584, %v2583
    %v2634 = vpack.c.bf16 %v2586, %v2585
    %v2635 = vpack.c.bf16 %v2588, %v2587
    %v2636 = vpack.c.bf16 %v2590, %v2589
    %v2637 = vpack.c.bf16 %v2592, %v2591
    %v2638 = vpack.c.bf16 %v2594, %v2593
    %v2639 = vpack.c.bf16 %v2596, %v2595
    %v2640 = vpack.c.bf16 %v2598, %v2597
    %v2641 = vpack.c.bf16 %v2600, %v2599
    %v2642 = vpack.c.bf16 %v2602, %v2601
    %v2643 = vpack.c.bf16 %v2604, %v2603
    %v2644 = vpack.c.bf16 %v2606, %v2605
    %v2645 = vpack.c.bf16 %v2608, %v2607
    %v2646 = vpack.c.bf16 %v2610, %v2609
    %v2647 = vpack.c.bf16 %v2612, %v2611
    %v2648 = vpack.c.bf16 %v2614, %v2613
    %v2649 = vpack.c.bf16 %v2616, %v2615
    %v2650 = vpack.c.bf16 %v2618, %v2617
    %2683 = vrot.lane.b32.xlu0 %v2619, 28
    %v2684 = vpop.permute.xlu0 %2683
    %2685 = vrot.lane.b32.xlu0 %v2620, 28
    %v2686 = vpop.permute.xlu0 %2685
    %2687 = vrot.lane.b32.xlu0 %v2621, 28
    %v2688 = vpop.permute.xlu0 %2687
    %2689 = vrot.lane.b32.xlu0 %v2622, 28
    %v2690 = vpop.permute.xlu0 %2689
    %2691 = vrot.lane.b32.xlu0 %v2623, 28
    %v2692 = vpop.permute.xlu0 %2691
    %2693 = vrot.lane.b32.xlu0 %v2624, 28
    %v2694 = vpop.permute.xlu0 %2693
    %2695 = vrot.lane.b32.xlu0 %v2625, 28
    %v2696 = vpop.permute.xlu0 %2695
    %2697 = vrot.lane.b32.xlu0 %v2626, 28
    %v2698 = vpop.permute.xlu0 %2697
    %2699 = vrot.lane.b32.xlu0 %v2627, 28
    %v2700 = vpop.permute.xlu0 %2699
    %2701 = vrot.lane.b32.xlu0 %v2628, 28
    %v2702 = vpop.permute.xlu0 %2701
    %2703 = vrot.lane.b32.xlu0 %v2629, 28
    %v2704 = vpop.permute.xlu0 %2703
    %2705 = vrot.lane.b32.xlu0 %v2630, 28
    %v2706 = vpop.permute.xlu0 %2705
    %2707 = vrot.lane.b32.xlu0 %v2631, 28
    %v2708 = vpop.permute.xlu0 %2707
    %2709 = vrot.lane.b32.xlu0 %v2632, 28
    %v2710 = vpop.permute.xlu0 %2709
    %2711 = vrot.lane.b32.xlu0 %v2633, 28
    %v2712 = vpop.permute.xlu0 %2711
    %2713 = vrot.lane.b32.xlu0 %v2634, 28
    %v2714 = vpop.permute.xlu0 %2713
    %2715 = vrot.lane.b32.xlu0 %v2635, 28
    %v2716 = vpop.permute.xlu0 %2715
    %2717 = vrot.lane.b32.xlu0 %v2636, 28
    %v2718 = vpop.permute.xlu0 %2717
    %2719 = vrot.lane.b32.xlu0 %v2637, 28
    %v2720 = vpop.permute.xlu0 %2719
    %2721 = vrot.lane.b32.xlu0 %v2638, 28
    %v2722 = vpop.permute.xlu0 %2721
    %2723 = vrot.lane.b32.xlu0 %v2639, 28
    %v2724 = vpop.permute.xlu0 %2723
    %2725 = vrot.lane.b32.xlu0 %v2640, 28
    %v2726 = vpop.permute.xlu0 %2725
    %2727 = vrot.lane.b32.xlu0 %v2641, 28
    %v2728 = vpop.permute.xlu0 %2727
    %2729 = vrot.lane.b32.xlu0 %v2642, 28
    %v2730 = vpop.permute.xlu0 %2729
    %2731 = vrot.lane.b32.xlu0 %v2643, 28
    %v2732 = vpop.permute.xlu0 %2731
    %2733 = vrot.lane.b32.xlu0 %v2644, 28
    %v2734 = vpop.permute.xlu0 %2733
    %2735 = vrot.lane.b32.xlu0 %v2645, 28
    %v2736 = vpop.permute.xlu0 %2735
    %2737 = vrot.lane.b32.xlu0 %v2646, 28
    %v2738 = vpop.permute.xlu0 %2737
    %2739 = vrot.lane.b32.xlu0 %v2647, 28
    %v2740 = vpop.permute.xlu0 %2739
    %2741 = vrot.lane.b32.xlu0 %v2648, 28
    %v2742 = vpop.permute.xlu0 %2741
    %2743 = vrot.lane.b32.xlu0 %v2649, 28
    %v2744 = vpop.permute.xlu0 %2743
    %2745 = vrot.lane.b32.xlu0 %v2650, 28
    %v2746 = vpop.permute.xlu0 %2745
    %vm2779 = vcmask 261344
    %2780 = vst.msk [vmem:[#allocation3] sm:$0xff] %vm2779, %v2684
    %2781 = vst.msk [vmem:[#allocation3 + $0x8] sm:$0xff] %vm2779, %v2686
    %2782 = vst.msk [vmem:[#allocation3 + $0x10] sm:$0xff] %vm2779, %v2688
    %2783 = vst.msk [vmem:[#allocation3 + $0x18] sm:$0xff] %vm2779, %v2690
    %2784 = vst.msk [vmem:[#allocation3 + $0x20] sm:$0xff] %vm2779, %v2692
    %2785 = vst.msk [vmem:[#allocation3 + $0x28] sm:$0xff] %vm2779, %v2694
    %2786 = vst.msk [vmem:[#allocation3 + $0x30] sm:$0xff] %vm2779, %v2696
    %2787 = vst.msk [vmem:[#allocation3 + $0x38] sm:$0xff] %vm2779, %v2698
    %2788 = vst.msk [vmem:[#allocation3 + $0x40] sm:$0xff] %vm2779, %v2700
    %2789 = vst.msk [vmem:[#allocation3 + $0x48] sm:$0xff] %vm2779, %v2702
    %2790 = vst.msk [vmem:[#allocation3 + $0x50] sm:$0xff] %vm2779, %v2704
    %2791 = vst.msk [vmem:[#allocation3 + $0x58] sm:$0xff] %vm2779, %v2706
    %2792 = vst.msk [vmem:[#allocation3 + $0x60] sm:$0xff] %vm2779, %v2708
    %2793 = vst.msk [vmem:[#allocation3 + $0x68] sm:$0xff] %vm2779, %v2710
    %2794 = vst.msk [vmem:[#allocation3 + $0x70] sm:$0xff] %vm2779, %v2712
    %2795 = vst.msk [vmem:[#allocation3 + $0x78] sm:$0xff] %vm2779, %v2714
    %2796 = vst.msk [vmem:[#allocation3 + $0x80] sm:$0xff] %vm2779, %v2716
    %2797 = vst.msk [vmem:[#allocation3 + $0x88] sm:$0xff] %vm2779, %v2718
    %2798 = vst.msk [vmem:[#allocation3 + $0x90] sm:$0xff] %vm2779, %v2720
    %2799 = vst.msk [vmem:[#allocation3 + $0x98] sm:$0xff] %vm2779, %v2722
    %2800 = vst.msk [vmem:[#allocation3 + $0xa0] sm:$0xff] %vm2779, %v2724
    %2801 = vst.msk [vmem:[#allocation3 + $0xa8] sm:$0xff] %vm2779, %v2726
    %2802 = vst.msk [vmem:[#allocation3 + $0xb0] sm:$0xff] %vm2779, %v2728
    %2803 = vst.msk [vmem:[#allocation3 + $0xb8] sm:$0xff] %vm2779, %v2730
    %2804 = vst.msk [vmem:[#allocation3 + $0xc0] sm:$0xff] %vm2779, %v2732
    %2805 = vst.msk [vmem:[#allocation3 + $0xc8] sm:$0xff] %vm2779, %v2734
    %2806 = vst.msk [vmem:[#allocation3 + $0xd0] sm:$0xff] %vm2779, %v2736
    %2807 = vst.msk [vmem:[#allocation3 + $0xd8] sm:$0xff] %vm2779, %v2738
    %2808 = vst.msk [vmem:[#allocation3 + $0xe0] sm:$0xff] %vm2779, %v2740
    %2809 = vst.msk [vmem:[#allocation3 + $0xe8] sm:$0xff] %vm2779, %v2742
    %2810 = vst.msk [vmem:[#allocation3 + $0xf0] sm:$0xff] %vm2779, %v2744
    %2811 = vst.msk [vmem:[#allocation3 + $0xf8] sm:$0xff] %vm2779, %v2746
    %v2812 = vld [vmem:[%s2297 + $0x2] sm:$0xff]
    %v2813 = vld [vmem:[%s2297 + $0xa] sm:$0xff]
    %v2814 = vld [vmem:[%s2297 + $0x1a] sm:$0xff]
    %v2815 = vld [vmem:[%s2297 + $0x22] sm:$0xff]
    %v2816 = vld [vmem:[%s2297 + $0x32] sm:$0xff]
    %v2817 = vld [vmem:[%s2297 + $0x3a] sm:$0xff]
    %v2818 = vld [vmem:[%s2297 + $0x4a] sm:$0xff]
    %v2819 = vld [vmem:[%s2297 + $0x52] sm:$0xff]
    %v2820 = vld [vmem:[%s2297 + $0x62] sm:$0xff]
    %v2821 = vld [vmem:[%s2297 + $0x6a] sm:$0xff]
    %v2822 = vld [vmem:[%s2297 + $0x7a] sm:$0xff]
    %v2823 = vld [vmem:[%s2297 + $0x82] sm:$0xff]
    %v2824 = vld [vmem:[%s2297 + $0x92] sm:$0xff]
    %v2825 = vld [vmem:[%s2297 + $0x9a] sm:$0xff]
    %v2826 = vld [vmem:[%s2297 + $0xaa] sm:$0xff]
    %v2827 = vld [vmem:[%s2297 + $0xb2] sm:$0xff]
    %v2828 = vld [vmem:[%s2297 + $0xc2] sm:$0xff]
    %v2829 = vld [vmem:[%s2297 + $0xca] sm:$0xff]
    %v2830 = vld [vmem:[%s2297 + $0xda] sm:$0xff]
    %v2831 = vld [vmem:[%s2297 + $0xe2] sm:$0xff]
    %v2832 = vld [vmem:[%s2297 + $0xf2] sm:$0xff]
    %v2833 = vld [vmem:[%s2297 + $0xfa] sm:$0xff]
    %v2834 = vld [vmem:[%s2297 + $0x10a] sm:$0xff]
    %v2835 = vld [vmem:[%s2297 + $0x112] sm:$0xff]
    %v2836 = vld [vmem:[%s2297 + $0x122] sm:$0xff]
    %v2837 = vld [vmem:[%s2297 + $0x12a] sm:$0xff]
    %v2838 = vld [vmem:[%s2297 + $0x13a] sm:$0xff]
    %v2839 = vld [vmem:[%s2297 + $0x142] sm:$0xff]
    %v2840 = vld [vmem:[%s2297 + $0x152] sm:$0xff]
    %v2841 = vld [vmem:[%s2297 + $0x15a] sm:$0xff]
    %v2842 = vld [vmem:[%s2297 + $0x16a] sm:$0xff]
    %v2843 = vld [vmem:[%s2297 + $0x172] sm:$0xff]
    %v2844 = vld [vmem:[%s2297 + $0x1b2] sm:$0xff]
    %v2845 = vld [vmem:[%s2297 + $0x1ba] sm:$0xff]
    %v2846 = vld [vmem:[%s2297 + $0x1ca] sm:$0xff]
    %v2847 = vld [vmem:[%s2297 + $0x1d2] sm:$0xff]
    %v2848 = vld [vmem:[%s2297 + $0x1e2] sm:$0xff]
    %v2849 = vld [vmem:[%s2297 + $0x1ea] sm:$0xff]
    %v2850 = vld [vmem:[%s2297 + $0x1fa] sm:$0xff]
    %v2851 = vld [vmem:[%s2297 + $0x202] sm:$0xff]
    %v2852 = vld [vmem:[%s2297 + $0x212] sm:$0xff]
    %v2853 = vld [vmem:[%s2297 + $0x21a] sm:$0xff]
    %v2854 = vld [vmem:[%s2297 + $0x22a] sm:$0xff]
    %v2855 = vld [vmem:[%s2297 + $0x232] sm:$0xff]
    %v2856 = vld [vmem:[%s2297 + $0x242] sm:$0xff]
    %v2857 = vld [vmem:[%s2297 + $0x24a] sm:$0xff]
    %v2858 = vld [vmem:[%s2297 + $0x25a] sm:$0xff]
    %v2859 = vld [vmem:[%s2297 + $0x262] sm:$0xff]
    %v2860 = vld [vmem:[%s2297 + $0x272] sm:$0xff]
    %v2861 = vld [vmem:[%s2297 + $0x27a] sm:$0xff]
    %v2862 = vld [vmem:[%s2297 + $0x28a] sm:$0xff]
    %v2863 = vld [vmem:[%s2297 + $0x292] sm:$0xff]
    %v2864 = vld [vmem:[%s2297 + $0x2a2] sm:$0xff]
    %v2865 = vld [vmem:[%s2297 + $0x2aa] sm:$0xff]
    %v2866 = vld [vmem:[%s2297 + $0x2ba] sm:$0xff]
    %v2867 = vld [vmem:[%s2297 + $0x2c2] sm:$0xff]
    %v2868 = vld [vmem:[%s2297 + $0x2d2] sm:$0xff]
    %v2869 = vld [vmem:[%s2297 + $0x2da] sm:$0xff]
    %v2870 = vld [vmem:[%s2297 + $0x2ea] sm:$0xff]
    %v2871 = vld [vmem:[%s2297 + $0x2f2] sm:$0xff]
    %v2872 = vld [vmem:[%s2297 + $0x302] sm:$0xff]
    %v2873 = vld [vmem:[%s2297 + $0x30a] sm:$0xff]
    %v2874 = vld [vmem:[%s2297 + $0x31a] sm:$0xff]
    %v2875 = vld [vmem:[%s2297 + $0x322] sm:$0xff]
    %v2876 = vpack.c.bf16 %v2813, %v2812
    %v2877 = vpack.c.bf16 %v2815, %v2814
    %v2878 = vpack.c.bf16 %v2817, %v2816
    %v2879 = vpack.c.bf16 %v2819, %v2818
    %v2880 = vpack.c.bf16 %v2821, %v2820
    %v2881 = vpack.c.bf16 %v2823, %v2822
    %v2882 = vpack.c.bf16 %v2825, %v2824
    %v2883 = vpack.c.bf16 %v2827, %v2826
    %v2884 = vpack.c.bf16 %v2829, %v2828
    %v2885 = vpack.c.bf16 %v2831, %v2830
    %v2886 = vpack.c.bf16 %v2833, %v2832
    %v2887 = vpack.c.bf16 %v2835, %v2834
    %v2888 = vpack.c.bf16 %v2837, %v2836
    %v2889 = vpack.c.bf16 %v2839, %v2838
    %v2890 = vpack.c.bf16 %v2841, %v2840
    %v2891 = vpack.c.bf16 %v2843, %v2842
    %v2892 = vpack.c.bf16 %v2845, %v2844
    %v2893 = vpack.c.bf16 %v2847, %v2846
    %v2894 = vpack.c.bf16 %v2849, %v2848
    %v2895 = vpack.c.bf16 %v2851, %v2850
    %v2896 = vpack.c.bf16 %v2853, %v2852
    %v2897 = vpack.c.bf16 %v2855, %v2854
    %v2898 = vpack.c.bf16 %v2857, %v2856
    %v2899 = vpack.c.bf16 %v2859, %v2858
    %v2900 = vpack.c.bf16 %v2861, %v2860
    %v2901 = vpack.c.bf16 %v2863, %v2862
    %v2902 = vpack.c.bf16 %v2865, %v2864
    %v2903 = vpack.c.bf16 %v2867, %v2866
    %v2904 = vpack.c.bf16 %v2869, %v2868
    %v2905 = vpack.c.bf16 %v2871, %v2870
    %v2906 = vpack.c.bf16 %v2873, %v2872
    %v2907 = vpack.c.bf16 %v2875, %v2874
    %2940 = vrot.lane.b32.xlu0 %v2876, 32
    %v2941 = vpop.permute.xlu0 %2940
    %2942 = vrot.lane.b32.xlu0 %v2877, 32
    %v2943 = vpop.permute.xlu0 %2942
    %2944 = vrot.lane.b32.xlu0 %v2878, 32
    %v2945 = vpop.permute.xlu0 %2944
    %2946 = vrot.lane.b32.xlu0 %v2879, 32
    %v2947 = vpop.permute.xlu0 %2946
    %2948 = vrot.lane.b32.xlu0 %v2880, 32
    %v2949 = vpop.permute.xlu0 %2948
    %2950 = vrot.lane.b32.xlu0 %v2881, 32
    %v2951 = vpop.permute.xlu0 %2950
    %2952 = vrot.lane.b32.xlu0 %v2882, 32
    %v2953 = vpop.permute.xlu0 %2952
    %2954 = vrot.lane.b32.xlu0 %v2883, 32
    %v2955 = vpop.permute.xlu0 %2954
    %2956 = vrot.lane.b32.xlu0 %v2884, 32
    %v2957 = vpop.permute.xlu0 %2956
    %2958 = vrot.lane.b32.xlu0 %v2885, 32
    %v2959 = vpop.permute.xlu0 %2958
    %2960 = vrot.lane.b32.xlu0 %v2886, 32
    %v2961 = vpop.permute.xlu0 %2960
    %2962 = vrot.lane.b32.xlu0 %v2887, 32
    %v2963 = vpop.permute.xlu0 %2962
    %2964 = vrot.lane.b32.xlu0 %v2888, 32
    %v2965 = vpop.permute.xlu0 %2964
    %2966 = vrot.lane.b32.xlu0 %v2889, 32
    %v2967 = vpop.permute.xlu0 %2966
    %2968 = vrot.lane.b32.xlu0 %v2890, 32
    %v2969 = vpop.permute.xlu0 %2968
    %2970 = vrot.lane.b32.xlu0 %v2891, 32
    %v2971 = vpop.permute.xlu0 %2970
    %2972 = vrot.lane.b32.xlu0 %v2892, 32
    %v2973 = vpop.permute.xlu0 %2972
    %2974 = vrot.lane.b32.xlu0 %v2893, 32
    %v2975 = vpop.permute.xlu0 %2974
    %2976 = vrot.lane.b32.xlu0 %v2894, 32
    %v2977 = vpop.permute.xlu0 %2976
    %2978 = vrot.lane.b32.xlu0 %v2895, 32
    %v2979 = vpop.permute.xlu0 %2978
    %2980 = vrot.lane.b32.xlu0 %v2896, 32
    %v2981 = vpop.permute.xlu0 %2980
    %2982 = vrot.lane.b32.xlu0 %v2897, 32
    %v2983 = vpop.permute.xlu0 %2982
    %2984 = vrot.lane.b32.xlu0 %v2898, 32
    %v2985 = vpop.permute.xlu0 %2984
    %2986 = vrot.lane.b32.xlu0 %v2899, 32
    %v2987 = vpop.permute.xlu0 %2986
    %2988 = vrot.lane.b32.xlu0 %v2900, 32
    %v2989 = vpop.permute.xlu0 %2988
    %2990 = vrot.lane.b32.xlu0 %v2901, 32
    %v2991 = vpop.permute.xlu0 %2990
    %2992 = vrot.lane.b32.xlu0 %v2902, 32
    %v2993 = vpop.permute.xlu0 %2992
    %2994 = vrot.lane.b32.xlu0 %v2903, 32
    %v2995 = vpop.permute.xlu0 %2994
    %2996 = vrot.lane.b32.xlu0 %v2904, 32
    %v2997 = vpop.permute.xlu0 %2996
    %2998 = vrot.lane.b32.xlu0 %v2905, 32
    %v2999 = vpop.permute.xlu0 %2998
    %3000 = vrot.lane.b32.xlu0 %v2906, 32
    %v3001 = vpop.permute.xlu0 %3000
    %3002 = vrot.lane.b32.xlu0 %v2907, 32
    %v3003 = vpop.permute.xlu0 %3002
    %vm3036 = vcmask 294144
    %3037 = vst.msk [vmem:[#allocation3] sm:$0xff] %vm3036, %v2941
    %3038 = vst.msk [vmem:[#allocation3 + $0x8] sm:$0xff] %vm3036, %v2943
    %3039 = vst.msk [vmem:[#allocation3 + $0x10] sm:$0xff] %vm3036, %v2945
    %3040 = vst.msk [vmem:[#allocation3 + $0x18] sm:$0xff] %vm3036, %v2947
    %3041 = vst.msk [vmem:[#allocation3 + $0x20] sm:$0xff] %vm3036, %v2949
    %3042 = vst.msk [vmem:[#allocation3 + $0x28] sm:$0xff] %vm3036, %v2951
    %3043 = vst.msk [vmem:[#allocation3 + $0x30] sm:$0xff] %vm3036, %v2953
    %3044 = vst.msk [vmem:[#allocation3 + $0x38] sm:$0xff] %vm3036, %v2955
    %3045 = vst.msk [vmem:[#allocation3 + $0x40] sm:$0xff] %vm3036, %v2957
    %3046 = vst.msk [vmem:[#allocation3 + $0x48] sm:$0xff] %vm3036, %v2959
    %3047 = vst.msk [vmem:[#allocation3 + $0x50] sm:$0xff] %vm3036, %v2961
    %3048 = vst.msk [vmem:[#allocation3 + $0x58] sm:$0xff] %vm3036, %v2963
    %3049 = vst.msk [vmem:[#allocation3 + $0x60] sm:$0xff] %vm3036, %v2965
    %3050 = vst.msk [vmem:[#allocation3 + $0x68] sm:$0xff] %vm3036, %v2967
    %3051 = vst.msk [vmem:[#allocation3 + $0x70] sm:$0xff] %vm3036, %v2969
    %3052 = vst.msk [vmem:[#allocation3 + $0x78] sm:$0xff] %vm3036, %v2971
    %3053 = vst.msk [vmem:[#allocation3 + $0x80] sm:$0xff] %vm3036, %v2973
    %3054 = vst.msk [vmem:[#allocation3 + $0x88] sm:$0xff] %vm3036, %v2975
    %3055 = vst.msk [vmem:[#allocation3 + $0x90] sm:$0xff] %vm3036, %v2977
    %3056 = vst.msk [vmem:[#allocation3 + $0x98] sm:$0xff] %vm3036, %v2979
    %3057 = vst.msk [vmem:[#allocation3 + $0xa0] sm:$0xff] %vm3036, %v2981
    %3058 = vst.msk [vmem:[#allocation3 + $0xa8] sm:$0xff] %vm3036, %v2983
    %3059 = vst.msk [vmem:[#allocation3 + $0xb0] sm:$0xff] %vm3036, %v2985
    %3060 = vst.msk [vmem:[#allocation3 + $0xb8] sm:$0xff] %vm3036, %v2987
    %3061 = vst.msk [vmem:[#allocation3 + $0xc0] sm:$0xff] %vm3036, %v2989
    %3062 = vst.msk [vmem:[#allocation3 + $0xc8] sm:$0xff] %vm3036, %v2991
    %3063 = vst.msk [vmem:[#allocation3 + $0xd0] sm:$0xff] %vm3036, %v2993
    %3064 = vst.msk [vmem:[#allocation3 + $0xd8] sm:$0xff] %vm3036, %v2995
    %3065 = vst.msk [vmem:[#allocation3 + $0xe0] sm:$0xff] %vm3036, %v2997
    %3066 = vst.msk [vmem:[#allocation3 + $0xe8] sm:$0xff] %vm3036, %v2999
    %3067 = vst.msk [vmem:[#allocation3 + $0xf0] sm:$0xff] %vm3036, %v3001
    %3068 = vst.msk [vmem:[#allocation3 + $0xf8] sm:$0xff] %vm3036, %v3003
    %v3069 = vld [vmem:[#allocation3] sm:$0xff]
    %v3070 = vld [vmem:[#allocation3 + $0x8] sm:$0xff]
    %v3071 = vld [vmem:[#allocation3 + $0x10] sm:$0xff]
    %v3072 = vld [vmem:[#allocation3 + $0x18] sm:$0xff]
    %v3073 = vld [vmem:[#allocation3 + $0x20] sm:$0xff]
    %v3074 = vld [vmem:[#allocation3 + $0x28] sm:$0xff]
    %v3075 = vld [vmem:[#allocation3 + $0x30] sm:$0xff]
    %v3076 = vld [vmem:[#allocation3 + $0x38] sm:$0xff]
    %v3077 = vld [vmem:[#allocation3 + $0x40] sm:$0xff]
    %v3078 = vld [vmem:[#allocation3 + $0x48] sm:$0xff]
    %v3079 = vld [vmem:[#allocation3 + $0x50] sm:$0xff]
    %v3080 = vld [vmem:[#allocation3 + $0x58] sm:$0xff]
    %v3081 = vld [vmem:[#allocation3 + $0x60] sm:$0xff]
    %v3082 = vld [vmem:[#allocation3 + $0x68] sm:$0xff]
    %v3083 = vld [vmem:[#allocation3 + $0x70] sm:$0xff]
    %v3084 = vld [vmem:[#allocation3 + $0x78] sm:$0xff]
    %v3085 = vld [vmem:[#allocation3 + $0x80] sm:$0xff]
    %v3086 = vld [vmem:[#allocation3 + $0x88] sm:$0xff]
    %v3087 = vld [vmem:[#allocation3 + $0x90] sm:$0xff]
    %v3088 = vld [vmem:[#allocation3 + $0x98] sm:$0xff]
    %v3089 = vld [vmem:[#allocation3 + $0xa0] sm:$0xff]
    %v3090 = vld [vmem:[#allocation3 + $0xa8] sm:$0xff]
    %v3091 = vld [vmem:[#allocation3 + $0xb0] sm:$0xff]
    %v3092 = vld [vmem:[#allocation3 + $0xb8] sm:$0xff]
    %v3093 = vld [vmem:[#allocation3 + $0xc0] sm:$0xff]
    %v3094 = vld [vmem:[#allocation3 + $0xc8] sm:$0xff]
    %v3095 = vld [vmem:[#allocation3 + $0xd0] sm:$0xff]
    %v3096 = vld [vmem:[#allocation3 + $0xd8] sm:$0xff]
    %v3097 = vld [vmem:[#allocation3 + $0xe0] sm:$0xff]
    %v3098 = vld [vmem:[#allocation3 + $0xe8] sm:$0xff]
    %v3099 = vld [vmem:[#allocation3 + $0xf0] sm:$0xff]
    %v3100 = vld [vmem:[#allocation3 + $0xf8] sm:$0xff]
    %v3101 = vld [vmem:[%s3] sm:$0xf]
    %v3102 = vld [vmem:[%s3 + $0x4] sm:$0xf]
    %v3103 = vld [vmem:[%s3 + $0x8] sm:$0xf]
    %v3104 = vld [vmem:[%s3 + $0xc] sm:$0xf]
    %v3105 = vld [vmem:[%s3 + $0x10] sm:$0x3]
    %v3106 = vld [vmem:[%s4] sm:$0x1]
    %v3108 = vlaneseq
    %v3109 = vshrl.u32 %v3108, 7
    %v3110 = vsub.s32 0, %v3109
    %v3111 = vrot.slane %v3106, %v3110
    %v3118 = vunpack.c.l.b16 %v3101
    %v3119 = vunpack.c.l.b16 %v3102
    %v3120 = vunpack.c.l.b16 %v3103
    %v3121 = vunpack.c.l.b16 %v3104
    %v3122 = vunpack.c.l.b16 %v3105
    %v3123 = vpack.c.b16 %v3119, %v3118
    %v3124 = vpack.c.b16 %v3121, %v3120
    %v3125 = vpack.c.b16 %v3122, %v3122
    %vm3128 = vcmask 293888
    %v3130 = vsel %vm3128, %v3069, 0
    %v3133 = vsel %vm3128, %v3070, 0
    %v3136 = vsel %vm3128, %v3071, 0
    %v3139 = vsel %vm3128, %v3072, 0
    %v3142 = vsel %vm3128, %v3073, 0
    %v3145 = vsel %vm3128, %v3074, 0
    %v3148 = vsel %vm3128, %v3075, 0
    %v3151 = vsel %vm3128, %v3076, 0
    %v3154 = vsel %vm3128, %v3077, 0
    %v3157 = vsel %vm3128, %v3078, 0
    %v3160 = vsel %vm3128, %v3079, 0
    %v3163 = vsel %vm3128, %v3080, 0
    %v3166 = vsel %vm3128, %v3081, 0
    %v3169 = vsel %vm3128, %v3082, 0
    %v3172 = vsel %vm3128, %v3083, 0
    %v3175 = vsel %vm3128, %v3084, 0
    %v3178 = vsel %vm3128, %v3085, 0
    %v3181 = vsel %vm3128, %v3086, 0
    %v3184 = vsel %vm3128, %v3087, 0
    %v3187 = vsel %vm3128, %v3088, 0
    %v3190 = vsel %vm3128, %v3089, 0
    %v3193 = vsel %vm3128, %v3090, 0
    %v3196 = vsel %vm3128, %v3091, 0
    %v3199 = vsel %vm3128, %v3092, 0
    %v3202 = vsel %vm3128, %v3093, 0
    %v3205 = vsel %vm3128, %v3094, 0
    %v3208 = vsel %vm3128, %v3095, 0
    %v3211 = vsel %vm3128, %v3096, 0
    %v3214 = vsel %vm3128, %v3097, 0
    %v3217 = vsel %vm3128, %v3098, 0
    %v3220 = vsel %vm3128, %v3099, 0
    %v3223 = vsel %vm3128, %v3100, 0
    %vm3225 = vcmask 1041408
    %v3227 = vsel %vm3225, %v3125, 0
    %3229 = vmatprep.subr.bf16.mxu0 0
    %3230 = vmatpush1.bf16.msra.mxu0 %v3123
    %3231 = vmatprep.subr.bf16.mxu0 0
    %3232 = vmatpush1.bf16.msra.mxu0 %v3124
    %3233 = vmatprep.subr.bf16.mxu0 0
    %3234 = vmatpush1.bf16.msra.mxu0 %v3227
    %3235 = vmatprep.subr.bf16.mxu0 0
    %3236 = vmatpush1.bf16.msra.mxu0 0
    %3237 = vmatprep.subr.bf16.mxu0 0
    %3238 = vmatpush1.bf16.msra.mxu0 0
    %3239 = vmatprep.subr.bf16.mxu0 0
    %3240 = vmatpush1.bf16.msra.mxu0 0
    %3241 = vmatprep.subr.bf16.mxu0 0
    %3242 = vmatpush1.bf16.msra.mxu0 0
    %3243 = vmatprep.subr.bf16.mxu0 0
    %3244 = vmatpush1.bf16.msra.mxu0 0
    %3245 = vmatprep.subr.bf16.mxu0 0
    %3246 = vmatpush1.bf16.msra.mxu0 0
    %3247 = vmatprep.subr.bf16.mxu0 0
    %3248 = vmatpush1.bf16.msra.mxu0 0
    %3249 = vmatprep.subr.bf16.mxu0 0
    %3250 = vmatpush1.bf16.msra.mxu0 0
    %3251 = vmatprep.subr.bf16.mxu0 0
    %3252 = vmatpush1.bf16.msra.mxu0 0
    %3253 = vmatprep.subr.bf16.mxu0 0
    %3254 = vmatpush1.bf16.msra.mxu0 0
    %3255 = vmatprep.subr.bf16.mxu0 0
    %3256 = vmatpush1.bf16.msra.mxu0 0
    %3257 = vmatprep.subr.bf16.mxu0 0
    %3258 = vmatpush1.bf16.msra.mxu0 0
    %3259 = vmatprep.subr.bf16.mxu0 0
    %3260 = vmatpush1.bf16.msra.mxu0 0
    %3261 = vmatprep.mubr.bf16.mxu0 0
    %3262 = vmatmul.mubr.bf16.gmra.mrb[0].mxu0 %v3130
    %v3263 = vpop.f32.mrb[0].mxu0
    %v3264 = vadd.f32 %v3111, %v3263
    %v3265 = vpop.f32.mrb[0].mxu0
    %v3266 = vpop.f32.mrb[0].mxu0
    %v3267 = vadd.f32 %v3111, %v3266
    %v3268 = vpop.f32.mrb[0].mxu0
    %3269 = vmatprep.mubr.bf16.mxu0 0
    %3270 = vmatmul.mubr.bf16.gmra.mrb[0].mxu0 %v3133
    %v3271 = vpop.f32.mrb[0].mxu0
    %v3272 = vadd.f32 %v3111, %v3271
    %v3273 = vpop.f32.mrb[0].mxu0
    %v3274 = vpop.f32.mrb[0].mxu0
    %v3275 = vadd.f32 %v3111, %v3274
    %v3276 = vpop.f32.mrb[0].mxu0
    %3277 = vmatprep.mubr.bf16.mxu0 0
    %3278 = vmatmul.mubr.bf16.gmra.mrb[0].mxu0 %v3136
    %v3279 = vpop.f32.mrb[0].mxu0
    %v3280 = vadd.f32 %v3111, %v3279
    %v3281 = vpop.f32.mrb[0].mxu0
    %v3282 = vpop.f32.mrb[0].mxu0
    %v3283 = vadd.f32 %v3111, %v3282
    %v3284 = vpop.f32.mrb[0].mxu0
    %3285 = vmatprep.mubr.bf16.mxu0 0
    %3286 = vmatmul.mubr.bf16.gmra.mrb[0].mxu0 %v3139
    %v3287 = vpop.f32.mrb[0].mxu0
    %v3288 = vadd.f32 %v3111, %v3287
    %v3289 = vpop.f32.mrb[0].mxu0
    %v3290 = vpop.f32.mrb[0].mxu0
    %v3291 = vadd.f32 %v3111, %v3290
    %v3292 = vpop.f32.mrb[0].mxu0
    %3293 = vmatprep.mubr.bf16.mxu0 0
    %3294 = vmatmul.mubr.bf16.gmra.mrb[0].mxu0 %v3142
    %v3295 = vpop.f32.mrb[0].mxu0
    %v3296 = vadd.f32 %v3111, %v3295
    %v3297 = vpop.f32.mrb[0].mxu0
    %v3298 = vpop.f32.mrb[0].mxu0
    %v3299 = vadd.f32 %v3111, %v3298
    %v3300 = vpop.f32.mrb[0].mxu0
    %3301 = vmatprep.mubr.bf16.mxu0 0
    %3302 = vmatmul.mubr.bf16.gmra.mrb[0].mxu0 %v3145
    %v3303 = vpop.f32.mrb[0].mxu0
    %v3304 = vadd.f32 %v3111, %v3303
    %v3305 = vpop.f32.mrb[0].mxu0
    %v3306 = vpop.f32.mrb[0].mxu0
    %v3307 = vadd.f32 %v3111, %v3306
    %v3308 = vpop.f32.mrb[0].mxu0
    %3309 = vmatprep.mubr.bf16.mxu0 0
    %3310 = vmatmul.mubr.bf16.gmra.mrb[0].mxu0 %v3148
    %v3311 = vpop.f32.mrb[0].mxu0
    %v3312 = vadd.f32 %v3111, %v3311
    %v3313 = vpop.f32.mrb[0].mxu0
    %v3314 = vpop.f32.mrb[0].mxu0
    %v3315 = vadd.f32 %v3111, %v3314
    %v3316 = vpop.f32.mrb[0].mxu0
    %3317 = vmatprep.mubr.bf16.mxu0 0
    %3318 = vmatmul.mubr.bf16.gmra.mrb[0].mxu0 %v3151
    %v3319 = vpop.f32.mrb[0].mxu0
    %v3320 = vadd.f32 %v3111, %v3319
    %v3321 = vpop.f32.mrb[0].mxu0
    %v3322 = vpop.f32.mrb[0].mxu0
    %v3323 = vadd.f32 %v3111, %v3322
    %v3324 = vpop.f32.mrb[0].mxu0
    %3325 = vmatprep.mubr.bf16.mxu0 0
    %3326 = vmatmul.mubr.bf16.gmra.mrb[0].mxu0 %v3154
    %v3327 = vpop.f32.mrb[0].mxu0
    %v3328 = vadd.f32 %v3111, %v3327
    %v3329 = vpop.f32.mrb[0].mxu0
    %v3330 = vpop.f32.mrb[0].mxu0
    %v3331 = vadd.f32 %v3111, %v3330
    %v3332 = vpop.f32.mrb[0].mxu0
    %3333 = vmatprep.mubr.bf16.mxu0 0
    %3334 = vmatmul.mubr.bf16.gmra.mrb[0].mxu0 %v3157
    %v3335 = vpop.f32.mrb[0].mxu0
    %v3336 = vadd.f32 %v3111, %v3335
    %v3337 = vpop.f32.mrb[0].mxu0
    %v3338 = vpop.f32.mrb[0].mxu0
    %v3339 = vadd.f32 %v3111, %v3338
    %v3340 = vpop.f32.mrb[0].mxu0
    %3341 = vmatprep.mubr.bf16.mxu0 0
    %3342 = vmatmul.mubr.bf16.gmra.mrb[0].mxu0 %v3160
    %v3343 = vpop.f32.mrb[0].mxu0
    %v3344 = vadd.f32 %v3111, %v3343
    %v3345 = vpop.f32.mrb[0].mxu0
    %v3346 = vpop.f32.mrb[0].mxu0
    %v3347 = vadd.f32 %v3111, %v3346
    %v3348 = vpop.f32.mrb[0].mxu0
    %3349 = vmatprep.mubr.bf16.mxu0 0
    %3350 = vmatmul.mubr.bf16.gmra.mrb[0].mxu0 %v3163
    %v3351 = vpop.f32.mrb[0].mxu0
    %v3352 = vadd.f32 %v3111, %v3351
    %v3353 = vpop.f32.mrb[0].mxu0
    %v3354 = vpop.f32.mrb[0].mxu0
    %v3355 = vadd.f32 %v3111, %v3354
    %v3356 = vpop.f32.mrb[0].mxu0
    %3357 = vmatprep.mubr.bf16.mxu0 0
    %3358 = vmatmul.mubr.bf16.gmra.mrb[0].mxu0 %v3166
    %v3359 = vpop.f32.mrb[0].mxu0
    %v3360 = vadd.f32 %v3111, %v3359
    %v3361 = vpop.f32.mrb[0].mxu0
    %v3362 = vpop.f32.mrb[0].mxu0
    %v3363 = vadd.f32 %v3111, %v3362
    %v3364 = vpop.f32.mrb[0].mxu0
    %3365 = vmatprep.mubr.bf16.mxu0 0
    %3366 = vmatmul.mubr.bf16.gmra.mrb[0].mxu0 %v3169
    %v3367 = vpop.f32.mrb[0].mxu0
    %v3368 = vadd.f32 %v3111, %v3367
    %v3369 = vpop.f32.mrb[0].mxu0
    %v3370 = vpop.f32.mrb[0].mxu0
    %v3371 = vadd.f32 %v3111, %v3370
    %v3372 = vpop.f32.mrb[0].mxu0
    %3373 = vmatprep.mubr.bf16.mxu0 0
    %3374 = vmatmul.mubr.bf16.gmra.mrb[0].mxu0 %v3172
    %v3375 = vpop.f32.mrb[0].mxu0
    %v3376 = vadd.f32 %v3111, %v3375
    %v3377 = vpop.f32.mrb[0].mxu0
    %v3378 = vpop.f32.mrb[0].mxu0
    %v3379 = vadd.f32 %v3111, %v3378
    %v3380 = vpop.f32.mrb[0].mxu0
    %3381 = vmatprep.mubr.bf16.mxu0 0
    %3382 = vmatmul.mubr.bf16.gmra.mrb[0].mxu0 %v3175
    %v3383 = vpop.f32.mrb[0].mxu0
    %v3384 = vadd.f32 %v3111, %v3383
    %v3385 = vpop.f32.mrb[0].mxu0
    %v3386 = vpop.f32.mrb[0].mxu0
    %v3387 = vadd.f32 %v3111, %v3386
    %v3388 = vpop.f32.mrb[0].mxu0
    %3389 = vmatprep.mubr.bf16.mxu0 0
    %3390 = vmatmul.mubr.bf16.gmra.mrb[0].mxu0 %v3178
    %v3391 = vpop.f32.mrb[0].mxu0
    %v3392 = vadd.f32 %v3111, %v3391
    %v3393 = vpop.f32.mrb[0].mxu0
    %v3394 = vpop.f32.mrb[0].mxu0
    %v3395 = vadd.f32 %v3111, %v3394
    %v3396 = vpop.f32.mrb[0].mxu0
    %3397 = vmatprep.mubr.bf16.mxu0 0
    %3398 = vmatmul.mubr.bf16.gmra.mrb[0].mxu0 %v3181
    %v3399 = vpop.f32.mrb[0].mxu0
    %v3400 = vadd.f32 %v3111, %v3399
    %v3401 = vpop.f32.mrb[0].mxu0
    %v3402 = vpop.f32.mrb[0].mxu0
    %v3403 = vadd.f32 %v3111, %v3402
    %v3404 = vpop.f32.mrb[0].mxu0
    %3405 = vmatprep.mubr.bf16.mxu0 0
    %3406 = vmatmul.mubr.bf16.gmra.mrb[0].mxu0 %v3184
    %v3407 = vpop.f32.mrb[0].mxu0
    %v3408 = vadd.f32 %v3111, %v3407
    %v3409 = vpop.f32.mrb[0].mxu0
    %v3410 = vpop.f32.mrb[0].mxu0
    %v3411 = vadd.f32 %v3111, %v3410
    %v3412 = vpop.f32.mrb[0].mxu0
    %3413 = vmatprep.mubr.bf16.mxu0 0
    %3414 = vmatmul.mubr.bf16.gmra.mrb[0].mxu0 %v3187
    %v3415 = vpop.f32.mrb[0].mxu0
    %v3416 = vadd.f32 %v3111, %v3415
    %v3417 = vpop.f32.mrb[0].mxu0
    %v3418 = vpop.f32.mrb[0].mxu0
    %v3419 = vadd.f32 %v3111, %v3418
    %v3420 = vpop.f32.mrb[0].mxu0
    %3421 = vmatprep.mubr.bf16.mxu0 0
    %3422 = vmatmul.mubr.bf16.gmra.mrb[0].mxu0 %v3190
    %v3423 = vpop.f32.mrb[0].mxu0
    %v3424 = vadd.f32 %v3111, %v3423
    %v3425 = vpop.f32.mrb[0].mxu0
    %v3426 = vpop.f32.mrb[0].mxu0
    %v3427 = vadd.f32 %v3111, %v3426
    %v3428 = vpop.f32.mrb[0].mxu0
    %3429 = vmatprep.mubr.bf16.mxu0 0
    %3430 = vmatmul.mubr.bf16.gmra.mrb[0].mxu0 %v3193
    %v3431 = vpop.f32.mrb[0].mxu0
    %v3432 = vadd.f32 %v3111, %v3431
    %v3433 = vpop.f32.mrb[0].mxu0
    %v3434 = vpop.f32.mrb[0].mxu0
    %v3435 = vadd.f32 %v3111, %v3434
    %v3436 = vpop.f32.mrb[0].mxu0
    %3437 = vmatprep.mubr.bf16.mxu0 0
    %3438 = vmatmul.mubr.bf16.gmra.mrb[0].mxu0 %v3196
    %v3439 = vpop.f32.mrb[0].mxu0
    %v3440 = vadd.f32 %v3111, %v3439
    %v3441 = vpop.f32.mrb[0].mxu0
    %v3442 = vpop.f32.mrb[0].mxu0
    %v3443 = vadd.f32 %v3111, %v3442
    %v3444 = vpop.f32.mrb[0].mxu0
    %3445 = vmatprep.mubr.bf16.mxu0 0
    %3446 = vmatmul.mubr.bf16.gmra.mrb[0].mxu0 %v3199
    %v3447 = vpop.f32.mrb[0].mxu0
    %v3448 = vadd.f32 %v3111, %v3447
    %v3449 = vpop.f32.mrb[0].mxu0
    %v3450 = vpop.f32.mrb[0].mxu0
    %v3451 = vadd.f32 %v3111, %v3450
    %v3452 = vpop.f32.mrb[0].mxu0
    %3453 = vmatprep.mubr.bf16.mxu0 0
    %3454 = vmatmul.mubr.bf16.gmra.mrb[0].mxu0 %v3202
    %v3455 = vpop.f32.mrb[0].mxu0
    %v3456 = vadd.f32 %v3111, %v3455
    %v3457 = vpop.f32.mrb[0].mxu0
    %v3458 = vpop.f32.mrb[0].mxu0
    %v3459 = vadd.f32 %v3111, %v3458
    %v3460 = vpop.f32.mrb[0].mxu0
    %3461 = vmatprep.mubr.bf16.mxu0 0
    %3462 = vmatmul.mubr.bf16.gmra.mrb[0].mxu0 %v3205
    %v3463 = vpop.f32.mrb[0].mxu0
    %v3464 = vadd.f32 %v3111, %v3463
    %v3465 = vpop.f32.mrb[0].mxu0
    %v3466 = vpop.f32.mrb[0].mxu0
    %v3467 = vadd.f32 %v3111, %v3466
    %v3468 = vpop.f32.mrb[0].mxu0
    %3469 = vmatprep.mubr.bf16.mxu0 0
    %3470 = vmatmul.mubr.bf16.gmra.mrb[0].mxu0 %v3208
    %v3471 = vpop.f32.mrb[0].mxu0
    %v3472 = vadd.f32 %v3111, %v3471
    %v3473 = vpop.f32.mrb[0].mxu0
    %v3474 = vpop.f32.mrb[0].mxu0
    %v3475 = vadd.f32 %v3111, %v3474
    %v3476 = vpop.f32.mrb[0].mxu0
    %3477 = vmatprep.mubr.bf16.mxu0 0
    %3478 = vmatmul.mubr.bf16.gmra.mrb[0].mxu0 %v3211
    %v3479 = vpop.f32.mrb[0].mxu0
    %v3480 = vadd.f32 %v3111, %v3479
    %v3481 = vpop.f32.mrb[0].mxu0
    %v3482 = vpop.f32.mrb[0].mxu0
    %v3483 = vadd.f32 %v3111, %v3482
    %v3484 = vpop.f32.mrb[0].mxu0
    %3485 = vmatprep.mubr.bf16.mxu0 0
    %3486 = vmatmul.mubr.bf16.gmra.mrb[0].mxu0 %v3214
    %v3487 = vpop.f32.mrb[0].mxu0
    %v3488 = vadd.f32 %v3111, %v3487
    %v3489 = vpop.f32.mrb[0].mxu0
    %v3490 = vpop.f32.mrb[0].mxu0
    %v3491 = vadd.f32 %v3111, %v3490
    %v3492 = vpop.f32.mrb[0].mxu0
    %3493 = vmatprep.mubr.bf16.mxu0 0
    %3494 = vmatmul.mubr.bf16.gmra.mrb[0].mxu0 %v3217
    %v3495 = vpop.f32.mrb[0].mxu0
    %v3496 = vadd.f32 %v3111, %v3495
    %v3497 = vpop.f32.mrb[0].mxu0
    %v3498 = vpop.f32.mrb[0].mxu0
    %v3499 = vadd.f32 %v3111, %v3498
    %v3500 = vpop.f32.mrb[0].mxu0
    %3501 = vmatprep.mubr.bf16.mxu0 0
    %3502 = vmatmul.mubr.bf16.gmra.mrb[0].mxu0 %v3220
    %v3503 = vpop.f32.mrb[0].mxu0
    %v3504 = vadd.f32 %v3111, %v3503
    %v3505 = vpop.f32.mrb[0].mxu0
    %v3506 = vpop.f32.mrb[0].mxu0
    %v3507 = vadd.f32 %v3111, %v3506
    %v3508 = vpop.f32.mrb[0].mxu0
    %3509 = vmatprep.mubr.bf16.mxu0 0
    %3510 = vmatmul.mubr.bf16.gmra.mrb[0].mxu0 %v3223
    %v3511 = vpop.f32.mrb[0].mxu0
    %v3512 = vadd.f32 %v3111, %v3511
    %v3513 = vpop.f32.mrb[0].mxu0
    %v3514 = vpop.f32.mrb[0].mxu0
    %v3515 = vadd.f32 %v3111, %v3514
    %v3516 = vpop.f32.mrb[0].mxu0
    %3517 = vdwg.mxu0
    %v3518 = vmax.f32 %v3264, 0.0
    %v3519 = vmax.f32 %v3267, 0.0
    %v3520 = vmax.f32 %v3272, 0.0
    %v3521 = vmax.f32 %v3275, 0.0
    %v3522 = vmax.f32 %v3280, 0.0
    %v3523 = vmax.f32 %v3283, 0.0
    %v3524 = vmax.f32 %v3288, 0.0
    %v3525 = vmax.f32 %v3291, 0.0
    %v3526 = vmax.f32 %v3296, 0.0
    %v3527 = vmax.f32 %v3299, 0.0
    %v3528 = vmax.f32 %v3304, 0.0
    %v3529 = vmax.f32 %v3307, 0.0
    %v3530 = vmax.f32 %v3312, 0.0
    %v3531 = vmax.f32 %v3315, 0.0
    %v3532 = vmax.f32 %v3320, 0.0
    %v3533 = vmax.f32 %v3323, 0.0
    %v3534 = vmax.f32 %v3328, 0.0
    %v3535 = vmax.f32 %v3331, 0.0
    %v3536 = vmax.f32 %v3336, 0.0
    %v3537 = vmax.f32 %v3339, 0.0
    %v3538 = vmax.f32 %v3344, 0.0
    %v3539 = vmax.f32 %v3347, 0.0
    %v3540 = vmax.f32 %v3352, 0.0
    %v3541 = vmax.f32 %v3355, 0.0
    %v3542 = vmax.f32 %v3360, 0.0
    %v3543 = vmax.f32 %v3363, 0.0
    %v3544 = vmax.f32 %v3368, 0.0
    %v3545 = vmax.f32 %v3371, 0.0
    %v3546 = vmax.f32 %v3376, 0.0
    %v3547 = vmax.f32 %v3379, 0.0
    %v3548 = vmax.f32 %v3384, 0.0
    %v3549 = vmax.f32 %v3387, 0.0
    %v3550 = vmax.f32 %v3392, 0.0
    %v3551 = vmax.f32 %v3395, 0.0
    %v3552 = vmax.f32 %v3400, 0.0
    %v3553 = vmax.f32 %v3403, 0.0
    %v3554 = vmax.f32 %v3408, 0.0
    %v3555 = vmax.f32 %v3411, 0.0
    %v3556 = vmax.f32 %v3416, 0.0
    %v3557 = vmax.f32 %v3419, 0.0
    %v3558 = vmax.f32 %v3424, 0.0
    %v3559 = vmax.f32 %v3427, 0.0
    %v3560 = vmax.f32 %v3432, 0.0
    %v3561 = vmax.f32 %v3435, 0.0
    %v3562 = vmax.f32 %v3440, 0.0
    %v3563 = vmax.f32 %v3443, 0.0
    %v3564 = vmax.f32 %v3448, 0.0
    %v3565 = vmax.f32 %v3451, 0.0
    %v3566 = vmax.f32 %v3456, 0.0
    %v3567 = vmax.f32 %v3459, 0.0
    %v3568 = vmax.f32 %v3464, 0.0
    %v3569 = vmax.f32 %v3467, 0.0
    %v3570 = vmax.f32 %v3472, 0.0
    %v3571 = vmax.f32 %v3475, 0.0
    %v3572 = vmax.f32 %v3480, 0.0
    %v3573 = vmax.f32 %v3483, 0.0
    %v3574 = vmax.f32 %v3488, 0.0
    %v3575 = vmax.f32 %v3491, 0.0
    %v3576 = vmax.f32 %v3496, 0.0
    %v3577 = vmax.f32 %v3499, 0.0
    %v3578 = vmax.f32 %v3504, 0.0
    %v3579 = vmax.f32 %v3507, 0.0
    %v3580 = vmax.f32 %v3512, 0.0
    %v3581 = vmax.f32 %v3515, 0.0
    %v3582 = vpack.c.bf16 %v3519, %v3518
    %v3583 = vpack.c.bf16 %v3521, %v3520
    %v3584 = vpack.c.bf16 %v3523, %v3522
    %v3585 = vpack.c.bf16 %v3525, %v3524
    %v3586 = vpack.c.bf16 %v3527, %v3526
    %v3587 = vpack.c.bf16 %v3529, %v3528
    %v3588 = vpack.c.bf16 %v3531, %v3530
    %v3589 = vpack.c.bf16 %v3533, %v3532
    %v3590 = vpack.c.bf16 %v3535, %v3534
    %v3591 = vpack.c.bf16 %v3537, %v3536
    %v3592 = vpack.c.bf16 %v3539, %v3538
    %v3593 = vpack.c.bf16 %v3541, %v3540
    %v3594 = vpack.c.bf16 %v3543, %v3542
    %v3595 = vpack.c.bf16 %v3545, %v3544
    %v3596 = vpack.c.bf16 %v3547, %v3546
    %v3597 = vpack.c.bf16 %v3549, %v3548
    %v3598 = vpack.c.bf16 %v3551, %v3550
    %v3599 = vpack.c.bf16 %v3553, %v3552
    %v3600 = vpack.c.bf16 %v3555, %v3554
    %v3601 = vpack.c.bf16 %v3557, %v3556
    %v3602 = vpack.c.bf16 %v3559, %v3558
    %v3603 = vpack.c.bf16 %v3561, %v3560
    %v3604 = vpack.c.bf16 %v3563, %v3562
    %v3605 = vpack.c.bf16 %v3565, %v3564
    %v3606 = vpack.c.bf16 %v3567, %v3566
    %v3607 = vpack.c.bf16 %v3569, %v3568
    %v3608 = vpack.c.bf16 %v3571, %v3570
    %v3609 = vpack.c.bf16 %v3573, %v3572
    %v3610 = vpack.c.bf16 %v3575, %v3574
    %v3611 = vpack.c.bf16 %v3577, %v3576
    %v3612 = vpack.c.bf16 %v3579, %v3578
    %v3613 = vpack.c.bf16 %v3581, %v3580
    %v3614 = vld [vmem:[%s5] sm:$0x3]
    %v3615 = vld [vmem:[%s6] sm:$0x1]
    %v3617 = vlaneseq
    %v3618 = vshrl.u32 %v3617, 7
    %v3619 = vsub.s32 0, %v3618
    %v3620 = vrot.slane %v3615, %v3619
    %v3623 = vsel %vm731, %v3582, 0
    %v3626 = vsel %vm731, %v3583, 0
    %v3629 = vsel %vm731, %v3584, 0
    %v3632 = vsel %vm731, %v3585, 0
    %v3635 = vsel %vm731, %v3586, 0
    %v3638 = vsel %vm731, %v3587, 0
    %v3641 = vsel %vm731, %v3588, 0
    %v3644 = vsel %vm731, %v3589, 0
    %v3647 = vsel %vm731, %v3590, 0
    %v3650 = vsel %vm731, %v3591, 0
    %v3653 = vsel %vm731, %v3592, 0
    %v3656 = vsel %vm731, %v3593, 0
    %v3659 = vsel %vm731, %v3594, 0
    %v3662 = vsel %vm731, %v3595, 0
    %v3665 = vsel %vm731, %v3596, 0
    %v3668 = vsel %vm731, %v3597, 0
    %v3671 = vsel %vm731, %v3598, 0
    %v3674 = vsel %vm731, %v3599, 0
    %v3677 = vsel %vm731, %v3600, 0
    %v3680 = vsel %vm731, %v3601, 0
    %v3683 = vsel %vm731, %v3602, 0
    %v3686 = vsel %vm731, %v3603, 0
    %v3689 = vsel %vm731, %v3604, 0
    %v3692 = vsel %vm731, %v3605, 0
    %v3695 = vsel %vm731, %v3606, 0
    %v3698 = vsel %vm731, %v3607, 0
    %v3701 = vsel %vm731, %v3608, 0
    %v3704 = vsel %vm731, %v3609, 0
    %v3707 = vsel %vm731, %v3610, 0
    %v3710 = vsel %vm731, %v3611, 0
    %v3713 = vsel %vm731, %v3612, 0
    %v3716 = vsel %vm731, %v3613, 0
    %v3719 = vsel %vm3225, %v3614, 0
    %3721 = vmatprep.subr.bf16.mxu0 0
    %3722 = vmatpush1.bf16.msra.mxu0 %v3719
    %3723 = vmatprep.subr.bf16.mxu0 0
    %3724 = vmatpush1.bf16.msra.mxu0 0
    %3725 = vmatprep.subr.bf16.mxu0 0
    %3726 = vmatpush1.bf16.msra.mxu0 0
    %3727 = vmatprep.subr.bf16.mxu0 0
    %3728 = vmatpush1.bf16.msra.mxu0 0
    %3729 = vmatprep.subr.bf16.mxu0 0
    %3730 = vmatpush1.bf16.msra.mxu0 0
    %3731 = vmatprep.subr.bf16.mxu0 0
    %3732 = vmatpush1.bf16.msra.mxu0 0
    %3733 = vmatprep.subr.bf16.mxu0 0
    %3734 = vmatpush1.bf16.msra.mxu0 0
    %3735 = vmatprep.subr.bf16.mxu0 0
    %3736 = vmatpush1.bf16.msra.mxu0 0
    %3737 = vmatprep.subr.bf16.mxu0 0
    %3738 = vmatpush1.bf16.msra.mxu0 0
    %3739 = vmatprep.subr.bf16.mxu0 0
    %3740 = vmatpush1.bf16.msra.mxu0 0
    %3741 = vmatprep.subr.bf16.mxu0 0
    %3742 = vmatpush1.bf16.msra.mxu0 0
    %3743 = vmatprep.subr.bf16.mxu0 0
    %3744 = vmatpush1.bf16.msra.mxu0 0
    %3745 = vmatprep.subr.bf16.mxu0 0
    %3746 = vmatpush1.bf16.msra.mxu0 0
    %3747 = vmatprep.subr.bf16.mxu0 0
    %3748 = vmatpush1.bf16.msra.mxu0 0
    %3749 = vmatprep.subr.bf16.mxu0 0
    %3750 = vmatpush1.bf16.msra.mxu0 0
    %3751 = vmatprep.subr.bf16.mxu0 0
    %3752 = vmatpush1.bf16.msra.mxu0 0
    %3753 = vmatprep.mubr.bf16.mxu0 0
    %3754 = vmatmul.mubr.bf16.gmra.mrb[0].mxu0 %v3623
    %v3755 = vpop.f32.mrb[0].mxu0
    %v3756 = vadd.f32 %v3620, %v3755
    %v3757 = vpop.f32.mrb[0].mxu0
    %v3758 = vpop.f32.mrb[0].mxu0
    %v3759 = vadd.f32 %v3620, %v3758
    %v3760 = vpop.f32.mrb[0].mxu0
    %3761 = vmatprep.mubr.bf16.mxu0 0
    %3762 = vmatmul.mubr.bf16.gmra.mrb[0].mxu0 %v3626
    %v3763 = vpop.f32.mrb[0].mxu0
    %v3764 = vadd.f32 %v3620, %v3763
    %v3765 = vpop.f32.mrb[0].mxu0
    %v3766 = vpop.f32.mrb[0].mxu0
    %v3767 = vadd.f32 %v3620, %v3766
    %v3768 = vpop.f32.mrb[0].mxu0
    %3769 = vmatprep.mubr.bf16.mxu0 0
    %3770 = vmatmul.mubr.bf16.gmra.mrb[0].mxu0 %v3629
    %v3771 = vpop.f32.mrb[0].mxu0
    %v3772 = vadd.f32 %v3620, %v3771
    %v3773 = vpop.f32.mrb[0].mxu0
    %v3774 = vpop.f32.mrb[0].mxu0
    %v3775 = vadd.f32 %v3620, %v3774
    %v3776 = vpop.f32.mrb[0].mxu0
    %3777 = vmatprep.mubr.bf16.mxu0 0
    %3778 = vmatmul.mubr.bf16.gmra.mrb[0].mxu0 %v3632
    %v3779 = vpop.f32.mrb[0].mxu0
    %v3780 = vadd.f32 %v3620, %v3779
    %v3781 = vpop.f32.mrb[0].mxu0
    %v3782 = vpop.f32.mrb[0].mxu0
    %v3783 = vadd.f32 %v3620, %v3782
    %v3784 = vpop.f32.mrb[0].mxu0
    %3785 = vmatprep.mubr.bf16.mxu0 0
    %3786 = vmatmul.mubr.bf16.gmra.mrb[0].mxu0 %v3635
    %v3787 = vpop.f32.mrb[0].mxu0
    %v3788 = vadd.f32 %v3620, %v3787
    %v3789 = vpop.f32.mrb[0].mxu0
    %v3790 = vpop.f32.mrb[0].mxu0
    %v3791 = vadd.f32 %v3620, %v3790
    %v3792 = vpop.f32.mrb[0].mxu0
    %3793 = vmatprep.mubr.bf16.mxu0 0
    %3794 = vmatmul.mubr.bf16.gmra.mrb[0].mxu0 %v3638
    %v3795 = vpop.f32.mrb[0].mxu0
    %v3796 = vadd.f32 %v3620, %v3795
    %v3797 = vpop.f32.mrb[0].mxu0
    %v3798 = vpop.f32.mrb[0].mxu0
    %v3799 = vadd.f32 %v3620, %v3798
    %v3800 = vpop.f32.mrb[0].mxu0
    %3801 = vmatprep.mubr.bf16.mxu0 0
    %3802 = vmatmul.mubr.bf16.gmra.mrb[0].mxu0 %v3641
    %v3803 = vpop.f32.mrb[0].mxu0
    %v3804 = vadd.f32 %v3620, %v3803
    %v3805 = vpop.f32.mrb[0].mxu0
    %v3806 = vpop.f32.mrb[0].mxu0
    %v3807 = vadd.f32 %v3620, %v3806
    %v3808 = vpop.f32.mrb[0].mxu0
    %3809 = vmatprep.mubr.bf16.mxu0 0
    %3810 = vmatmul.mubr.bf16.gmra.mrb[0].mxu0 %v3644
    %v3811 = vpop.f32.mrb[0].mxu0
    %v3812 = vadd.f32 %v3620, %v3811
    %v3813 = vpop.f32.mrb[0].mxu0
    %v3814 = vpop.f32.mrb[0].mxu0
    %v3815 = vadd.f32 %v3620, %v3814
    %v3816 = vpop.f32.mrb[0].mxu0
    %3817 = vmatprep.mubr.bf16.mxu0 0
    %3818 = vmatmul.mubr.bf16.gmra.mrb[0].mxu0 %v3647
    %v3819 = vpop.f32.mrb[0].mxu0
    %v3820 = vadd.f32 %v3620, %v3819
    %v3821 = vpop.f32.mrb[0].mxu0
    %v3822 = vpop.f32.mrb[0].mxu0
    %v3823 = vadd.f32 %v3620, %v3822
    %v3824 = vpop.f32.mrb[0].mxu0
    %3825 = vmatprep.mubr.bf16.mxu0 0
    %3826 = vmatmul.mubr.bf16.gmra.mrb[0].mxu0 %v3650
    %v3827 = vpop.f32.mrb[0].mxu0
    %v3828 = vadd.f32 %v3620, %v3827
    %v3829 = vpop.f32.mrb[0].mxu0
    %v3830 = vpop.f32.mrb[0].mxu0
    %v3831 = vadd.f32 %v3620, %v3830
    %v3832 = vpop.f32.mrb[0].mxu0
    %3833 = vmatprep.mubr.bf16.mxu0 0
    %3834 = vmatmul.mubr.bf16.gmra.mrb[0].mxu0 %v3653
    %v3835 = vpop.f32.mrb[0].mxu0
    %v3836 = vadd.f32 %v3620, %v3835
    %v3837 = vpop.f32.mrb[0].mxu0
    %v3838 = vpop.f32.mrb[0].mxu0
    %v3839 = vadd.f32 %v3620, %v3838
    %v3840 = vpop.f32.mrb[0].mxu0
    %3841 = vmatprep.mubr.bf16.mxu0 0
    %3842 = vmatmul.mubr.bf16.gmra.mrb[0].mxu0 %v3656
    %v3843 = vpop.f32.mrb[0].mxu0
    %v3844 = vadd.f32 %v3620, %v3843
    %v3845 = vpop.f32.mrb[0].mxu0
    %v3846 = vpop.f32.mrb[0].mxu0
    %v3847 = vadd.f32 %v3620, %v3846
    %v3848 = vpop.f32.mrb[0].mxu0
    %3849 = vmatprep.mubr.bf16.mxu0 0
    %3850 = vmatmul.mubr.bf16.gmra.mrb[0].mxu0 %v3659
    %v3851 = vpop.f32.mrb[0].mxu0
    %v3852 = vadd.f32 %v3620, %v3851
    %v3853 = vpop.f32.mrb[0].mxu0
    %v3854 = vpop.f32.mrb[0].mxu0
    %v3855 = vadd.f32 %v3620, %v3854
    %v3856 = vpop.f32.mrb[0].mxu0
    %3857 = vmatprep.mubr.bf16.mxu0 0
    %3858 = vmatmul.mubr.bf16.gmra.mrb[0].mxu0 %v3662
    %v3859 = vpop.f32.mrb[0].mxu0
    %v3860 = vadd.f32 %v3620, %v3859
    %v3861 = vpop.f32.mrb[0].mxu0
    %v3862 = vpop.f32.mrb[0].mxu0
    %v3863 = vadd.f32 %v3620, %v3862
    %v3864 = vpop.f32.mrb[0].mxu0
    %3865 = vmatprep.mubr.bf16.mxu0 0
    %3866 = vmatmul.mubr.bf16.gmra.mrb[0].mxu0 %v3665
    %v3867 = vpop.f32.mrb[0].mxu0
    %v3868 = vadd.f32 %v3620, %v3867
    %v3869 = vpop.f32.mrb[0].mxu0
    %v3870 = vpop.f32.mrb[0].mxu0
    %v3871 = vadd.f32 %v3620, %v3870
    %v3872 = vpop.f32.mrb[0].mxu0
    %3873 = vmatprep.mubr.bf16.mxu0 0
    %3874 = vmatmul.mubr.bf16.gmra.mrb[0].mxu0 %v3668
    %v3875 = vpop.f32.mrb[0].mxu0
    %v3876 = vadd.f32 %v3620, %v3875
    %v3877 = vpop.f32.mrb[0].mxu0
    %v3878 = vpop.f32.mrb[0].mxu0
    %v3879 = vadd.f32 %v3620, %v3878
    %v3880 = vpop.f32.mrb[0].mxu0
    %3881 = vmatprep.mubr.bf16.mxu0 0
    %3882 = vmatmul.mubr.bf16.gmra.mrb[0].mxu0 %v3671
    %v3883 = vpop.f32.mrb[0].mxu0
    %v3884 = vadd.f32 %v3620, %v3883
    %v3885 = vpop.f32.mrb[0].mxu0
    %v3886 = vpop.f32.mrb[0].mxu0
    %v3887 = vadd.f32 %v3620, %v3886
    %v3888 = vpop.f32.mrb[0].mxu0
    %3889 = vmatprep.mubr.bf16.mxu0 0
    %3890 = vmatmul.mubr.bf16.gmra.mrb[0].mxu0 %v3674
    %v3891 = vpop.f32.mrb[0].mxu0
    %v3892 = vadd.f32 %v3620, %v3891
    %v3893 = vpop.f32.mrb[0].mxu0
    %v3894 = vpop.f32.mrb[0].mxu0
    %v3895 = vadd.f32 %v3620, %v3894
    %v3896 = vpop.f32.mrb[0].mxu0
    %3897 = vmatprep.mubr.bf16.mxu0 0
    %3898 = vmatmul.mubr.bf16.gmra.mrb[0].mxu0 %v3677
    %v3899 = vpop.f32.mrb[0].mxu0
    %v3900 = vadd.f32 %v3620, %v3899
    %v3901 = vpop.f32.mrb[0].mxu0
    %v3902 = vpop.f32.mrb[0].mxu0
    %v3903 = vadd.f32 %v3620, %v3902
    %v3904 = vpop.f32.mrb[0].mxu0
    %3905 = vmatprep.mubr.bf16.mxu0 0
    %3906 = vmatmul.mubr.bf16.gmra.mrb[0].mxu0 %v3680
    %v3907 = vpop.f32.mrb[0].mxu0
    %v3908 = vadd.f32 %v3620, %v3907
    %v3909 = vpop.f32.mrb[0].mxu0
    %v3910 = vpop.f32.mrb[0].mxu0
    %v3911 = vadd.f32 %v3620, %v3910
    %v3912 = vpop.f32.mrb[0].mxu0
    %3913 = vmatprep.mubr.bf16.mxu0 0
    %3914 = vmatmul.mubr.bf16.gmra.mrb[0].mxu0 %v3683
    %v3915 = vpop.f32.mrb[0].mxu0
    %v3916 = vadd.f32 %v3620, %v3915
    %v3917 = vpop.f32.mrb[0].mxu0
    %v3918 = vpop.f32.mrb[0].mxu0
    %v3919 = vadd.f32 %v3620, %v3918
    %v3920 = vpop.f32.mrb[0].mxu0
    %3921 = vmatprep.mubr.bf16.mxu0 0
    %3922 = vmatmul.mubr.bf16.gmra.mrb[0].mxu0 %v3686
    %v3923 = vpop.f32.mrb[0].mxu0
    %v3924 = vadd.f32 %v3620, %v3923
    %v3925 = vpop.f32.mrb[0].mxu0
    %v3926 = vpop.f32.mrb[0].mxu0
    %v3927 = vadd.f32 %v3620, %v3926
    %v3928 = vpop.f32.mrb[0].mxu0
    %3929 = vmatprep.mubr.bf16.mxu0 0
    %3930 = vmatmul.mubr.bf16.gmra.mrb[0].mxu0 %v3689
    %v3931 = vpop.f32.mrb[0].mxu0
    %v3932 = vadd.f32 %v3620, %v3931
    %v3933 = vpop.f32.mrb[0].mxu0
    %v3934 = vpop.f32.mrb[0].mxu0
    %v3935 = vadd.f32 %v3620, %v3934
    %v3936 = vpop.f32.mrb[0].mxu0
    %3937 = vmatprep.mubr.bf16.mxu0 0
    %3938 = vmatmul.mubr.bf16.gmra.mrb[0].mxu0 %v3692
    %v3939 = vpop.f32.mrb[0].mxu0
    %v3940 = vadd.f32 %v3620, %v3939
    %v3941 = vpop.f32.mrb[0].mxu0
    %v3942 = vpop.f32.mrb[0].mxu0
    %v3943 = vadd.f32 %v3620, %v3942
    %v3944 = vpop.f32.mrb[0].mxu0
    %3945 = vmatprep.mubr.bf16.mxu0 0
    %3946 = vmatmul.mubr.bf16.gmra.mrb[0].mxu0 %v3695
    %v3947 = vpop.f32.mrb[0].mxu0
    %v3948 = vadd.f32 %v3620, %v3947
    %v3949 = vpop.f32.mrb[0].mxu0
    %v3950 = vpop.f32.mrb[0].mxu0
    %v3951 = vadd.f32 %v3620, %v3950
    %v3952 = vpop.f32.mrb[0].mxu0
    %3953 = vmatprep.mubr.bf16.mxu0 0
    %3954 = vmatmul.mubr.bf16.gmra.mrb[0].mxu0 %v3698
    %v3955 = vpop.f32.mrb[0].mxu0
    %v3956 = vadd.f32 %v3620, %v3955
    %v3957 = vpop.f32.mrb[0].mxu0
    %v3958 = vpop.f32.mrb[0].mxu0
    %v3959 = vadd.f32 %v3620, %v3958
    %v3960 = vpop.f32.mrb[0].mxu0
    %3961 = vmatprep.mubr.bf16.mxu0 0
    %3962 = vmatmul.mubr.bf16.gmra.mrb[0].mxu0 %v3701
    %v3963 = vpop.f32.mrb[0].mxu0
    %v3964 = vadd.f32 %v3620, %v3963
    %v3965 = vpop.f32.mrb[0].mxu0
    %v3966 = vpop.f32.mrb[0].mxu0
    %v3967 = vadd.f32 %v3620, %v3966
    %v3968 = vpop.f32.mrb[0].mxu0
    %3969 = vmatprep.mubr.bf16.mxu0 0
    %3970 = vmatmul.mubr.bf16.gmra.mrb[0].mxu0 %v3704
    %v3971 = vpop.f32.mrb[0].mxu0
    %v3972 = vadd.f32 %v3620, %v3971
    %v3973 = vpop.f32.mrb[0].mxu0
    %v3974 = vpop.f32.mrb[0].mxu0
    %v3975 = vadd.f32 %v3620, %v3974
    %v3976 = vpop.f32.mrb[0].mxu0
    %3977 = vmatprep.mubr.bf16.mxu0 0
    %3978 = vmatmul.mubr.bf16.gmra.mrb[0].mxu0 %v3707
    %v3979 = vpop.f32.mrb[0].mxu0
    %v3980 = vadd.f32 %v3620, %v3979
    %v3981 = vpop.f32.mrb[0].mxu0
    %v3982 = vpop.f32.mrb[0].mxu0
    %v3983 = vadd.f32 %v3620, %v3982
    %v3984 = vpop.f32.mrb[0].mxu0
    %3985 = vmatprep.mubr.bf16.mxu0 0
    %3986 = vmatmul.mubr.bf16.gmra.mrb[0].mxu0 %v3710
    %v3987 = vpop.f32.mrb[0].mxu0
    %v3988 = vadd.f32 %v3620, %v3987
    %v3989 = vpop.f32.mrb[0].mxu0
    %v3990 = vpop.f32.mrb[0].mxu0
    %v3991 = vadd.f32 %v3620, %v3990
    %v3992 = vpop.f32.mrb[0].mxu0
    %3993 = vmatprep.mubr.bf16.mxu0 0
    %3994 = vmatmul.mubr.bf16.gmra.mrb[0].mxu0 %v3713
    %v3995 = vpop.f32.mrb[0].mxu0
    %v3996 = vadd.f32 %v3620, %v3995
    %v3997 = vpop.f32.mrb[0].mxu0
    %v3998 = vpop.f32.mrb[0].mxu0
    %v3999 = vadd.f32 %v3620, %v3998
    %v4000 = vpop.f32.mrb[0].mxu0
    %4001 = vmatprep.mubr.bf16.mxu0 0
    %4002 = vmatmul.mubr.bf16.gmra.mrb[0].mxu0 %v3716
    %v4003 = vpop.f32.mrb[0].mxu0
    %v4004 = vadd.f32 %v3620, %v4003
    %v4005 = vpop.f32.mrb[0].mxu0
    %v4006 = vpop.f32.mrb[0].mxu0
    %v4007 = vadd.f32 %v3620, %v4006
    %v4008 = vpop.f32.mrb[0].mxu0
    %4009 = vdwg.mxu0
    %v4010 = vunpack.c.l.bf16 %v42
    %v4011 = vunpack.c.l.bf16 %v43
    %v4012 = vunpack.c.l.bf16 %v44
    %v4013 = vunpack.c.l.bf16 %v45
    %v4014 = vunpack.c.l.bf16 %v46
    %v4015 = vunpack.c.l.bf16 %v47
    %v4016 = vunpack.c.l.bf16 %v48
    %v4017 = vunpack.c.l.bf16 %v49
    %v4018 = vunpack.c.l.bf16 %v50
    %v4019 = vunpack.c.l.bf16 %v51
    %v4020 = vunpack.c.l.bf16 %v52
    %v4021 = vunpack.c.l.bf16 %v53
    %v4022 = vunpack.c.l.bf16 %v54
    %v4023 = vunpack.c.l.bf16 %v55
    %v4024 = vunpack.c.l.bf16 %v56
    %v4025 = vunpack.c.l.bf16 %v57
    %v4026 = vunpack.c.l.bf16 %v58
    %v4027 = vunpack.c.l.bf16 %v59
    %v4028 = vunpack.c.l.bf16 %v60
    %v4029 = vunpack.c.l.bf16 %v61
    %v4030 = vunpack.c.l.bf16 %v62
    %v4031 = vunpack.c.l.bf16 %v63
    %v4032 = vunpack.c.l.bf16 %v64
    %v4033 = vunpack.c.l.bf16 %v65
    %v4034 = vunpack.c.l.bf16 %v66
    %v4035 = vunpack.c.l.bf16 %v67
    %v4036 = vunpack.c.l.bf16 %v68
    %v4037 = vunpack.c.l.bf16 %v69
    %v4038 = vunpack.c.l.bf16 %v70
    %v4039 = vunpack.c.l.bf16 %v71
    %v4040 = vunpack.c.l.bf16 %v72
    %v4041 = vunpack.c.l.bf16 %v73
    %v4042 = vunpack.c.l.bf16 %v74
    %v4043 = vunpack.c.l.bf16 %v75
    %v4044 = vunpack.c.l.bf16 %v76
    %v4045 = vunpack.c.l.bf16 %v77
    %v4046 = vunpack.c.l.bf16 %v78
    %v4047 = vunpack.c.l.bf16 %v79
    %v4048 = vunpack.c.l.bf16 %v80
    %v4049 = vunpack.c.l.bf16 %v81
    %v4050 = vunpack.c.l.bf16 %v82
    %v4051 = vunpack.c.l.bf16 %v83
    %v4052 = vunpack.c.l.bf16 %v84
    %v4053 = vunpack.c.l.bf16 %v85
    %v4054 = vunpack.c.l.bf16 %v86
    %v4055 = vunpack.c.l.bf16 %v87
    %v4056 = vunpack.c.l.bf16 %v88
    %v4057 = vunpack.c.l.bf16 %v89
    %v4058 = vunpack.c.l.bf16 %v90
    %v4059 = vunpack.c.l.bf16 %v91
    %v4060 = vunpack.c.l.bf16 %v92
    %v4061 = vunpack.c.l.bf16 %v93
    %v4062 = vunpack.c.l.bf16 %v94
    %v4063 = vunpack.c.l.bf16 %v95
    %v4064 = vunpack.c.l.bf16 %v96
    %v4065 = vunpack.c.l.bf16 %v97
    %v4066 = vunpack.c.l.bf16 %v98
    %v4067 = vunpack.c.l.bf16 %v99
    %v4068 = vunpack.c.l.bf16 %v100
    %v4069 = vunpack.c.l.bf16 %v101
    %v4070 = vunpack.c.l.bf16 %v102
    %v4071 = vunpack.c.l.bf16 %v103
    %v4072 = vunpack.c.l.bf16 %v104
    %v4073 = vunpack.c.l.bf16 %v105
    %v4074 = vadd.f32 %v3756, %v4010
    %v4075 = vadd.f32 %v3759, %v4011
    %v4076 = vadd.f32 %v3764, %v4012
    %v4077 = vadd.f32 %v3767, %v4013
    %v4078 = vadd.f32 %v3772, %v4014
    %v4079 = vadd.f32 %v3775, %v4015
    %v4080 = vadd.f32 %v3780, %v4016
    %v4081 = vadd.f32 %v3783, %v4017
    %v4082 = vadd.f32 %v3788, %v4018
    %v4083 = vadd.f32 %v3791, %v4019
    %v4084 = vadd.f32 %v3796, %v4020
    %v4085 = vadd.f32 %v3799, %v4021
    %v4086 = vadd.f32 %v3804, %v4022
    %v4087 = vadd.f32 %v3807, %v4023
    %v4088 = vadd.f32 %v3812, %v4024
    %v4089 = vadd.f32 %v3815, %v4025
    %v4090 = vadd.f32 %v3820, %v4026
    %v4091 = vadd.f32 %v3823, %v4027
    %v4092 = vadd.f32 %v3828, %v4028
    %v4093 = vadd.f32 %v3831, %v4029
    %v4094 = vadd.f32 %v3836, %v4030
    %v4095 = vadd.f32 %v3839, %v4031
    %v4096 = vadd.f32 %v3844, %v4032
    %v4097 = vadd.f32 %v3847, %v4033
    %v4098 = vadd.f32 %v3852, %v4034
    %v4099 = vadd.f32 %v3855, %v4035
    %v4100 = vadd.f32 %v3860, %v4036
    %v4101 = vadd.f32 %v3863, %v4037
    %v4102 = vadd.f32 %v3868, %v4038
    %v4103 = vadd.f32 %v3871, %v4039
    %v4104 = vadd.f32 %v3876, %v4040
    %v4105 = vadd.f32 %v3879, %v4041
    %v4106 = vadd.f32 %v3884, %v4042
    %v4107 = vadd.f32 %v3887, %v4043
    %v4108 = vadd.f32 %v3892, %v4044
    %v4109 = vadd.f32 %v3895, %v4045
    %v4110 = vadd.f32 %v3900, %v4046
    %v4111 = vadd.f32 %v3903, %v4047
    %v4112 = vadd.f32 %v3908, %v4048
    %v4113 = vadd.f32 %v3911, %v4049
    %v4114 = vadd.f32 %v3916, %v4050
    %v4115 = vadd.f32 %v3919, %v4051
    %v4116 = vadd.f32 %v3924, %v4052
    %v4117 = vadd.f32 %v3927, %v4053
    %v4118 = vadd.f32 %v3932, %v4054
    %v4119 = vadd.f32 %v3935, %v4055
    %v4120 = vadd.f32 %v3940, %v4056
    %v4121 = vadd.f32 %v3943, %v4057
    %v4122 = vadd.f32 %v3948, %v4058
    %v4123 = vadd.f32 %v3951, %v4059
    %v4124 = vadd.f32 %v3956, %v4060
    %v4125 = vadd.f32 %v3959, %v4061
    %v4126 = vadd.f32 %v3964, %v4062
    %v4127 = vadd.f32 %v3967, %v4063
    %v4128 = vadd.f32 %v3972, %v4064
    %v4129 = vadd.f32 %v3975, %v4065
    %v4130 = vadd.f32 %v3980, %v4066
    %v4131 = vadd.f32 %v3983, %v4067
    %v4132 = vadd.f32 %v3988, %v4068
    %v4133 = vadd.f32 %v3991, %v4069
    %v4134 = vadd.f32 %v3996, %v4070
    %v4135 = vadd.f32 %v3999, %v4071
    %v4136 = vadd.f32 %v4004, %v4072
    %v4137 = vadd.f32 %v4007, %v4073
    %v4138 = vmax.f32 %v4074, 0.0
    %v4139 = vmax.f32 %v4075, 0.0
    %v4140 = vmax.f32 %v4076, 0.0
    %v4141 = vmax.f32 %v4077, 0.0
    %v4142 = vmax.f32 %v4078, 0.0
    %v4143 = vmax.f32 %v4079, 0.0
    %v4144 = vmax.f32 %v4080, 0.0
    %v4145 = vmax.f32 %v4081, 0.0
    %v4146 = vmax.f32 %v4082, 0.0
    %v4147 = vmax.f32 %v4083, 0.0
    %v4148 = vmax.f32 %v4084, 0.0
    %v4149 = vmax.f32 %v4085, 0.0
    %v4150 = vmax.f32 %v4086, 0.0
    %v4151 = vmax.f32 %v4087, 0.0
    %v4152 = vmax.f32 %v4088, 0.0
    %v4153 = vmax.f32 %v4089, 0.0
    %v4154 = vmax.f32 %v4090, 0.0
    %v4155 = vmax.f32 %v4091, 0.0
    %v4156 = vmax.f32 %v4092, 0.0
    %v4157 = vmax.f32 %v4093, 0.0
    %v4158 = vmax.f32 %v4094, 0.0
    %v4159 = vmax.f32 %v4095, 0.0
    %v4160 = vmax.f32 %v4096, 0.0
    %v4161 = vmax.f32 %v4097, 0.0
    %v4162 = vmax.f32 %v4098, 0.0
    %v4163 = vmax.f32 %v4099, 0.0
    %v4164 = vmax.f32 %v4100, 0.0
    %v4165 = vmax.f32 %v4101, 0.0
    %v4166 = vmax.f32 %v4102, 0.0
    %v4167 = vmax.f32 %v4103, 0.0
    %v4168 = vmax.f32 %v4104, 0.0
    %v4169 = vmax.f32 %v4105, 0.0
    %v4170 = vmax.f32 %v4106, 0.0
    %v4171 = vmax.f32 %v4107, 0.0
    %v4172 = vmax.f32 %v4108, 0.0
    %v4173 = vmax.f32 %v4109, 0.0
    %v4174 = vmax.f32 %v4110, 0.0
    %v4175 = vmax.f32 %v4111, 0.0
    %v4176 = vmax.f32 %v4112, 0.0
    %v4177 = vmax.f32 %v4113, 0.0
    %v4178 = vmax.f32 %v4114, 0.0
    %v4179 = vmax.f32 %v4115, 0.0
    %v4180 = vmax.f32 %v4116, 0.0
    %v4181 = vmax.f32 %v4117, 0.0
    %v4182 = vmax.f32 %v4118, 0.0
    %v4183 = vmax.f32 %v4119, 0.0
    %v4184 = vmax.f32 %v4120, 0.0
    %v4185 = vmax.f32 %v4121, 0.0
    %v4186 = vmax.f32 %v4122, 0.0
    %v4187 = vmax.f32 %v4123, 0.0
    %v4188 = vmax.f32 %v4124, 0.0
    %v4189 = vmax.f32 %v4125, 0.0
    %v4190 = vmax.f32 %v4126, 0.0
    %v4191 = vmax.f32 %v4127, 0.0
    %v4192 = vmax.f32 %v4128, 0.0
    %v4193 = vmax.f32 %v4129, 0.0
    %v4194 = vmax.f32 %v4130, 0.0
    %v4195 = vmax.f32 %v4131, 0.0
    %v4196 = vmax.f32 %v4132, 0.0
    %v4197 = vmax.f32 %v4133, 0.0
    %v4198 = vmax.f32 %v4134, 0.0
    %v4199 = vmax.f32 %v4135, 0.0
    %v4200 = vmax.f32 %v4136, 0.0
    %v4201 = vmax.f32 %v4137, 0.0
    %v4202 = vpack.c.bf16 %v4139, %v4138
    %v4203 = vpack.c.bf16 %v4141, %v4140
    %v4204 = vpack.c.bf16 %v4143, %v4142
    %v4205 = vpack.c.bf16 %v4145, %v4144
    %v4206 = vpack.c.bf16 %v4147, %v4146
    %v4207 = vpack.c.bf16 %v4149, %v4148
    %v4208 = vpack.c.bf16 %v4151, %v4150
    %v4209 = vpack.c.bf16 %v4153, %v4152
    %v4210 = vpack.c.bf16 %v4155, %v4154
    %v4211 = vpack.c.bf16 %v4157, %v4156
    %v4212 = vpack.c.bf16 %v4159, %v4158
    %v4213 = vpack.c.bf16 %v4161, %v4160
    %v4214 = vpack.c.bf16 %v4163, %v4162
    %v4215 = vpack.c.bf16 %v4165, %v4164
    %v4216 = vpack.c.bf16 %v4167, %v4166
    %v4217 = vpack.c.bf16 %v4169, %v4168
    %v4218 = vpack.c.bf16 %v4171, %v4170
    %v4219 = vpack.c.bf16 %v4173, %v4172
    %v4220 = vpack.c.bf16 %v4175, %v4174
    %v4221 = vpack.c.bf16 %v4177, %v4176
    %v4222 = vpack.c.bf16 %v4179, %v4178
    %v4223 = vpack.c.bf16 %v4181, %v4180
    %v4224 = vpack.c.bf16 %v4183, %v4182
    %v4225 = vpack.c.bf16 %v4185, %v4184
    %v4226 = vpack.c.bf16 %v4187, %v4186
    %v4227 = vpack.c.bf16 %v4189, %v4188
    %v4228 = vpack.c.bf16 %v4191, %v4190
    %v4229 = vpack.c.bf16 %v4193, %v4192
    %v4230 = vpack.c.bf16 %v4195, %v4194
    %v4231 = vpack.c.bf16 %v4197, %v4196
    %v4232 = vpack.c.bf16 %v4199, %v4198
    %v4233 = vpack.c.bf16 %v4201, %v4200
    %v4266 = vunpack.c.l.b16 %v4202
    %v4267 = vunpack.c.h.b16 %v4202
    %v4268 = vunpack.c.l.b16 %v4203
    %v4269 = vunpack.c.h.b16 %v4203
    %v4270 = vunpack.c.l.b16 %v4204
    %v4271 = vunpack.c.h.b16 %v4204
    %v4272 = vunpack.c.l.b16 %v4205
    %v4273 = vunpack.c.h.b16 %v4205
    %v4274 = vunpack.c.l.b16 %v4206
    %v4275 = vunpack.c.h.b16 %v4206
    %v4276 = vunpack.c.l.b16 %v4207
    %v4277 = vunpack.c.h.b16 %v4207
    %v4278 = vunpack.c.l.b16 %v4208
    %v4279 = vunpack.c.h.b16 %v4208
    %v4280 = vunpack.c.l.b16 %v4209
    %v4281 = vunpack.c.h.b16 %v4209
    %v4282 = vunpack.c.l.b16 %v4210
    %v4283 = vunpack.c.h.b16 %v4210
    %v4284 = vunpack.c.l.b16 %v4211
    %v4285 = vunpack.c.h.b16 %v4211
    %v4286 = vunpack.c.l.b16 %v4212
    %v4287 = vunpack.c.h.b16 %v4212
    %v4288 = vunpack.c.l.b16 %v4213
    %v4289 = vunpack.c.h.b16 %v4213
    %v4290 = vunpack.c.l.b16 %v4214
    %v4291 = vunpack.c.h.b16 %v4214
    %v4292 = vunpack.c.l.b16 %v4215
    %v4293 = vunpack.c.h.b16 %v4215
    %v4294 = vunpack.c.l.b16 %v4216
    %v4295 = vunpack.c.h.b16 %v4216
    %v4296 = vunpack.c.l.b16 %v4217
    %v4297 = vunpack.c.h.b16 %v4217
    %v4298 = vunpack.c.l.b16 %v4218
    %v4299 = vunpack.c.h.b16 %v4218
    %v4300 = vunpack.c.l.b16 %v4219
    %v4301 = vunpack.c.h.b16 %v4219
    %v4302 = vunpack.c.l.b16 %v4220
    %v4303 = vunpack.c.h.b16 %v4220
    %v4304 = vunpack.c.l.b16 %v4221
    %v4305 = vunpack.c.h.b16 %v4221
    %v4306 = vunpack.c.l.b16 %v4222
    %v4307 = vunpack.c.h.b16 %v4222
    %v4308 = vunpack.c.l.b16 %v4223
    %v4309 = vunpack.c.h.b16 %v4223
    %v4310 = vunpack.c.l.b16 %v4224
    %v4311 = vunpack.c.h.b16 %v4224
    %v4312 = vunpack.c.l.b16 %v4225
    %v4313 = vunpack.c.h.b16 %v4225
    %v4314 = vunpack.c.l.b16 %v4226
    %v4315 = vunpack.c.h.b16 %v4226
    %v4316 = vunpack.c.l.b16 %v4227
    %v4317 = vunpack.c.h.b16 %v4227
    %v4318 = vunpack.c.l.b16 %v4228
    %v4319 = vunpack.c.h.b16 %v4228
    %v4320 = vunpack.c.l.b16 %v4229
    %v4321 = vunpack.c.h.b16 %v4229
    %v4322 = vunpack.c.l.b16 %v4230
    %v4323 = vunpack.c.h.b16 %v4230
    %v4324 = vunpack.c.l.b16 %v4231
    %v4325 = vunpack.c.h.b16 %v4231
    %v4326 = vunpack.c.l.b16 %v4232
    %v4327 = vunpack.c.h.b16 %v4232
    %v4328 = vunpack.c.l.b16 %v4233
    %v4329 = vunpack.c.h.b16 %v4233
    %v4330 = vpack.c.b16 %v4266, %v4266
    %v4331 = vpack.c.b16 %v4267, %v4267
    %v4332 = vpack.c.b16 %v4268, %v4268
    %v4333 = vpack.c.b16 %v4269, %v4269
    %v4334 = vpack.c.b16 %v4270, %v4270
    %v4335 = vpack.c.b16 %v4271, %v4271
    %v4336 = vpack.c.b16 %v4272, %v4272
    %v4337 = vpack.c.b16 %v4273, %v4273
    %v4338 = vpack.c.b16 %v4274, %v4274
    %v4339 = vpack.c.b16 %v4275, %v4275
    %v4340 = vpack.c.b16 %v4276, %v4276
    %v4341 = vpack.c.b16 %v4277, %v4277
    %v4342 = vpack.c.b16 %v4278, %v4278
    %v4343 = vpack.c.b16 %v4279, %v4279
    %v4344 = vpack.c.b16 %v4280, %v4280
    %v4345 = vpack.c.b16 %v4281, %v4281
    %v4346 = vpack.c.b16 %v4282, %v4282
    %v4347 = vpack.c.b16 %v4283, %v4283
    %v4348 = vpack.c.b16 %v4284, %v4284
    %v4349 = vpack.c.b16 %v4285, %v4285
    %v4350 = vpack.c.b16 %v4286, %v4286
    %v4351 = vpack.c.b16 %v4287, %v4287
    %v4352 = vpack.c.b16 %v4288, %v4288
    %v4353 = vpack.c.b16 %v4289, %v4289
    %v4354 = vpack.c.b16 %v4290, %v4290
    %v4355 = vpack.c.b16 %v4291, %v4291
    %v4356 = vpack.c.b16 %v4292, %v4292
    %v4357 = vpack.c.b16 %v4293, %v4293
    %v4358 = vpack.c.b16 %v4294, %v4294
    %v4359 = vpack.c.b16 %v4295, %v4295
    %v4360 = vpack.c.b16 %v4296, %v4296
    %v4361 = vpack.c.b16 %v4297, %v4297
    %v4362 = vpack.c.b16 %v4298, %v4298
    %v4363 = vpack.c.b16 %v4299, %v4299
    %v4364 = vpack.c.b16 %v4300, %v4300
    %v4365 = vpack.c.b16 %v4301, %v4301
    %v4366 = vpack.c.b16 %v4302, %v4302
    %v4367 = vpack.c.b16 %v4303, %v4303
    %v4368 = vpack.c.b16 %v4304, %v4304
    %v4369 = vpack.c.b16 %v4305, %v4305
    %v4370 = vpack.c.b16 %v4306, %v4306
    %v4371 = vpack.c.b16 %v4307, %v4307
    %v4372 = vpack.c.b16 %v4308, %v4308
    %v4373 = vpack.c.b16 %v4309, %v4309
    %v4374 = vpack.c.b16 %v4310, %v4310
    %v4375 = vpack.c.b16 %v4311, %v4311
    %v4376 = vpack.c.b16 %v4312, %v4312
    %v4377 = vpack.c.b16 %v4313, %v4313
    %v4378 = vpack.c.b16 %v4314, %v4314
    %v4379 = vpack.c.b16 %v4315, %v4315
    %v4380 = vpack.c.b16 %v4316, %v4316
    %v4381 = vpack.c.b16 %v4317, %v4317
    %v4382 = vpack.c.b16 %v4318, %v4318
    %v4383 = vpack.c.b16 %v4319, %v4319
    %v4384 = vpack.c.b16 %v4320, %v4320
    %v4385 = vpack.c.b16 %v4321, %v4321
    %v4386 = vpack.c.b16 %v4322, %v4322
    %v4387 = vpack.c.b16 %v4323, %v4323
    %v4388 = vpack.c.b16 %v4324, %v4324
    %v4389 = vpack.c.b16 %v4325, %v4325
    %v4390 = vpack.c.b16 %v4326, %v4326
    %v4391 = vpack.c.b16 %v4327, %v4327
    %v4392 = vpack.c.b16 %v4328, %v4328
    %v4393 = vpack.c.b16 %v4329, %v4329
    %vm4458 = vcmask 125952
    %4459 = vst.msk [vmem:[#allocation7] sm:$0xf] %vm4458, %v4330
    %4460 = vst.msk [vmem:[#allocation7 + $0x4] sm:$0xf] %vm4458, %v4331
    %4461 = vst.msk [vmem:[#allocation7 + $0x8] sm:$0xf] %vm4458, %v4332
    %4462 = vst.msk [vmem:[#allocation7 + $0xc] sm:$0xf] %vm4458, %v4333
    %4463 = vst.msk [vmem:[#allocation7 + $0x10] sm:$0xf] %vm4458, %v4334
    %4464 = vst.msk [vmem:[#allocation7 + $0x14] sm:$0xf] %vm4458, %v4335
    %4465 = vst.msk [vmem:[#allocation7 + $0x18] sm:$0xf] %vm4458, %v4336
    %4466 = vst.msk [vmem:[#allocation7 + $0x1c] sm:$0xf] %vm4458, %v4337
    %4467 = vst.msk [vmem:[#allocation7 + $0x20] sm:$0xf] %vm4458, %v4338
    %4468 = vst.msk [vmem:[#allocation7 + $0x24] sm:$0xf] %vm4458, %v4339
    %4469 = vst.msk [vmem:[#allocation7 + $0x28] sm:$0xf] %vm4458, %v4340
    %4470 = vst.msk [vmem:[#allocation7 + $0x2c] sm:$0xf] %vm4458, %v4341
    %4471 = vst.msk [vmem:[#allocation7 + $0x30] sm:$0xf] %vm4458, %v4342
    %4472 = vst.msk [vmem:[#allocation7 + $0x34] sm:$0xf] %vm4458, %v4343
    %4473 = vst.msk [vmem:[#allocation7 + $0x38] sm:$0xf] %vm4458, %v4344
    %4474 = vst.msk [vmem:[#allocation7 + $0x3c] sm:$0xf] %vm4458, %v4345
    %4475 = vst.msk [vmem:[#allocation7 + $0x40] sm:$0xf] %vm4458, %v4346
    %4476 = vst.msk [vmem:[#allocation7 + $0x44] sm:$0xf] %vm4458, %v4347
    %4477 = vst.msk [vmem:[#allocation7 + $0x48] sm:$0xf] %vm4458, %v4348
    %4478 = vst.msk [vmem:[#allocation7 + $0x4c] sm:$0xf] %vm4458, %v4349
    %4479 = vst.msk [vmem:[#allocation7 + $0x50] sm:$0xf] %vm4458, %v4350
    %4480 = vst.msk [vmem:[#allocation7 + $0x54] sm:$0xf] %vm4458, %v4351
    %4481 = vst.msk [vmem:[#allocation7 + $0x58] sm:$0xf] %vm4458, %v4352
    %4482 = vst.msk [vmem:[#allocation7 + $0x5c] sm:$0xf] %vm4458, %v4353
    %4483 = vst.msk [vmem:[#allocation7 + $0x60] sm:$0xf] %vm4458, %v4354
    %4484 = vst.msk [vmem:[#allocation7 + $0x64] sm:$0xf] %vm4458, %v4355
    %4485 = vst.msk [vmem:[#allocation7 + $0x68] sm:$0xf] %vm4458, %v4356
    %4486 = vst.msk [vmem:[#allocation7 + $0x6c] sm:$0xf] %vm4458, %v4357
    %4487 = vst.msk [vmem:[#allocation7 + $0x70] sm:$0xf] %vm4458, %v4358
    %4488 = vst.msk [vmem:[#allocation7 + $0x74] sm:$0xf] %vm4458, %v4359
    %4489 = vst.msk [vmem:[#allocation7 + $0x78] sm:$0xf] %vm4458, %v4360
    %4490 = vst.msk [vmem:[#allocation7 + $0x7c] sm:$0xf] %vm4458, %v4361
    %4491 = vst.msk [vmem:[#allocation7 + $0x80] sm:$0xf] %vm4458, %v4362
    %4492 = vst.msk [vmem:[#allocation7 + $0x84] sm:$0xf] %vm4458, %v4363
    %4493 = vst.msk [vmem:[#allocation7 + $0x88] sm:$0xf] %vm4458, %v4364
    %4494 = vst.msk [vmem:[#allocation7 + $0x8c] sm:$0xf] %vm4458, %v4365
    %4495 = vst.msk [vmem:[#allocation7 + $0x90] sm:$0xf] %vm4458, %v4366
    %4496 = vst.msk [vmem:[#allocation7 + $0x94] sm:$0xf] %vm4458, %v4367
    %4497 = vst.msk [vmem:[#allocation7 + $0x98] sm:$0xf] %vm4458, %v4368
    %4498 = vst.msk [vmem:[#allocation7 + $0x9c] sm:$0xf] %vm4458, %v4369
    %4499 = vst.msk [vmem:[#allocation7 + $0xa0] sm:$0xf] %vm4458, %v4370
    %4500 = vst.msk [vmem:[#allocation7 + $0xa4] sm:$0xf] %vm4458, %v4371
    %4501 = vst.msk [vmem:[#allocation7 + $0xa8] sm:$0xf] %vm4458, %v4372
    %4502 = vst.msk [vmem:[#allocation7 + $0xac] sm:$0xf] %vm4458, %v4373
    %4503 = vst.msk [vmem:[#allocation7 + $0xb0] sm:$0xf] %vm4458, %v4374
    %4504 = vst.msk [vmem:[#allocation7 + $0xb4] sm:$0xf] %vm4458, %v4375
    %4505 = vst.msk [vmem:[#allocation7 + $0xb8] sm:$0xf] %vm4458, %v4376
    %4506 = vst.msk [vmem:[#allocation7 + $0xbc] sm:$0xf] %vm4458, %v4377
    %4507 = vst.msk [vmem:[#allocation7 + $0xc0] sm:$0xf] %vm4458, %v4378
    %4508 = vst.msk [vmem:[#allocation7 + $0xc4] sm:$0xf] %vm4458, %v4379
    %4509 = vst.msk [vmem:[#allocation7 + $0xc8] sm:$0xf] %vm4458, %v4380
    %4510 = vst.msk [vmem:[#allocation7 + $0xcc] sm:$0xf] %vm4458, %v4381
    %4511 = vst.msk [vmem:[#allocation7 + $0xd0] sm:$0xf] %vm4458, %v4382
    %4512 = vst.msk [vmem:[#allocation7 + $0xd4] sm:$0xf] %vm4458, %v4383
    %4513 = vst.msk [vmem:[#allocation7 + $0xd8] sm:$0xf] %vm4458, %v4384
    %4514 = vst.msk [vmem:[#allocation7 + $0xdc] sm:$0xf] %vm4458, %v4385
    %4515 = vst.msk [vmem:[#allocation7 + $0xe0] sm:$0xf] %vm4458, %v4386
    %4516 = vst.msk [vmem:[#allocation7 + $0xe4] sm:$0xf] %vm4458, %v4387
    %4517 = vst.msk [vmem:[#allocation7 + $0xe8] sm:$0xf] %vm4458, %v4388
    %4518 = vst.msk [vmem:[#allocation7 + $0xec] sm:$0xf] %vm4458, %v4389
    %4519 = vst.msk [vmem:[#allocation7 + $0xf0] sm:$0xf] %vm4458, %v4390
    %4520 = vst.msk [vmem:[#allocation7 + $0xf4] sm:$0xf] %vm4458, %v4391
    %4521 = vst.msk [vmem:[#allocation7 + $0xf8] sm:$0xf] %vm4458, %v4392
    %4522 = vst.msk [vmem:[#allocation7 + $0xfc] sm:$0xf] %vm4458, %v4393
    // Predicated region
    $region34: #{tpu_custom_call.1} parent=1 // pred_check
      _
    $region35: #{tpu_custom_call.1} parent=1 // pred_check_branch
      %4524 = sbr.rel (0) target = $region37
    $region36: #{tpu_custom_call.1} parent=1 // pred_region
      %s4526 = ssub.s32 4096, 4096
      %4527 = vsyncadd [#allocation6], %s4526
      %s4528 = sshll.u32 [#allocation7], 4
      %s4529 = int_to_ptr.vmem [resolvable:$true] %s4528
      %4534 = dma.vmem_to_hbm [thread:$0]  %s4529, 4096, %s7, [#allocation6], 64, 64, 4
    $region37: #{tpu_custom_call.1} parent=1 // pred_fallthru
      _
    // Predicated region
    $region38: #{tpu_custom_call.1} parent=1 // pred_check
      _
    $region39: #{tpu_custom_call.1} parent=1 // pred_check_branch
      %4536 = sbr.rel (0) target = $region41
    $region40: #{tpu_custom_call.1} parent=1 // pred_region
      %4537 = dma.done [#allocation6], 4096
    $region41: #{tpu_custom_call.1} parent=1 // pred_fallthru
      _
    %4538 = vsyncpa [#allocation5], 1
    %4539 = vsyncpa [#allocation6], 1

</llo_original>
